<compile_context>
chip_gen: v5e
topology: v5e:2x2
jax: 0.10.0
libtpu: 0.0.40
codegen_flags: <defaults>
</compile_context>

<pallas_src>
import math

import jax
import jax.numpy as jnp
from jax.experimental import pallas as pl
from jax.experimental.pallas import tpu as pltpu

LN_EPS = 1e-5          # torch.nn.LayerNorm default


def _round_up(x, m):
    return (x + m - 1) // m * m


def _vmem_capacity_bytes():
    try:
        return int(pltpu.get_tpu_info().vmem_capacity_bytes)
    except Exception:
        return 128 * 2**20


def _choose_seq_tile(S, B, W, Hp, itemsize):
    """Pick the sequence tile T from a per-chip VMEM budget."""
    cap = _vmem_capacity_bytes()
    budget = int(cap * 0.45)                              # headroom for double-buffers / compiler
    weight_bytes = 2 * (W + 3) * Hp * Hp * itemsize       # one direction's weights, double-buffered
    avail = max(budget - weight_bytes - (2 << 20), 4 << 20)
    per_row = Hp * (4 * itemsize + 16)                    # 2 in-bufs + 2 out-bufs + f32 scratch/temps
    max_rows = min(avail // per_row, 4096)
    t_min = 2 * max(W, 1)
    T = max(int(max_rows // max(B, 1)), t_min)
    if T >= S:
        return S                                          # single full-extent tile
    g = 8 // math.gcd(8, B)                               # keep T*B a multiple of 8
    T = max((T // g) * g, _round_up(t_min, g))
    return min(T, S)


# --------------------------------------------------------------------------------------
# Kernel
# --------------------------------------------------------------------------------------
def _make_layer_kernel(*, T, B, W, H, Hp, precision):
    TB = T * B
    WB = W * B
    inv_h = 1.0 / float(H)
    f32 = jnp.float32

    def kernel(main_ref, halo_ref,
               wp_ref, bp_ref, g_ref, be_ref, w1_ref, b1_ref, w2_ref, b2_ref,
               out_ref, acc_ref):
        # Sliding-window projection: acc[t] = sum_j win[t + j] @ Wp[j]
        # with win = [W halo rows ; T*B main rows].  j == W is the aligned full matmul
        # (initializes the accumulator, review item: no zeros + add); j < W is split into
        # a tiny halo part and an aligned main part accumulated at a row offset.
        acc_ref[...] = jnp.dot(main_ref[...], wp_ref[W],
                               preferred_element_type=f32, precision=precision)
        for j in range(W):
            nh = WB - j * B                    # rows of output [0, nh) fed by the halo
            ch = min(nh, TB)
            acc_ref[0:ch, :] += jnp.dot(halo_ref[j * B:j * B + ch, :], wp_ref[j],
                                        preferred_element_type=f32, precision=precision)
            cm = TB - nh                       # rows of output [nh, TB) fed by the main block
            if cm > 0:
                acc_ref[nh:TB, :] += jnp.dot(main_ref[0:cm, :], wp_ref[j],
                                             preferred_element_type=f32, precision=precision)

        h = jnp.maximum(acc_ref[...] + bp_ref[...], 0.0)   # ReLU(proj); dropout(p=0) = identity

        # SublayerConnection: h + FFN(LayerNorm(h)); fused single-pass LN statistics.
        # (Lane-padded columns of h are exactly zero and gamma/beta pads are zero, so the
        #  full-row sums with 1/H denominators are exact.)
        mu = jnp.sum(h, axis=-1, keepdims=True) * inv_h
        ms = jnp.sum(h * h, axis=-1, keepdims=True) * inv_h
        var = jnp.maximum(ms - mu * mu, 0.0)
        xn = (h - mu) * jax.lax.rsqrt(var + LN_EPS) * g_ref[...] + be_ref[...]

        f = jnp.dot(xn.astype(w1_ref.dtype), w1_ref[...],
                    preferred_element_type=f32, precision=precision) + b1_ref[...]
        f = jnp.maximum(f, 0.0)
        f = jnp.dot(f.astype(w2_ref.dtype), w2_ref[...],
                    preferred_element_type=f32, precision=precision) + b2_ref[...]

        out_ref[...] = (h + f).astype(out_ref.dtype)

    return kernel


# --------------------------------------------------------------------------------------
# One BiLM layer (both directions) as a single pallas_call
# --------------------------------------------------------------------------------------
def _layer_call(acts, halo, wp, bp, g, be, w1, b1, w2, b2, *,
                T, B, W, H, Hp, n_tiles, precision, vmem_limit):
    TB = T * B
    HR = halo.shape[2]
    cdt = acts.dtype
    kernel = _make_layer_kernel(T=T, B=B, W=W, H=H, Hp=Hp, precision=precision)

    act_spec = pl.BlockSpec((None, TB, Hp), lambda d, i: (d, i, 0))
    halo_spec = pl.BlockSpec((None, None, HR, Hp), lambda d, i: (d, i, 0, 0))

    def dir_spec(shape):   # per-direction parameter: block only varies with the d axis
        nd = len(shape) - 1
        return pl.BlockSpec((None,) + tuple(shape[1:]),
                            lambda d, i, _nd=nd: (d,) + (0,) * _nd)

    return pl.pallas_call(
        kernel,
        out_shape=jax.ShapeDtypeStruct((2, n_tiles * TB, Hp), cdt),
        grid_spec=pltpu.PrefetchScalarGridSpec(
            num_scalar_prefetch=0,
            grid=(2, n_tiles),
            in_specs=[act_spec, halo_spec,
                      dir_spec(wp.shape), dir_spec(bp.shape), dir_spec(g.shape),
                      dir_spec(be.shape), dir_spec(w1.shape), dir_spec(b1.shape),
                      dir_spec(w2.shape), dir_spec(b2.shape)],
            out_specs=pl.BlockSpec((None, TB, Hp), lambda d, i: (d, i, 0)),
            scratch_shapes=[pltpu.VMEM((TB, Hp), jnp.float32)],
        ),
        compiler_params=pltpu.CompilerParams(
            dimension_semantics=("parallel", "parallel"),
            vmem_limit_bytes=vmem_limit),
    )(acts, halo, wp, bp, g, be, w1, b1, w2, b2)


# --------------------------------------------------------------------------------------
# Full model
# --------------------------------------------------------------------------------------
def bengio03_resnet_bilm(inputs, mask, params_list, width, compute_dtype=jnp.bfloat16):
    """inputs: (B, S, H); mask accepted but unused (matches the PyTorch forward)."""
    del mask
    B, S, H = inputs.shape
    W = width
    cdt = compute_dtype
    itemsize = jnp.dtype(cdt).itemsize
    Hp = _round_up(max(H, 128), 128)                 # lane-dense layout
    T = _choose_seq_tile(S, B, W, Hp, itemsize)
    n_tiles = -(-S // T)
    TB = T * B
    R = n_tiles * TB
    WB = W * B
    HR = max(_round_up(max(WB, 1), 8), 8)
    precision = (jax.lax.Precision.HIGHEST
                 if jnp.dtype(cdt) == jnp.dtype(jnp.float32) else None)

    cap = _vmem_capacity_bytes()
    est = (2 * (W + 3) * Hp * Hp * itemsize          # per-direction weights, double-buffered
           + 4 * TB * Hp * itemsize                  # act in + out blocks, double-buffered
           + 4 * HR * Hp * itemsize                  # halo blocks
           + 4 * TB * Hp * 4                         # f32 accumulator scratch + temporaries
           + (1 << 20))
    vmem_limit = int(max(24 << 20, min(int(0.9 * cap), 2 * est)))

    # Seq-major flattened streams; the backward stream is stored time-reversed so both
    # directions are the same left-context convolution (one kernel code path).
    x_sm = jnp.transpose(inputs, (1, 0, 2))          # (S, B, H)

    def _carry(a_sm):
        a = a_sm.reshape(S * B, H).astype(cdt)
        return jnp.pad(a, ((0, R - S * B), (0, Hp - H)))

    acts = jnp.stack([_carry(x_sm), _carry(jnp.flip(x_sm, axis=0))], axis=0)   # (2, R, Hp)

    def _pad_h(a):        # (2, H) -> (2, 1, Hp) float32, zero-padded lanes
        return jnp.pad(a.astype(jnp.float32), ((0, 0), (0, Hp - H)))[:, None, :]

    def _pad_hh(a):       # (..., H, H) -> (..., Hp, Hp), zero-padded
        pad = [(0, 0)] * (a.ndim - 2) + [(0, Hp - H), (0, Hp - H)]
        return jnp.pad(a, pad)

    outs = []
    for p in params_list:
        # ---- per-direction parameters (pre-transposed, lane-padded; backward projection
        #      weights flipped along the window axis to match the time-reversed stream) ----
        wp_f = p["fproj_w"].T.reshape(W + 1, H, H)
        wp_b = jnp.flip(p["bproj_w"].T.reshape(W + 1, H, H), axis=0)
        wp = _pad_hh(jnp.stack([wp_f, wp_b], axis=0)).astype(cdt)      # (2, W+1, Hp, Hp)
        w1 = _pad_hh(jnp.stack([p["f_w1"].T, p["b_w1"].T], 0)).astype(cdt)
        w2 = _pad_hh(jnp.stack([p["f_w2"].T, p["b_w2"].T], 0)).astype(cdt)
        bp = _pad_h(jnp.stack([p["fproj_b"], p["bproj_b"]], 0))
        g = _pad_h(jnp.stack([p["f_ln_g"], p["b_ln_g"]], 0))          # gamma pads are 0
        be = _pad_h(jnp.stack([p["f_ln_b"], p["b_ln_b"]], 0))
        b1 = _pad_h(jnp.stack([p["f_b1"], p["b_b1"]], 0))
        b2 = _pad_h(jnp.stack([p["f_b2"], p["b_b2"]], 0))

        # ---- tiny halo slab: the W left-context positions of every tile ----
        # tile 0 halo = this layer's padding parameters (bwd padding reversed to match the
        # reversed stream); tile i>0 halo = last W positions of tile i-1.
        fpad = jnp.broadcast_to(p["fwd_pad"][:, None, :], (W, B, H)).reshape(WB, H)
        bpad = jnp.broadcast_to(jnp.flip(p["bwd_pad"], axis=0)[:, None, :],
                                (W, B, H)).reshape(WB, H)
        pad0 = jnp.pad(jnp.stack([fpad, bpad], 0).astype(cdt),
                       ((0, 0), (0, 0), (0, Hp - H)))[:, None]          # (2, 1, WB, Hp)
        if n_tiles > 1:
            prev_tail = acts.reshape(2, n_tiles, TB, Hp)[:, :-1, TB - WB:, :]
            halo = jnp.concatenate([pad0, prev_tail], axis=1)           # (2, n_tiles, WB, Hp)
        else:
            halo = pad0
        if HR > WB:
            halo = jnp.pad(halo, ((0, 0), (0, 0), (0, HR - WB), (0, 0)))

        acts = _layer_call(acts, halo, wp, bp, g, be, w1, b1, w2, b2,
                           T=T, B=B, W=W, H=H, Hp=Hp, n_tiles=n_tiles,
                           precision=precision, vmem_limit=vmem_limit)

        # ---- per-layer model output (B, S, 2H); the carried `acts` stays untouched ----
        f_sm = acts[0, :S * B, :H].reshape(S, B, H)
        b_sm = jnp.flip(acts[1, :S * B, :H].reshape(S, B, H), axis=0)   # undo time reversal
        lay = jnp.concatenate([f_sm, b_sm], axis=-1)                    # (S, B, 2H)
        outs.append(jnp.transpose(lay, (1, 0, 2)).astype(jnp.float32))
    return jnp.stack(outs, axis=0)                                      # (n_layers, B, S, 2H)


# ---------------- deterministic parameter init (shapes from __init__) ----------------
def init_params(key, n_layers, width, hidden_size):
    H = hidden_size
    ctx = H * (width + 1)

    def lin(k, fan_in, shape):
        return jax.random.normal(k, shape, jnp.float32) / jnp.sqrt(float(fan_in))

    layers = []
    for i in range(n_layers):
        ks = jax.random.split(jax.random.fold_in(key, i), 14)
        layers.append(dict(
            fwd_pad=jax.random.normal(ks[0], (width, H), jnp.float32) / jnp.sqrt(float(H)),
            bwd_pad=jax.random.normal(ks[1], (width, H), jnp.float32) / jnp.sqrt(float(H)),
            fproj_w=lin(ks[2], ctx, (H, ctx)), fproj_b=lin(ks[3], ctx, (H,)),
            bproj_w=lin(ks[4], ctx, (H, ctx)), bproj_b=lin(ks[5], ctx, (H,)),
            f_ln_g=jnp.ones((H,), jnp.float32), f_ln_b=jnp.zeros((H,), jnp.float32),
            b_ln_g=jnp.ones((H,), jnp.float32), b_ln_b=jnp.zeros((H,), jnp.float32),
            f_w1=lin(ks[6], H, (H, H)), f_b1=lin(ks[7], H, (H,)),
            f_w2=lin(ks[8], H, (H, H)), f_b2=lin(ks[9], H, (H,)),
            b_w1=lin(ks[10], H, (H, H)), b_b1=lin(ks[11], H, (H,)),
            b_w2=lin(ks[12], H, (H, H)), b_b2=lin(ks[13], H, (H,)),
        ))
    return layers


# ---------------- pure-JAX reference (validation only) ----------------
def _dot_hi(a, b):
    return jnp.dot(a, b, precision=jax.lax.Precision.HIGHEST)


def reference_model(x, params_list, width):
    B, S, H = x.shape
    fwd, bwd = x, x
    outs = []
    for p in params_list:
        fpad = jnp.broadcast_to(p["fwd_pad"], (B, width, H))
        bpad = jnp.broadcast_to(p["bwd_pad"], (B, width, H))

        def one_dir(seq, off_base, wproj, bproj, g, be, w1, b1, w2, b2):
            padded = jnp.concatenate([fpad, seq, bpad], axis=1)
            ys = []
            for t in range(S):
                ctx = padded[:, t + off_base: t + off_base + width + 1, :].reshape(B, -1)
                h = jnp.maximum(_dot_hi(ctx, wproj.T) + bproj, 0.0)
                mu = h.mean(-1, keepdims=True)
                var = ((h - mu) ** 2).mean(-1, keepdims=True)
                xn = (h - mu) / jnp.sqrt(var + LN_EPS) * g + be
                f = _dot_hi(jnp.maximum(_dot_hi(xn, w1.T) + b1, 0.0), w2.T) + b2
                ys.append(h + f)
            return jnp.stack(ys, axis=1)

        fwd = one_dir(fwd, 0, p["fproj_w"], p["fproj_b"], p["f_ln_g"], p["f_ln_b"],
                      p["f_w1"], p["f_b1"], p["f_w2"], p["f_b2"])
        bwd = one_dir(bwd, width, p["bproj_w"], p["bproj_b"], p["b_ln_g"], p["b_ln_b"],
                      p["b_w1"], p["b_b1"], p["b_w2"], p["b_b2"])
        outs.append(jnp.concatenate([fwd, bwd], axis=-1))
    return jnp.stack(outs, axis=0)


if __name__ == "__main__":
    # small shapes: width=3, input_size=hidden_size=32 (module requires input_size==hidden_size)
    B, S, H, WIDTH, N_LAYERS = 2, 8, 32, 3, 2
    key = jax.random.PRNGKey(0)
    k_in, k_p = jax.random.split(key)

    x = jax.random.normal(k_in, (B, S, H), jnp.float32)
    mask = jnp.ones((B, S), jnp.int32)   # unused by the forward pass
    params = init_params(k_p, N_LAYERS, WIDTH, H)

    ref = reference_model(x, params, WIDTH)

    # f32 path: validates exact semantics with a tight tolerance.
    run_f32 = jax.jit(lambda a, m, ps: bengio03_resnet_bilm(a, m, ps, WIDTH, jnp.float32))
    out_f32 = jax.block_until_ready(run_f32(x, mask, params))
    assert out_f32.shape == (N_LAYERS, B, S, 2 * H), out_f32.shape
    err_f32 = float(jnp.max(jnp.abs(out_f32 - ref)))
    assert err_f32 < 3e-4, f"f32 max abs err {err_f32}"

    # bf16 path: the default performance configuration (bf16 matmuls, f32 accumulation).
    run_bf16 = jax.jit(lambda a, m, ps: bengio03_resnet_bilm(a, m, ps, WIDTH))
    out_bf16 = jax.block_until_ready(run_bf16(x, mask, params))
    assert out_bf16.shape == (N_LAYERS, B, S, 2 * H), out_bf16.shape
    err_bf16 = float(jnp.max(jnp.abs(out_bf16 - ref)))
    assert err_bf16 < 2.5e-1, f"bf16 max abs err {err_bf16}"

    print("KERNEL_OK")
</pallas_src>

<mosaic_0001>
module attributes {stable_mosaic.version = 11 : i64} {
  func.func @kernel(%arg0: i32, %arg1: i32, %arg2: memref<1x16x128xf32, #tpu.memory_space<vmem>>, %arg3: memref<1x1x8x128xf32, #tpu.memory_space<vmem>>, %arg4: memref<1x4x128x128xf32, #tpu.memory_space<vmem>>, %arg5: memref<1x1x128xf32, #tpu.memory_space<vmem>>, %arg6: memref<1x1x128xf32, #tpu.memory_space<vmem>>, %arg7: memref<1x1x128xf32, #tpu.memory_space<vmem>>, %arg8: memref<1x128x128xf32, #tpu.memory_space<vmem>>, %arg9: memref<1x1x128xf32, #tpu.memory_space<vmem>>, %arg10: memref<1x128x128xf32, #tpu.memory_space<vmem>>, %arg11: memref<1x1x128xf32, #tpu.memory_space<vmem>>, %arg12: memref<1x16x128xf32, #tpu.memory_space<vmem>>, %arg13: memref<16x128xf32, #tpu.memory_space<vmem>>) attributes {dimension_semantics = [#tpu.dimension_semantics<parallel>, #tpu.dimension_semantics<parallel>], iteration_bounds = array<i64: 2, 1>, scalar_prefetch = 0 : i64, scratch_operands = 1 : i64, tpu.core_type = #tpu.core_type<tc>, window_params = [{transform_indices = @transform_0, window_bounds = array<i64: 1, 16, 128>}, {transform_indices = @transform_1, window_bounds = array<i64: 1, 1, 8, 128>}, {transform_indices = @transform_2, window_bounds = array<i64: 1, 4, 128, 128>}, {transform_indices = @transform_3, window_bounds = array<i64: 1, 1, 128>}, {transform_indices = @transform_4, window_bounds = array<i64: 1, 1, 128>}, {transform_indices = @transform_5, window_bounds = array<i64: 1, 1, 128>}, {transform_indices = @transform_6, window_bounds = array<i64: 1, 128, 128>}, {transform_indices = @transform_7, window_bounds = array<i64: 1, 1, 128>}, {transform_indices = @transform_8, window_bounds = array<i64: 1, 128, 128>}, {transform_indices = @transform_9, window_bounds = array<i64: 1, 1, 128>}, {transform_indices = @transform_10, window_bounds = array<i64: 1, 16, 128>}]} {
    %c0 = arith.constant 0 : index
    %c0_0 = arith.constant 0 : index
    %c0_1 = arith.constant 0 : index
    %0 = vector.load %arg2[%c0, %c0_0, %c0_1] : memref<1x16x128xf32, #tpu.memory_space<vmem>>, vector<1x16x128xf32>
    %1 = vector.shape_cast %0 : vector<1x16x128xf32> to vector<16x128xf32>
    %c0_2 = arith.constant 0 : index
    %c3 = arith.constant 3 : index
    %c0_3 = arith.constant 0 : index
    %c0_4 = arith.constant 0 : index
    %2 = vector.load %arg4[%c0_2, %c3, %c0_3, %c0_4] : memref<1x4x128x128xf32, #tpu.memory_space<vmem>>, vector<1x1x128x128xf32>
    %3 = vector.shape_cast %2 : vector<1x1x128x128xf32> to vector<128x128xf32>
    %cst = arith.constant dense<0.000000e+00> : vector<16x128xf32>
    %4 = tpu.matmul %1, %3, %cst {dimension_numbers = #tpu.dot_dimension_numbers<[1], [0], [0], [1], [0, 0, 1, 1], [], []>, precision = #tpu.contract_precision<fp32>} : vector<16x128xf32>, vector<128x128xf32>, vector<16x128xf32> -> vector<16x128xf32>
    %c0_5 = arith.constant 0 : index
    %c0_6 = arith.constant 0 : index
    %5 = vector.load %arg13[%c0_5, %c0_6] : memref<16x128xf32, #tpu.memory_space<vmem>>, vector<16x128xf32>
    tpu.vector_store %arg13[%c0_5, %c0_6], %4 {strides = array<i32>} : memref<16x128xf32, #tpu.memory_space<vmem>>, vector<16x128xf32>,
    %c0_7 = arith.constant 0 : index
    %c0_8 = arith.constant 0 : index
    %6 = vector.load %arg13[%c0_7, %c0_8] : memref<16x128xf32, #tpu.memory_space<vmem>>, vector<6x128xf32>
    %c0_9 = arith.constant 0 : index
    %c0_10 = arith.constant 0 : index
    %c0_11 = arith.constant 0 : index
    %c0_12 = arith.constant 0 : index
    %7 = vector.load %arg3[%c0_9, %c0_10, %c0_11, %c0_12] : memref<1x1x8x128xf32, #tpu.memory_space<vmem>>, vector<1x1x6x128xf32>
    %8 = vector.shape_cast %7 : vector<1x1x6x128xf32> to vector<6x128xf32>
    %c0_13 = arith.constant 0 : index
    %c0_14 = arith.constant 0 : index
    %c0_15 = arith.constant 0 : index
    %c0_16 = arith.constant 0 : index
    %9 = vector.load %arg4[%c0_13, %c0_14, %c0_15, %c0_16] : memref<1x4x128x128xf32, #tpu.memory_space<vmem>>, vector<1x1x128x128xf32>
    %10 = vector.shape_cast %9 : vector<1x1x128x128xf32> to vector<128x128xf32>
    %cst_17 = arith.constant dense<0.000000e+00> : vector<6x128xf32>
    %11 = tpu.matmul %8, %10, %cst_17 {dimension_numbers = #tpu.dot_dimension_numbers<[1], [0], [0], [1], [0, 0, 1, 1], [], []>, precision = #tpu.contract_precision<fp32>} : vector<6x128xf32>, vector<128x128xf32>, vector<6x128xf32> -> vector<6x128xf32>
    %12 = arith.addf %6, %11 : vector<6x128xf32>
    %c0_18 = arith.constant 0 : index
    %c0_19 = arith.constant 0 : index
    %13 = vector.load %arg13[%c0_18, %c0_19] : memref<16x128xf32, #tpu.memory_space<vmem>>, vector<6x128xf32>
    tpu.vector_store %arg13[%c0_18, %c0_19], %12 {strides = array<i32>} : memref<16x128xf32, #tpu.memory_space<vmem>>, vector<6x128xf32>,
    %c6 = arith.constant 6 : index
    %c0_20 = arith.constant 0 : index
    %14 = vector.load %arg13[%c6, %c0_20] : memref<16x128xf32, #tpu.memory_space<vmem>>, vector<10x128xf32>
    %c0_21 = arith.constant 0 : index
    %c0_22 = arith.constant 0 : index
    %c0_23 = arith.constant 0 : index
    %15 = vector.load %arg2[%c0_21, %c0_22, %c0_23] : memref<1x16x128xf32, #tpu.memory_space<vmem>>, vector<1x10x128xf32>
    %16 = vector.shape_cast %15 : vector<1x10x128xf32> to vector<10x128xf32>
    %c0_24 = arith.constant 0 : index
    %c0_25 = arith.constant 0 : index
    %c0_26 = arith.constant 0 : index
    %c0_27 = arith.constant 0 : index
    %17 = vector.load %arg4[%c0_24, %c0_25, %c0_26, %c0_27] : memref<1x4x128x128xf32, #tpu.memory_space<vmem>>, vector<1x1x128x128xf32>
    %18 = vector.shape_cast %17 : vector<1x1x128x128xf32> to vector<128x128xf32>
    %cst_28 = arith.constant dense<0.000000e+00> : vector<10x128xf32>
    %19 = tpu.matmul %16, %18, %cst_28 {dimension_numbers = #tpu.dot_dimension_numbers<[1], [0], [0], [1], [0, 0, 1, 1], [], []>, precision = #tpu.contract_precision<fp32>} : vector<10x128xf32>, vector<128x128xf32>, vector<10x128xf32> -> vector<10x128xf32>
    %20 = arith.addf %14, %19 : vector<10x128xf32>
    %c6_29 = arith.constant 6 : index
    %c0_30 = arith.constant 0 : index
    %21 = vector.load %arg13[%c6_29, %c0_30] : memref<16x128xf32, #tpu.memory_space<vmem>>, vector<10x128xf32>
    tpu.vector_store %arg13[%c6_29, %c0_30], %20 {strides = array<i32>} : memref<16x128xf32, #tpu.memory_space<vmem>>, vector<10x128xf32>,
    %c0_31 = arith.constant 0 : index
    %c0_32 = arith.constant 0 : index
    %22 = vector.load %arg13[%c0_31, %c0_32] : memref<16x128xf32, #tpu.memory_space<vmem>>, vector<4x128xf32>
    %c0_33 = arith.constant 0 : index
    %c0_34 = arith.constant 0 : index
    %c2 = arith.constant 2 : index
    %c0_35 = arith.constant 0 : index
    %23 = vector.load %arg3[%c0_33, %c0_34, %c2, %c0_35] : memref<1x1x8x128xf32, #tpu.memory_space<vmem>>, vector<1x1x4x128xf32>
    %24 = vector.shape_cast %23 : vector<1x1x4x128xf32> to vector<4x128xf32>
    %c0_36 = arith.constant 0 : index
    %c1 = arith.constant 1 : index
    %c0_37 = arith.constant 0 : index
    %c0_38 = arith.constant 0 : index
    %25 = vector.load %arg4[%c0_36, %c1, %c0_37, %c0_38] : memref<1x4x128x128xf32, #tpu.memory_space<vmem>>, vector<1x1x128x128xf32>
    %26 = vector.shape_cast %25 : vector<1x1x128x128xf32> to vector<128x128xf32>
    %cst_39 = arith.constant dense<0.000000e+00> : vector<4x128xf32>
    %27 = tpu.matmul %24, %26, %cst_39 {dimension_numbers = #tpu.dot_dimension_numbers<[1], [0], [0], [1], [0, 0, 1, 1], [], []>, precision = #tpu.contract_precision<fp32>} : vector<4x128xf32>, vector<128x128xf32>, vector<4x128xf32> -> vector<4x128xf32>
    %28 = arith.addf %22, %27 : vector<4x128xf32>
    %c0_40 = arith.constant 0 : index
    %c0_41 = arith.constant 0 : index
    %29 = vector.load %arg13[%c0_40, %c0_41] : memref<16x128xf32, #tpu.memory_space<vmem>>, vector<4x128xf32>
    tpu.vector_store %arg13[%c0_40, %c0_41], %28 {strides = array<i32>} : memref<16x128xf32, #tpu.memory_space<vmem>>, vector<4x128xf32>,
    %c4 = arith.constant 4 : index
    %c0_42 = arith.constant 0 : index
    %30 = vector.load %arg13[%c4, %c0_42] : memref<16x128xf32, #tpu.memory_space<vmem>>, vector<12x128xf32>
    %c0_43 = arith.constant 0 : index
    %c0_44 = arith.constant 0 : index
    %c0_45 = arith.constant 0 : index
    %31 = vector.load %arg2[%c0_43, %c0_44, %c0_45] : memref<1x16x128xf32, #tpu.memory_space<vmem>>, vector<1x12x128xf32>
    %32 = vector.shape_cast %31 : vector<1x12x128xf32> to vector<12x128xf32>
    %c0_46 = arith.constant 0 : index
    %c1_47 = arith.constant 1 : index
    %c0_48 = arith.constant 0 : index
    %c0_49 = arith.constant 0 : index
    %33 = vector.load %arg4[%c0_46, %c1_47, %c0_48, %c0_49] : memref<1x4x128x128xf32, #tpu.memory_space<vmem>>, vector<1x1x128x128xf32>
    %34 = vector.shape_cast %33 : vector<1x1x128x128xf32> to vector<128x128xf32>
    %cst_50 = arith.constant dense<0.000000e+00> : vector<12x128xf32>
    %35 = tpu.matmul %32, %34, %cst_50 {dimension_numbers = #tpu.dot_dimension_numbers<[1], [0], [0], [1], [0, 0, 1, 1], [], []>, precision = #tpu.contract_precision<fp32>} : vector<12x128xf32>, vector<128x128xf32>, vector<12x128xf32> -> vector<12x128xf32>
    %36 = arith.addf %30, %35 : vector<12x128xf32>
    %c4_51 = arith.constant 4 : index
    %c0_52 = arith.constant 0 : index
    %37 = vector.load %arg13[%c4_51, %c0_52] : memref<16x128xf32, #tpu.memory_space<vmem>>, vector<12x128xf32>
    tpu.vector_store %arg13[%c4_51, %c0_52], %36 {strides = array<i32>} : memref<16x128xf32, #tpu.memory_space<vmem>>, vector<12x128xf32>,
    %c0_53 = arith.constant 0 : index
    %c0_54 = arith.constant 0 : index
    %38 = vector.load %arg13[%c0_53, %c0_54] : memref<16x128xf32, #tpu.memory_space<vmem>>, vector<2x128xf32>
    %c0_55 = arith.constant 0 : index
    %c0_56 = arith.constant 0 : index
    %c4_57 = arith.constant 4 : index
    %c0_58 = arith.constant 0 : index
    %39 = vector.load %arg3[%c0_55, %c0_56, %c4_57, %c0_58] : memref<1x1x8x128xf32, #tpu.memory_space<vmem>>, vector<1x1x2x128xf32>
    %40 = vector.shape_cast %39 : vector<1x1x2x128xf32> to vector<2x128xf32>
    %c0_59 = arith.constant 0 : index
    %c2_60 = arith.constant 2 : index
    %c0_61 = arith.constant 0 : index
    %c0_62 = arith.constant 0 : index
    %41 = vector.load %arg4[%c0_59, %c2_60, %c0_61, %c0_62] : memref<1x4x128x128xf32, #tpu.memory_space<vmem>>, vector<1x1x128x128xf32>
    %42 = vector.shape_cast %41 : vector<1x1x128x128xf32> to vector<128x128xf32>
    %cst_63 = arith.constant dense<0.000000e+00> : vector<2x128xf32>
    %43 = tpu.matmul %40, %42, %cst_63 {dimension_numbers = #tpu.dot_dimension_numbers<[1], [0], [0], [1], [0, 0, 1, 1], [], []>, precision = #tpu.contract_precision<fp32>} : vector<2x128xf32>, vector<128x128xf32>, vector<2x128xf32> -> vector<2x128xf32>
    %44 = arith.addf %38, %43 : vector<2x128xf32>
    %c0_64 = arith.constant 0 : index
    %c0_65 = arith.constant 0 : index
    %45 = vector.load %arg13[%c0_64, %c0_65] : memref<16x128xf32, #tpu.memory_space<vmem>>, vector<2x128xf32>
    tpu.vector_store %arg13[%c0_64, %c0_65], %44 {strides = array<i32>} : memref<16x128xf32, #tpu.memory_space<vmem>>, vector<2x128xf32>,
    %c2_66 = arith.constant 2 : index
    %c0_67 = arith.constant 0 : index
    %46 = vector.load %arg13[%c2_66, %c0_67] : memref<16x128xf32, #tpu.memory_space<vmem>>, vector<14x128xf32>
    %c0_68 = arith.constant 0 : index
    %c0_69 = arith.constant 0 : index
    %c0_70 = arith.constant 0 : index
    %47 = vector.load %arg2[%c0_68, %c0_69, %c0_70] : memref<1x16x128xf32, #tpu.memory_space<vmem>>, vector<1x14x128xf32>
    %48 = vector.shape_cast %47 : vector<1x14x128xf32> to vector<14x128xf32>
    %c0_71 = arith.constant 0 : index
    %c2_72 = arith.constant 2 : index
    %c0_73 = arith.constant 0 : index
    %c0_74 = arith.constant 0 : index
    %49 = vector.load %arg4[%c0_71, %c2_72, %c0_73, %c0_74] : memref<1x4x128x128xf32, #tpu.memory_space<vmem>>, vector<1x1x128x128xf32>
    %50 = vector.shape_cast %49 : vector<1x1x128x128xf32> to vector<128x128xf32>
    %cst_75 = arith.constant dense<0.000000e+00> : vector<14x128xf32>
    %51 = tpu.matmul %48, %50, %cst_75 {dimension_numbers = #tpu.dot_dimension_numbers<[1], [0], [0], [1], [0, 0, 1, 1], [], []>, precision = #tpu.contract_precision<fp32>} : vector<14x128xf32>, vector<128x128xf32>, vector<14x128xf32> -> vector<14x128xf32>
    %52 = arith.addf %46, %51 : vector<14x128xf32>
    %c2_76 = arith.constant 2 : index
    %c0_77 = arith.constant 0 : index
    %53 = vector.load %arg13[%c2_76, %c0_77] : memref<16x128xf32, #tpu.memory_space<vmem>>, vector<14x128xf32>
    tpu.vector_store %arg13[%c2_76, %c0_77], %52 {strides = array<i32>} : memref<16x128xf32, #tpu.memory_space<vmem>>, vector<14x128xf32>,
    %c0_78 = arith.constant 0 : index
    %c0_79 = arith.constant 0 : index
    %54 = vector.load %arg13[%c0_78, %c0_79] : memref<16x128xf32, #tpu.memory_space<vmem>>, vector<16x128xf32>
    %c0_80 = arith.constant 0 : index
    %c0_81 = arith.constant 0 : index
    %c0_82 = arith.constant 0 : index
    %55 = vector.load %arg5[%c0_80, %c0_81, %c0_82] : memref<1x1x128xf32, #tpu.memory_space<vmem>>, vector<1x1x128xf32>
    %56 = vector.shape_cast %55 : vector<1x1x128xf32> to vector<1x128xf32>
    %57 = vector.broadcast %56 : vector<1x128xf32> to vector<16x128xf32>
    %58 = arith.addf %54, %57 : vector<16x128xf32>
    %cst_83 = arith.constant 0.000000e+00 : f32
    %59 = vector.broadcast %cst_83 : f32 to vector<16x128xf32>
    %60 = arith.maximumf %58, %59 : vector<16x128xf32>
    %cst_84 = arith.constant dense<0.000000e+00> : vector<16xf32>
    %61 = vector.multi_reduction <add>, %60, %cst_84 [1] : vector<16x128xf32> to vector<16xf32>
    %62 = vector.shape_cast %61 : vector<16xf32> to vector<16x1xf32>
    %cst_85 = arith.constant 3.125000e-02 : f32
    %63 = vector.broadcast %cst_85 : f32 to vector<16x1xf32>
    %64 = arith.mulf %62, %63 : vector<16x1xf32>
    %65 = arith.mulf %60, %60 : vector<16x128xf32>
    %cst_86 = arith.constant dense<0.000000e+00> : vector<16xf32>
    %66 = vector.multi_reduction <add>, %65, %cst_86 [1] : vector<16x128xf32> to vector<16xf32>
    %67 = vector.shape_cast %66 : vector<16xf32> to vector<16x1xf32>
    %cst_87 = arith.constant 3.125000e-02 : f32
    %68 = vector.broadcast %cst_87 : f32 to vector<16x1xf32>
    %69 = arith.mulf %67, %68 : vector<16x1xf32>
    %70 = arith.mulf %64, %64 : vector<16x1xf32>
    %71 = arith.subf %69, %70 : vector<16x1xf32>
    %cst_88 = arith.constant 0.000000e+00 : f32
    %72 = vector.broadcast %cst_88 : f32 to vector<16x1xf32>
    %73 = arith.maximumf %71, %72 : vector<16x1xf32>
    %74 = vector.broadcast %64 : vector<16x1xf32> to vector<16x128xf32>
    %75 = arith.subf %60, %74 : vector<16x128xf32>
    %cst_89 = arith.constant 9.99999974E-6 : f32
    %76 = vector.broadcast %cst_89 : f32 to vector<16x1xf32>
    %77 = arith.addf %73, %76 : vector<16x1xf32>
    %78 = math.rsqrt %77 : vector<16x1xf32>
    %79 = vector.broadcast %78 : vector<16x1xf32> to vector<16x128xf32>
    %80 = arith.mulf %75, %79 : vector<16x128xf32>
    %c0_90 = arith.constant 0 : index
    %c0_91 = arith.constant 0 : index
    %c0_92 = arith.constant 0 : index
    %81 = vector.load %arg6[%c0_90, %c0_91, %c0_92] : memref<1x1x128xf32, #tpu.memory_space<vmem>>, vector<1x1x128xf32>
    %82 = vector.shape_cast %81 : vector<1x1x128xf32> to vector<1x128xf32>
    %83 = vector.broadcast %82 : vector<1x128xf32> to vector<16x128xf32>
    %84 = arith.mulf %80, %83 : vector<16x128xf32>
    %c0_93 = arith.constant 0 : index
    %c0_94 = arith.constant 0 : index
    %c0_95 = arith.constant 0 : index
    %85 = vector.load %arg7[%c0_93, %c0_94, %c0_95] : memref<1x1x128xf32, #tpu.memory_space<vmem>>, vector<1x1x128xf32>
    %86 = vector.shape_cast %85 : vector<1x1x128xf32> to vector<1x128xf32>
    %87 = vector.broadcast %86 : vector<1x128xf32> to vector<16x128xf32>
    %88 = arith.addf %84, %87 : vector<16x128xf32>
    %c0_96 = arith.constant 0 : index
    %c0_97 = arith.constant 0 : index
    %c0_98 = arith.constant 0 : index
    %89 = vector.load %arg8[%c0_96, %c0_97, %c0_98] : memref<1x128x128xf32, #tpu.memory_space<vmem>>, vector<1x128x128xf32>
    %90 = vector.shape_cast %89 : vector<1x128x128xf32> to vector<128x128xf32>
    %cst_99 = arith.constant dense<0.000000e+00> : vector<16x128xf32>
    %91 = tpu.matmul %88, %90, %cst_99 {dimension_numbers = #tpu.dot_dimension_numbers<[1], [0], [0], [1], [0, 0, 1, 1], [], []>, precision = #tpu.contract_precision<fp32>} : vector<16x128xf32>, vector<128x128xf32>, vector<16x128xf32> -> vector<16x128xf32>
    %c0_100 = arith.constant 0 : index
    %c0_101 = arith.constant 0 : index
    %c0_102 = arith.constant 0 : index
    %92 = vector.load %arg9[%c0_100, %c0_101, %c0_102] : memref<1x1x128xf32, #tpu.memory_space<vmem>>, vector<1x1x128xf32>
    %93 = vector.shape_cast %92 : vector<1x1x128xf32> to vector<1x128xf32>
    %94 = vector.broadcast %93 : vector<1x128xf32> to vector<16x128xf32>
    %95 = arith.addf %91, %94 : vector<16x128xf32>
    %cst_103 = arith.constant 0.000000e+00 : f32
    %96 = vector.broadcast %cst_103 : f32 to vector<16x128xf32>
    %97 = arith.maximumf %95, %96 : vector<16x128xf32>
    %c0_104 = arith.constant 0 : index
    %c0_105 = arith.constant 0 : index
    %c0_106 = arith.constant 0 : index
    %98 = vector.load %arg10[%c0_104, %c0_105, %c0_106] : memref<1x128x128xf32, #tpu.memory_space<vmem>>, vector<1x128x128xf32>
    %99 = vector.shape_cast %98 : vector<1x128x128xf32> to vector<128x128xf32>
    %cst_107 = arith.constant dense<0.000000e+00> : vector<16x128xf32>
    %100 = tpu.matmul %97, %99, %cst_107 {dimension_numbers = #tpu.dot_dimension_numbers<[1], [0], [0], [1], [0, 0, 1, 1], [], []>, precision = #tpu.contract_precision<fp32>} : vector<16x128xf32>, vector<128x128xf32>, vector<16x128xf32> -> vector<16x128xf32>
    %c0_108 = arith.constant 0 : index
    %c0_109 = arith.constant 0 : index
    %c0_110 = arith.constant 0 : index
    %101 = vector.load %arg11[%c0_108, %c0_109, %c0_110] : memref<1x1x128xf32, #tpu.memory_space<vmem>>, vector<1x1x128xf32>
    %102 = vector.shape_cast %101 : vector<1x1x128xf32> to vector<1x128xf32>
    %103 = vector.broadcast %102 : vector<1x128xf32> to vector<16x128xf32>
    %104 = arith.addf %100, %103 : vector<16x128xf32>
    %105 = arith.addf %60, %104 : vector<16x128xf32>
    %c0_111 = arith.constant 0 : index
    %c0_112 = arith.constant 0 : index
    %c0_113 = arith.constant 0 : index
    %106 = vector.load %arg12[%c0_111, %c0_112, %c0_113] : memref<1x16x128xf32, #tpu.memory_space<vmem>>, vector<1x16x128xf32>
    %107 = vector.shape_cast %106 : vector<1x16x128xf32> to vector<16x128xf32>
    %108 = vector.shape_cast %105 : vector<16x128xf32> to vector<1x16x128xf32>
    tpu.vector_store %arg12[%c0_111, %c0_112, %c0_113], %108 {strides = array<i32>} : memref<1x16x128xf32, #tpu.memory_space<vmem>>, vector<1x16x128xf32>,
    return
  }
  func.func @transform_0(%arg0: i32, %arg1: i32) -> (i32, i32, i32) {
    %c0_i32 = arith.constant 0 : i32
    %c0_i32_0 = arith.constant 0 : i32
    return %arg0, %arg1, %c0_i32 : i32, i32, i32
  }
  func.func @transform_1(%arg0: i32, %arg1: i32) -> (i32, i32, i32, i32) {
    %c0_i32 = arith.constant 0 : i32
    %c0_i32_0 = arith.constant 0 : i32
    %c0_i32_1 = arith.constant 0 : i32
    return %arg0, %arg1, %c0_i32, %c0_i32_0 : i32, i32, i32, i32
  }
  func.func @transform_2(%arg0: i32, %arg1: i32) -> (i32, i32, i32, i32) {
    %c0_i32 = arith.constant 0 : i32
    %c0_i32_0 = arith.constant 0 : i32
    %c0_i32_1 = arith.constant 0 : i32
    %c0_i32_2 = arith.constant 0 : i32
    return %arg0, %c0_i32, %c0_i32_0, %c0_i32_1 : i32, i32, i32, i32
  }
  func.func @transform_3(%arg0: i32, %arg1: i32) -> (i32, i32, i32) {
    %c0_i32 = arith.constant 0 : i32
    %c0_i32_0 = arith.constant 0 : i32
    %c0_i32_1 = arith.constant 0 : i32
    return %arg0, %c0_i32, %c0_i32_0 : i32, i32, i32
  }
  func.func @transform_4(%arg0: i32, %arg1: i32) -> (i32, i32, i32) {
    %c0_i32 = arith.constant 0 : i32
    %c0_i32_0 = arith.constant 0 : i32
    %c0_i32_1 = arith.constant 0 : i32
    return %arg0, %c0_i32, %c0_i32_0 : i32, i32, i32
  }
  func.func @transform_5(%arg0: i32, %arg1: i32) -> (i32, i32, i32) {
    %c0_i32 = arith.constant 0 : i32
    %c0_i32_0 = arith.constant 0 : i32
    %c0_i32_1 = arith.constant 0 : i32
    return %arg0, %c0_i32, %c0_i32_0 : i32, i32, i32
  }
  func.func @transform_6(%arg0: i32, %arg1: i32) -> (i32, i32, i32) {
    %c0_i32 = arith.constant 0 : i32
    %c0_i32_0 = arith.constant 0 : i32
    %c0_i32_1 = arith.constant 0 : i32
    return %arg0, %c0_i32, %c0_i32_0 : i32, i32, i32
  }
  func.func @transform_7(%arg0: i32, %arg1: i32) -> (i32, i32, i32) {
    %c0_i32 = arith.constant 0 : i32
    %c0_i32_0 = arith.constant 0 : i32
    %c0_i32_1 = arith.constant 0 : i32
    return %arg0, %c0_i32, %c0_i32_0 : i32, i32, i32
  }
  func.func @transform_8(%arg0: i32, %arg1: i32) -> (i32, i32, i32) {
    %c0_i32 = arith.constant 0 : i32
    %c0_i32_0 = arith.constant 0 : i32
    %c0_i32_1 = arith.constant 0 : i32
    return %arg0, %c0_i32, %c0_i32_0 : i32, i32, i32
  }
  func.func @transform_9(%arg0: i32, %arg1: i32) -> (i32, i32, i32) {
    %c0_i32 = arith.constant 0 : i32
    %c0_i32_0 = arith.constant 0 : i32
    %c0_i32_1 = arith.constant 0 : i32
    return %arg0, %c0_i32, %c0_i32_0 : i32, i32, i32
  }
  func.func @transform_10(%arg0: i32, %arg1: i32) -> (i32, i32, i32) {
    %c0_i32 = arith.constant 0 : i32
    %c0_i32_0 = arith.constant 0 : i32
    return %arg0, %arg1, %c0_i32 : i32, i32, i32
  }
}

</mosaic_0001>

<llo_original>
// kernel: _lambda_.2
$region0: #{_lambda_.2}
  #allocation0 [shape = 'u32[]', space=smem, size = 0x4, offset = 0x4, fixed_abs, tag = 'smem constant byte address 0x4 - core index']
  #allocation1 [shape = 'u32[72,128]{1,0:T(1,128)}', space=vmem, size = 0x9000, scoped, tag = 'internal scratch']
  #allocation2 [shape = 'f32[16,128]{1,0:T(8,128)}', space=vmem, size = 0x2000, scoped, tag = 'scratch operand']
  %s0 = inlined_call_operand.vmem [shape: f32[2,16,128], index: 0, kind: input, shape index: {}]
  %s1 = inlined_call_operand.vmem [shape: f32[2,1,8,128], index: 1, kind: input, shape index: {}]
  %s2 = inlined_call_operand.vmem [shape: f32[2,4,128,128], index: 2, kind: input, shape index: {}]
  %s3 = inlined_call_operand.vmem [shape: f32[2,1,128], index: 3, kind: input, shape index: {}]
  %s4 = inlined_call_operand.vmem [shape: f32[2,1,128], index: 4, kind: input, shape index: {}]
  %s5 = inlined_call_operand.vmem [shape: f32[2,1,128], index: 5, kind: input, shape index: {}]
  %s6 = inlined_call_operand.vmem [shape: f32[2,128,128], index: 6, kind: input, shape index: {}]
  %s7 = inlined_call_operand.vmem [shape: f32[2,1,128], index: 7, kind: input, shape index: {}]
  %s8 = inlined_call_operand.vmem [shape: f32[2,128,128], index: 8, kind: input, shape index: {}]
  %s9 = inlined_call_operand.vmem [shape: f32[2,1,128], index: 9, kind: input, shape index: {}]
  %s10 = inlined_call_operand.vmem [shape: f32[2,16,128], index: 10, kind: output, shape index: {}]
  %s11 = sld [smem:[#allocation0]]
  $region73: #{_lambda_.2} parent=0
    _
  %s13 = ssub.s32 1, %s11
  %s14 = scalar_select 0, %s13, %s11
  loop: start=0, step=1, limit=4
  $region2: #{_lambda_.2} parent=0 // loop_pre_header
    _
  $region3: #{_lambda_.2} parent=0 // loop_header
    %s16 = sphi 0, %s20
    %p17 = scmp.ge.s32.totalorder %s16, 4
    %s23 = sphi 0, %s35
    %s24 = sphi 0, %s31
    %s25 = sphi 0, %s23
    %s26 = sphi 0, %s24
    %s27 = sphi 0, %s25
    %s28 = sphi 0, %s26
    %s40 = sphi 0, %s42
    %s43 = sphi 0, %s40
    %s44 = sphi 0, %s43
    %s60 = sphi 0, %s44
    %s68 = sphi 0, %s70
    %s71 = sphi 0, %s68
    %s72 = sphi 0, %s71
    %s88 = sphi 0, %s72
    %s94 = sphi 0, %s96
    %s97 = sphi 0, %s94
    %s98 = sphi 0, %s97
    %s114 = sphi 0, %s98
    %s120 = sphi 0, %s122
    %s123 = sphi 0, %s120
    %s124 = sphi 0, %s123
    %s140 = sphi 0, %s124
    %s146 = sphi 0, %s148
    %s149 = sphi 0, %s146
    %s150 = sphi 0, %s149
    %s166 = sphi 0, %s150
    %s172 = sphi 0, %s174
    %s175 = sphi 0, %s172
    %s176 = sphi 0, %s175
    %s192 = sphi 0, %s176
    %s198 = sphi 0, %s200
    %s201 = sphi 0, %s198
    %s202 = sphi 0, %s201
    %s218 = sphi 0, %s202
    %s224 = sphi 0, %s226
    %s227 = sphi 0, %s224
    %s228 = sphi 0, %s227
    %s244 = sphi 0, %s228
    %s250 = sphi 0, %s252
    %s253 = sphi 0, %s250
    %s254 = sphi 0, %s253
    %s270 = sphi 0, %s254
    %s276 = sphi 0, %s278
    %s279 = sphi 0, %s276
    %s280 = sphi 0, %s279
    %s296 = sphi 0, %s280
    %s304 = sphi 0, %s306
    %s307 = sphi 0, %s304
    %s308 = sphi 0, %s307
    %s324 = sphi 0, %s308
  $region4: #{_lambda_.2} parent=0 // loop_header_branch
    %19 = sbr.rel (%p17) target = $region8
  $region5: #{_lambda_.2} parent=0 // loop_body
    %s21 = ssub.s32 %s16, 1
    %s22 = ssub.s32 %s16, 2
    %s29 = sadd.s32 1, %s24
    %p30 = scmp.ge.s32.totalorder %s29, 1
    %s31 = scalar_select %p30, 0, %s29
    %s32 = sadd.s32 1, %s23
    %s33 = scalar_select %p30, %s32, %s23
    %p34 = scmp.ge.s32.totalorder %s33, 2
    %s35 = scalar_select %p34, 0, %s33
    %s36 = ssub.s32 %s23, %s35
    %s37 = ssub.s32 %s24, %s31
    %s38 = sor.u32 %s36, %s37
    %p39 = scmp.eq.s32.totalorder %s38, 0
    %s41 = sadd.s32 %s40, 1
    %s42 = scalar_select %p39, %s40, %s41
    %p45 = pneg %p39
    %p46 = scmp.eq.s32.totalorder %s16, 1
    %p47 = por %p45, %p46
    %p48 = scmp.ne.s32.totalorder %s40, %s43
    %p49 = scmp.eq.s32.totalorder %s16, 0
    %p50 = por %p48, %p49
    %p51 = scmp.ne.s32.totalorder %s40, %s43
    %p52 = scmp.eq.s32.totalorder %s21, 1
    %p53 = por %p51, %p52
    %p54 = scmp.ne.s32.totalorder %s43, %s44
    %p55 = scmp.eq.s32.totalorder %s21, 0
    %p56 = por %p54, %p55
    %p57 = scmp.ne.s32.totalorder %s43, %s44
    %p58 = scmp.eq.s32.totalorder %s22, 1
    %p59 = por %p57, %p58
    %p61 = scmp.ne.s32.totalorder %s44, %s60
    %p62 = scmp.eq.s32.totalorder %s22, 0
    %p63 = por %p61, %p62
    %s64 = ssub.s32 %s23, %s35
    %s65 = ssub.s32 %s24, %s31
    %s66 = sor.u32 %s64, %s65
    %p67 = scmp.eq.s32.totalorder %s66, 0
    %s69 = sadd.s32 %s68, 1
    %s70 = scalar_select %p67, %s68, %s69
    %p73 = pneg %p67
    %p74 = scmp.eq.s32.totalorder %s16, 1
    %p75 = por %p73, %p74
    %p76 = scmp.ne.s32.totalorder %s68, %s71
    %p77 = scmp.eq.s32.totalorder %s16, 0
    %p78 = por %p76, %p77
    %p79 = scmp.ne.s32.totalorder %s68, %s71
    %p80 = scmp.eq.s32.totalorder %s21, 1
    %p81 = por %p79, %p80
    %p82 = scmp.ne.s32.totalorder %s71, %s72
    %p83 = scmp.eq.s32.totalorder %s21, 0
    %p84 = por %p82, %p83
    %p85 = scmp.ne.s32.totalorder %s71, %s72
    %p86 = scmp.eq.s32.totalorder %s22, 1
    %p87 = por %p85, %p86
    %p89 = scmp.ne.s32.totalorder %s72, %s88
    %p90 = scmp.eq.s32.totalorder %s22, 0
    %p91 = por %p89, %p90
    %s92 = ssub.s32 %s23, %s35
    %p93 = scmp.eq.s32.totalorder %s92, 0
    %s95 = sadd.s32 %s94, 1
    %s96 = scalar_select %p93, %s94, %s95
    %p99 = pneg %p93
    %p100 = scmp.eq.s32.totalorder %s16, 1
    %p101 = por %p99, %p100
    %p102 = scmp.ne.s32.totalorder %s94, %s97
    %p103 = scmp.eq.s32.totalorder %s16, 0
    %p104 = por %p102, %p103
    %p105 = scmp.ne.s32.totalorder %s94, %s97
    %p106 = scmp.eq.s32.totalorder %s21, 1
    %p107 = por %p105, %p106
    %p108 = scmp.ne.s32.totalorder %s97, %s98
    %p109 = scmp.eq.s32.totalorder %s21, 0
    %p110 = por %p108, %p109
    %p111 = scmp.ne.s32.totalorder %s97, %s98
    %p112 = scmp.eq.s32.totalorder %s22, 1
    %p113 = por %p111, %p112
    %p115 = scmp.ne.s32.totalorder %s98, %s114
    %p116 = scmp.eq.s32.totalorder %s22, 0
    %p117 = por %p115, %p116
    %s118 = ssub.s32 %s23, %s35
    %p119 = scmp.eq.s32.totalorder %s118, 0
    %s121 = sadd.s32 %s120, 1
    %s122 = scalar_select %p119, %s120, %s121
    %p125 = pneg %p119
    %p126 = scmp.eq.s32.totalorder %s16, 1
    %p127 = por %p125, %p126
    %p128 = scmp.ne.s32.totalorder %s120, %s123
    %p129 = scmp.eq.s32.totalorder %s16, 0
    %p130 = por %p128, %p129
    %p131 = scmp.ne.s32.totalorder %s120, %s123
    %p132 = scmp.eq.s32.totalorder %s21, 1
    %p133 = por %p131, %p132
    %p134 = scmp.ne.s32.totalorder %s123, %s124
    %p135 = scmp.eq.s32.totalorder %s21, 0
    %p136 = por %p134, %p135
    %p137 = scmp.ne.s32.totalorder %s123, %s124
    %p138 = scmp.eq.s32.totalorder %s22, 1
    %p139 = por %p137, %p138
    %p141 = scmp.ne.s32.totalorder %s124, %s140
    %p142 = scmp.eq.s32.totalorder %s22, 0
    %p143 = por %p141, %p142
    %s144 = ssub.s32 %s23, %s35
    %p145 = scmp.eq.s32.totalorder %s144, 0
    %s147 = sadd.s32 %s146, 1
    %s148 = scalar_select %p145, %s146, %s147
    %p151 = pneg %p145
    %p152 = scmp.eq.s32.totalorder %s16, 1
    %p153 = por %p151, %p152
    %p154 = scmp.ne.s32.totalorder %s146, %s149
    %p155 = scmp.eq.s32.totalorder %s16, 0
    %p156 = por %p154, %p155
    %p157 = scmp.ne.s32.totalorder %s146, %s149
    %p158 = scmp.eq.s32.totalorder %s21, 1
    %p159 = por %p157, %p158
    %p160 = scmp.ne.s32.totalorder %s149, %s150
    %p161 = scmp.eq.s32.totalorder %s21, 0
    %p162 = por %p160, %p161
    %p163 = scmp.ne.s32.totalorder %s149, %s150
    %p164 = scmp.eq.s32.totalorder %s22, 1
    %p165 = por %p163, %p164
    %p167 = scmp.ne.s32.totalorder %s150, %s166
    %p168 = scmp.eq.s32.totalorder %s22, 0
    %p169 = por %p167, %p168
    %s170 = ssub.s32 %s23, %s35
    %p171 = scmp.eq.s32.totalorder %s170, 0
    %s173 = sadd.s32 %s172, 1
    %s174 = scalar_select %p171, %s172, %s173
    %p177 = pneg %p171
    %p178 = scmp.eq.s32.totalorder %s16, 1
    %p179 = por %p177, %p178
    %p180 = scmp.ne.s32.totalorder %s172, %s175
    %p181 = scmp.eq.s32.totalorder %s16, 0
    %p182 = por %p180, %p181
    %p183 = scmp.ne.s32.totalorder %s172, %s175
    %p184 = scmp.eq.s32.totalorder %s21, 1
    %p185 = por %p183, %p184
    %p186 = scmp.ne.s32.totalorder %s175, %s176
    %p187 = scmp.eq.s32.totalorder %s21, 0
    %p188 = por %p186, %p187
    %p189 = scmp.ne.s32.totalorder %s175, %s176
    %p190 = scmp.eq.s32.totalorder %s22, 1
    %p191 = por %p189, %p190
    %p193 = scmp.ne.s32.totalorder %s176, %s192
    %p194 = scmp.eq.s32.totalorder %s22, 0
    %p195 = por %p193, %p194
    %s196 = ssub.s32 %s23, %s35
    %p197 = scmp.eq.s32.totalorder %s196, 0
    %s199 = sadd.s32 %s198, 1
    %s200 = scalar_select %p197, %s198, %s199
    %p203 = pneg %p197
    %p204 = scmp.eq.s32.totalorder %s16, 1
    %p205 = por %p203, %p204
    %p206 = scmp.ne.s32.totalorder %s198, %s201
    %p207 = scmp.eq.s32.totalorder %s16, 0
    %p208 = por %p206, %p207
    %p209 = scmp.ne.s32.totalorder %s198, %s201
    %p210 = scmp.eq.s32.totalorder %s21, 1
    %p211 = por %p209, %p210
    %p212 = scmp.ne.s32.totalorder %s201, %s202
    %p213 = scmp.eq.s32.totalorder %s21, 0
    %p214 = por %p212, %p213
    %p215 = scmp.ne.s32.totalorder %s201, %s202
    %p216 = scmp.eq.s32.totalorder %s22, 1
    %p217 = por %p215, %p216
    %p219 = scmp.ne.s32.totalorder %s202, %s218
    %p220 = scmp.eq.s32.totalorder %s22, 0
    %p221 = por %p219, %p220
    %s222 = ssub.s32 %s23, %s35
    %p223 = scmp.eq.s32.totalorder %s222, 0
    %s225 = sadd.s32 %s224, 1
    %s226 = scalar_select %p223, %s224, %s225
    %p229 = pneg %p223
    %p230 = scmp.eq.s32.totalorder %s16, 1
    %p231 = por %p229, %p230
    %p232 = scmp.ne.s32.totalorder %s224, %s227
    %p233 = scmp.eq.s32.totalorder %s16, 0
    %p234 = por %p232, %p233
    %p235 = scmp.ne.s32.totalorder %s224, %s227
    %p236 = scmp.eq.s32.totalorder %s21, 1
    %p237 = por %p235, %p236
    %p238 = scmp.ne.s32.totalorder %s227, %s228
    %p239 = scmp.eq.s32.totalorder %s21, 0
    %p240 = por %p238, %p239
    %p241 = scmp.ne.s32.totalorder %s227, %s228
    %p242 = scmp.eq.s32.totalorder %s22, 1
    %p243 = por %p241, %p242
    %p245 = scmp.ne.s32.totalorder %s228, %s244
    %p246 = scmp.eq.s32.totalorder %s22, 0
    %p247 = por %p245, %p246
    %s248 = ssub.s32 %s23, %s35
    %p249 = scmp.eq.s32.totalorder %s248, 0
    %s251 = sadd.s32 %s250, 1
    %s252 = scalar_select %p249, %s250, %s251
    %p255 = pneg %p249
    %p256 = scmp.eq.s32.totalorder %s16, 1
    %p257 = por %p255, %p256
    %p258 = scmp.ne.s32.totalorder %s250, %s253
    %p259 = scmp.eq.s32.totalorder %s16, 0
    %p260 = por %p258, %p259
    %p261 = scmp.ne.s32.totalorder %s250, %s253
    %p262 = scmp.eq.s32.totalorder %s21, 1
    %p263 = por %p261, %p262
    %p264 = scmp.ne.s32.totalorder %s253, %s254
    %p265 = scmp.eq.s32.totalorder %s21, 0
    %p266 = por %p264, %p265
    %p267 = scmp.ne.s32.totalorder %s253, %s254
    %p268 = scmp.eq.s32.totalorder %s22, 1
    %p269 = por %p267, %p268
    %p271 = scmp.ne.s32.totalorder %s254, %s270
    %p272 = scmp.eq.s32.totalorder %s22, 0
    %p273 = por %p271, %p272
    %s274 = ssub.s32 %s23, %s35
    %p275 = scmp.eq.s32.totalorder %s274, 0
    %s277 = sadd.s32 %s276, 1
    %s278 = scalar_select %p275, %s276, %s277
    %p281 = pneg %p275
    %p282 = scmp.eq.s32.totalorder %s16, 1
    %p283 = por %p281, %p282
    %p284 = scmp.ne.s32.totalorder %s276, %s279
    %p285 = scmp.eq.s32.totalorder %s16, 0
    %p286 = por %p284, %p285
    %p287 = scmp.ne.s32.totalorder %s276, %s279
    %p288 = scmp.eq.s32.totalorder %s21, 1
    %p289 = por %p287, %p288
    %p290 = scmp.ne.s32.totalorder %s279, %s280
    %p291 = scmp.eq.s32.totalorder %s21, 0
    %p292 = por %p290, %p291
    %p293 = scmp.ne.s32.totalorder %s279, %s280
    %p294 = scmp.eq.s32.totalorder %s22, 1
    %p295 = por %p293, %p294
    %p297 = scmp.ne.s32.totalorder %s280, %s296
    %p298 = scmp.eq.s32.totalorder %s22, 0
    %p299 = por %p297, %p298
    %s300 = ssub.s32 %s23, %s35
    %s301 = ssub.s32 %s24, %s31
    %s302 = sor.u32 %s300, %s301
    %p303 = scmp.eq.s32.totalorder %s302, 0
    %s305 = sadd.s32 %s304, 1
    %s306 = scalar_select %p303, %s304, %s305
    %p309 = pneg %p303
    %p310 = scmp.eq.s32.totalorder %s16, 1
    %p311 = por %p309, %p310
    %p312 = scmp.ne.s32.totalorder %s304, %s307
    %p313 = scmp.eq.s32.totalorder %s16, 0
    %p314 = por %p312, %p313
    %p315 = scmp.ne.s32.totalorder %s304, %s307
    %p316 = scmp.eq.s32.totalorder %s21, 1
    %p317 = por %p315, %p316
    %p318 = scmp.ne.s32.totalorder %s307, %s308
    %p319 = scmp.eq.s32.totalorder %s21, 0
    %p320 = por %p318, %p319
    %p321 = scmp.ne.s32.totalorder %s307, %s308
    %p322 = scmp.eq.s32.totalorder %s22, 1
    %p323 = por %p321, %p322
    %p325 = scmp.ne.s32.totalorder %s308, %s324
    %p326 = scmp.eq.s32.totalorder %s22, 0
    %p327 = por %p325, %p326
    %p328 = scmp.le.s32.totalorder 1, %s16
    %p329 = scmp.lt.s32.totalorder %s16, 3
    %p330 = pnand %p328, %p329
    %p331 = pneg %p330
    // Predicated region
    $region9: #{_lambda_.2} parent=5 // pred_check
      _
    $region10: #{_lambda_.2} parent=5 // pred_check_branch
      %333 = sbr.rel (%p330) target = $region12
    $region11: #{_lambda_.2} parent=5 // pred_region
      %s334 = ssub.s32 %s16, 1
    $region12: #{_lambda_.2} parent=5 // pred_fallthru
      _
    %p335 = scmp.lt.s32.totalorder %s16, 2
    // Predicated region
    $region13: #{_lambda_.2} parent=5 // pred_check
      %p336 = pneg %p335
    $region14: #{_lambda_.2} parent=5 // pred_check_branch
      %338 = sbr.rel (%p336) target = $region16
    $region15: #{_lambda_.2} parent=5 // pred_region
      // Predicated region
      $region17: #{_lambda_.2} parent=15 // pred_check
        %p339 = pneg %p50
      $region18: #{_lambda_.2} parent=15 // pred_check_branch
        %341 = sbr.rel (%p339) target = $region20
      $region19: #{_lambda_.2} parent=15 // pred_region
        %s342 = smul.u32 2, %s24
        %p343 = scmp.lt.s32.totalorder %s23, 1
        %s344 = scalar_select %p343, %s23, 1
        %p345 = scmp.lt.s32.totalorder %s342, 1
        %s346 = scalar_select %p345, %s342, 1
        %s347 = smul.addr %s344, 2
        %s348 = sadd.s32 %s346, %s347
        %s349 = smul.addr %s348, 8
        %s350 = scalar_lea.vmem %s0, %s349
        %s351 = smul.u32 2, %s24
      $region20: #{_lambda_.2} parent=15 // pred_fallthru
        _
      // Predicated region
      $region21: #{_lambda_.2} parent=15 // pred_check
        %p352 = pneg %p78
      $region22: #{_lambda_.2} parent=15 // pred_check_branch
        %354 = sbr.rel (%p352) target = $region24
      $region23: #{_lambda_.2} parent=15 // pred_region
        %p355 = scmp.lt.s32.totalorder %s23, 1
        %s356 = scalar_select %p355, %s23, 1
        %p357 = scmp.lt.s32.totalorder %s24, 0
        %s358 = scalar_select %p357, %s24, 0
        %s359 = sadd.s32 %s358, %s356
        %s360 = smul.addr %s359, 8
        %s361 = scalar_lea.vmem %s1, %s360
      $region24: #{_lambda_.2} parent=15 // pred_fallthru
        _
      // Predicated region
      $region25: #{_lambda_.2} parent=15 // pred_check
        %p362 = pneg %p104
      $region26: #{_lambda_.2} parent=15 // pred_check_branch
        %364 = sbr.rel (%p362) target = $region28
      $region27: #{_lambda_.2} parent=15 // pred_region
        %p365 = scmp.lt.s32.totalorder %s23, 1
        %s366 = scalar_select %p365, %s23, 1
        %s367 = smul.addr %s366, 64
        %s368 = smul.addr %s367, 8
        %s369 = scalar_lea.vmem %s2, %s368
      $region28: #{_lambda_.2} parent=15 // pred_fallthru
        _
      // Predicated region
      $region29: #{_lambda_.2} parent=15 // pred_check
        %p370 = pneg %p130
      $region30: #{_lambda_.2} parent=15 // pred_check_branch
        %372 = sbr.rel (%p370) target = $region32
      $region31: #{_lambda_.2} parent=15 // pred_region
        %p373 = scmp.lt.s32.totalorder %s23, 1
        %s374 = scalar_select %p373, %s23, 1
        %s375 = scalar_lea.vmem %s3, %s374
      $region32: #{_lambda_.2} parent=15 // pred_fallthru
        _
      // Predicated region
      $region33: #{_lambda_.2} parent=15 // pred_check
        %p376 = pneg %p156
      $region34: #{_lambda_.2} parent=15 // pred_check_branch
        %378 = sbr.rel (%p376) target = $region36
      $region35: #{_lambda_.2} parent=15 // pred_region
        %p379 = scmp.lt.s32.totalorder %s23, 1
        %s380 = scalar_select %p379, %s23, 1
        %s381 = scalar_lea.vmem %s4, %s380
      $region36: #{_lambda_.2} parent=15 // pred_fallthru
        _
      // Predicated region
      $region37: #{_lambda_.2} parent=15 // pred_check
        %p382 = pneg %p182
      $region38: #{_lambda_.2} parent=15 // pred_check_branch
        %384 = sbr.rel (%p382) target = $region40
      $region39: #{_lambda_.2} parent=15 // pred_region
        %p385 = scmp.lt.s32.totalorder %s23, 1
        %s386 = scalar_select %p385, %s23, 1
        %s387 = scalar_lea.vmem %s5, %s386
      $region40: #{_lambda_.2} parent=15 // pred_fallthru
        _
      // Predicated region
      $region41: #{_lambda_.2} parent=15 // pred_check
        %p388 = pneg %p208
      $region42: #{_lambda_.2} parent=15 // pred_check_branch
        %390 = sbr.rel (%p388) target = $region44
      $region43: #{_lambda_.2} parent=15 // pred_region
        %p391 = scmp.lt.s32.totalorder %s23, 1
        %s392 = scalar_select %p391, %s23, 1
        %s393 = smul.addr %s392, 16
        %s394 = smul.addr %s393, 8
        %s395 = scalar_lea.vmem %s6, %s394
      $region44: #{_lambda_.2} parent=15 // pred_fallthru
        _
      // Predicated region
      $region45: #{_lambda_.2} parent=15 // pred_check
        %p396 = pneg %p234
      $region46: #{_lambda_.2} parent=15 // pred_check_branch
        %398 = sbr.rel (%p396) target = $region48
      $region47: #{_lambda_.2} parent=15 // pred_region
        %p399 = scmp.lt.s32.totalorder %s23, 1
        %s400 = scalar_select %p399, %s23, 1
        %s401 = scalar_lea.vmem %s7, %s400
      $region48: #{_lambda_.2} parent=15 // pred_fallthru
        _
      // Predicated region
      $region49: #{_lambda_.2} parent=15 // pred_check
        %p402 = pneg %p260
      $region50: #{_lambda_.2} parent=15 // pred_check_branch
        %404 = sbr.rel (%p402) target = $region52
      $region51: #{_lambda_.2} parent=15 // pred_region
        %p405 = scmp.lt.s32.totalorder %s23, 1
        %s406 = scalar_select %p405, %s23, 1
        %s407 = smul.addr %s406, 16
        %s408 = smul.addr %s407, 8
        %s409 = scalar_lea.vmem %s8, %s408
      $region52: #{_lambda_.2} parent=15 // pred_fallthru
        _
      // Predicated region
      $region53: #{_lambda_.2} parent=15 // pred_check
        %p410 = pneg %p286
      $region54: #{_lambda_.2} parent=15 // pred_check_branch
        %412 = sbr.rel (%p410) target = $region56
      $region55: #{_lambda_.2} parent=15 // pred_region
        %p413 = scmp.lt.s32.totalorder %s23, 1
        %s414 = scalar_select %p413, %s23, 1
        %s415 = scalar_lea.vmem %s9, %s414
      $region56: #{_lambda_.2} parent=15 // pred_fallthru
        _
    $region16: #{_lambda_.2} parent=5 // pred_fallthru
      _
    %p416 = scmp.le.s32.totalorder 1, %s16
    %p417 = scmp.lt.s32.totalorder %s16, 3
    %p418 = pnand %p416, %p417
    %p419 = pneg %p418
    // Predicated region
    $region57: #{_lambda_.2} parent=5 // pred_check
      _
    $region58: #{_lambda_.2} parent=5 // pred_check_branch
      %421 = sbr.rel (%p418) target = $region60
    $region59: #{_lambda_.2} parent=5 // pred_region
      %s422 = ssub.s32 %s16, 1
      %s423 = smul.u32 2, %s26
      %p424 = scmp.lt.s32.totalorder %s25, 1
      %s425 = scalar_select %p424, %s25, 1
      %p426 = scmp.lt.s32.totalorder %s423, 1
      %s427 = scalar_select %p426, %s423, 1
      %s428 = smul.addr %s425, 2
      %s429 = sadd.s32 %s427, %s428
      %s430 = smul.addr %s429, 8
      %s431 = scalar_lea.vmem %s0, %s430
      %p432 = pneg %p56
      %p433 = pneg %p53
      %p434 = scmp.lt.s32.totalorder %s25, 1
      %s435 = scalar_select %p434, %s25, 1
      %p436 = scmp.lt.s32.totalorder %s26, 0
      %s437 = scalar_select %p436, %s26, 0
      %s438 = sadd.s32 %s437, %s435
      %s439 = smul.addr %s438, 8
      %s440 = scalar_lea.vmem %s1, %s439
      %p441 = pneg %p84
      %p442 = pneg %p81
      %p443 = scmp.lt.s32.totalorder %s25, 1
      %s444 = scalar_select %p443, %s25, 1
      %s445 = smul.addr %s444, 64
      %s446 = smul.addr %s445, 8
      %s447 = scalar_lea.vmem %s2, %s446
      %p448 = pneg %p110
      %p449 = pneg %p107
      %p450 = scmp.lt.s32.totalorder %s25, 1
      %s451 = scalar_select %p450, %s25, 1
      %s452 = scalar_lea.vmem %s3, %s451
      %p453 = pneg %p136
      %p454 = pneg %p133
      %p455 = scmp.lt.s32.totalorder %s25, 1
      %s456 = scalar_select %p455, %s25, 1
      %s457 = scalar_lea.vmem %s4, %s456
      %p458 = pneg %p162
      %p459 = pneg %p159
      %p460 = scmp.lt.s32.totalorder %s25, 1
      %s461 = scalar_select %p460, %s25, 1
      %s462 = scalar_lea.vmem %s5, %s461
      %p463 = pneg %p188
      %p464 = pneg %p185
      %p465 = scmp.lt.s32.totalorder %s25, 1
      %s466 = scalar_select %p465, %s25, 1
      %s467 = smul.addr %s466, 16
      %s468 = smul.addr %s467, 8
      %s469 = scalar_lea.vmem %s6, %s468
      %p470 = pneg %p214
      %p471 = pneg %p211
      %p472 = scmp.lt.s32.totalorder %s25, 1
      %s473 = scalar_select %p472, %s25, 1
      %s474 = scalar_lea.vmem %s7, %s473
      %p475 = pneg %p240
      %p476 = pneg %p237
      %p477 = scmp.lt.s32.totalorder %s25, 1
      %s478 = scalar_select %p477, %s25, 1
      %s479 = smul.addr %s478, 16
      %s480 = smul.addr %s479, 8
      %s481 = scalar_lea.vmem %s8, %s480
      %p482 = pneg %p266
      %p483 = pneg %p263
      %p484 = scmp.lt.s32.totalorder %s25, 1
      %s485 = scalar_select %p484, %s25, 1
      %s486 = scalar_lea.vmem %s9, %s485
      %p487 = pneg %p292
      %p488 = pneg %p289
      %p489 = pneg %p320
      %p490 = pneg %p317
      %s491 = smul.u32 2, %s26
      %p492 = scmp.lt.s32.totalorder %s25, 1
      %s493 = scalar_select %p492, %s25, 1
      %p494 = scmp.lt.s32.totalorder %s491, 1
      %s495 = scalar_select %p494, %s491, 1
      %s496 = smul.addr %s493, 2
      %s497 = sadd.s32 %s495, %s496
      %s498 = smul.addr %s497, 8
      %s499 = scalar_lea.vmem %s10, %s498
      %s500 = smul.u32 2, %s26
      %p501 = scmp.lt.s32.totalorder %s25, 1
      %s502 = scalar_select %p501, %s25, 1
      %p503 = scmp.lt.s32.totalorder %s500, 1
      %s504 = scalar_select %p503, %s500, 1
      %s505 = smul.addr %s502, 2
      %s506 = sadd.s32 %s504, %s505
      %s507 = smul.addr %s506, 8
      %s508 = scalar_lea.vmem %s0, %s507
      %s509 = smul.u32 2, %s26
      %p510 = scmp.lt.s32.totalorder %s25, 1
      %s511 = scalar_select %p510, %s25, 1
      %p512 = scmp.lt.s32.totalorder %s26, 0
      %s513 = scalar_select %p512, %s26, 0
      %s514 = sadd.s32 %s513, %s511
      %s515 = smul.addr %s514, 8
      %s516 = scalar_lea.vmem %s1, %s515
      %p517 = scmp.lt.s32.totalorder %s25, 1
      %s518 = scalar_select %p517, %s25, 1
      %s519 = smul.addr %s518, 64
      %s520 = smul.addr %s519, 8
      %s521 = scalar_lea.vmem %s2, %s520
      %p522 = scmp.lt.s32.totalorder %s25, 1
      %s523 = scalar_select %p522, %s25, 1
      %s524 = scalar_lea.vmem %s3, %s523
      %p525 = scmp.lt.s32.totalorder %s25, 1
      %s526 = scalar_select %p525, %s25, 1
      %s527 = scalar_lea.vmem %s4, %s526
      %p528 = scmp.lt.s32.totalorder %s25, 1
      %s529 = scalar_select %p528, %s25, 1
      %s530 = scalar_lea.vmem %s5, %s529
      %p531 = scmp.lt.s32.totalorder %s25, 1
      %s532 = scalar_select %p531, %s25, 1
      %s533 = smul.addr %s532, 16
      %s534 = smul.addr %s533, 8
      %s535 = scalar_lea.vmem %s6, %s534
      %p536 = scmp.lt.s32.totalorder %s25, 1
      %s537 = scalar_select %p536, %s25, 1
      %s538 = scalar_lea.vmem %s7, %s537
      %p539 = scmp.lt.s32.totalorder %s25, 1
      %s540 = scalar_select %p539, %s25, 1
      %s541 = smul.addr %s540, 16
      %s542 = smul.addr %s541, 8
      %s543 = scalar_lea.vmem %s8, %s542
      %p544 = scmp.lt.s32.totalorder %s25, 1
      %s545 = scalar_select %p544, %s25, 1
      %s546 = scalar_lea.vmem %s9, %s545
      %s547 = smul.u32 2, %s26
      %p548 = scmp.lt.s32.totalorder %s25, 1
      %s549 = scalar_select %p548, %s25, 1
      %p550 = scmp.lt.s32.totalorder %s547, 1
      %s551 = scalar_select %p550, %s547, 1
      %s552 = smul.addr %s549, 2
      %s553 = sadd.s32 %s551, %s552
      %s554 = smul.addr %s553, 8
      %s555 = scalar_lea.vmem %s10, %s554
      %s556 = smul.u32 2, %s26
      %v557 = vld [vmem:[%s508] sm:$0xff]
      %v558 = vld [vmem:[%s508 + $0x8] sm:$0xff]
      %s559 = scalar_lea.vmem %s521, 384
      %v560 = vld [vmem:[%s559] sm:$0xff]
      %v561 = vld [vmem:[%s559 + $0x8] sm:$0xff]
      %v562 = vld [vmem:[%s559 + $0x10] sm:$0xff]
      %v563 = vld [vmem:[%s559 + $0x18] sm:$0xff]
      %v564 = vld [vmem:[%s559 + $0x20] sm:$0xff]
      %v565 = vld [vmem:[%s559 + $0x28] sm:$0xff]
      %v566 = vld [vmem:[%s559 + $0x30] sm:$0xff]
      %v567 = vld [vmem:[%s559 + $0x38] sm:$0xff]
      %v568 = vld [vmem:[%s559 + $0x40] sm:$0xff]
      %v569 = vld [vmem:[%s559 + $0x48] sm:$0xff]
      %v570 = vld [vmem:[%s559 + $0x50] sm:$0xff]
      %v571 = vld [vmem:[%s559 + $0x58] sm:$0xff]
      %v572 = vld [vmem:[%s559 + $0x60] sm:$0xff]
      %v573 = vld [vmem:[%s559 + $0x68] sm:$0xff]
      %v574 = vld [vmem:[%s559 + $0x70] sm:$0xff]
      %v575 = vld [vmem:[%s559 + $0x78] sm:$0xff]
      %v576 = vand.u32 %v575, 4294901760
      %577 = vmatpush.msra.mxu0 %v576
      %v578 = vand.u32 %v574, 4294901760
      %579 = vmatpush.msra.mxu0 %v578
      %v580 = vand.u32 %v573, 4294901760
      %581 = vmatpush.msra.mxu0 %v580
      %v582 = vand.u32 %v572, 4294901760
      %583 = vmatpush.msra.mxu0 %v582
      %v584 = vand.u32 %v571, 4294901760
      %585 = vmatpush.msra.mxu0 %v584
      %v586 = vand.u32 %v570, 4294901760
      %587 = vmatpush.msra.mxu0 %v586
      %v588 = vand.u32 %v569, 4294901760
      %589 = vmatpush.msra.mxu0 %v588
      %v590 = vand.u32 %v568, 4294901760
      %591 = vmatpush.msra.mxu0 %v590
      %v592 = vand.u32 %v567, 4294901760
      %593 = vmatpush.msra.mxu0 %v592
      %v594 = vand.u32 %v566, 4294901760
      %595 = vmatpush.msra.mxu0 %v594
      %v596 = vand.u32 %v565, 4294901760
      %597 = vmatpush.msra.mxu0 %v596
      %v598 = vand.u32 %v564, 4294901760
      %599 = vmatpush.msra.mxu0 %v598
      %v600 = vand.u32 %v563, 4294901760
      %601 = vmatpush.msra.mxu0 %v600
      %v602 = vand.u32 %v562, 4294901760
      %603 = vmatpush.msra.mxu0 %v602
      %v604 = vand.u32 %v561, 4294901760
      %605 = vmatpush.msra.mxu0 %v604
      %v606 = vand.u32 %v560, 4294901760
      %607 = vmatpush.msra.mxu0 %v606
      %v608 = vand.u32 %v557, 4294901760
      %v609 = vsub.f32 %v557, %v608
      %v610 = vand.u32 %v609, 4294901760
      %v611 = vsub.f32 %v609, %v610
      %v612 = vand.u32 %v611, 4294901760
      %613 = vmatmul.f32.gmra.mxu0 %v612
      %v614 = vpop.f32.mrf.mxu0
      %v615 = vadd.f32 0.0, %v614
      %v616 = vand.u32 %v558, 4294901760
      %v617 = vsub.f32 %v558, %v616
      %v618 = vand.u32 %v617, 4294901760
      %v619 = vsub.f32 %v617, %v618
      %v620 = vand.u32 %v619, 4294901760
      %621 = vmatmul.f32.gmra.mxu0 %v620
      %v622 = vpop.f32.mrf.mxu0
      %v623 = vadd.f32 0.0, %v622
      %624 = vdwg.mxu0
      %v625 = vand.u32 %v575, 4294901760
      %v626 = vsub.f32 %v575, %v625
      %v627 = vand.u32 %v626, 4294901760
      %v628 = vsub.f32 %v626, %v627
      %v629 = vand.u32 %v628, 4294901760
      %630 = vmatpush.msra.mxu0 %v629
      %v631 = vand.u32 %v574, 4294901760
      %v632 = vsub.f32 %v574, %v631
      %v633 = vand.u32 %v632, 4294901760
      %v634 = vsub.f32 %v632, %v633
      %v635 = vand.u32 %v634, 4294901760
      %636 = vmatpush.msra.mxu0 %v635
      %v637 = vand.u32 %v573, 4294901760
      %v638 = vsub.f32 %v573, %v637
      %v639 = vand.u32 %v638, 4294901760
      %v640 = vsub.f32 %v638, %v639
      %v641 = vand.u32 %v640, 4294901760
      %642 = vmatpush.msra.mxu0 %v641
      %v643 = vand.u32 %v572, 4294901760
      %v644 = vsub.f32 %v572, %v643
      %v645 = vand.u32 %v644, 4294901760
      %v646 = vsub.f32 %v644, %v645
      %v647 = vand.u32 %v646, 4294901760
      %648 = vmatpush.msra.mxu0 %v647
      %v649 = vand.u32 %v571, 4294901760
      %v650 = vsub.f32 %v571, %v649
      %v651 = vand.u32 %v650, 4294901760
      %v652 = vsub.f32 %v650, %v651
      %v653 = vand.u32 %v652, 4294901760
      %654 = vmatpush.msra.mxu0 %v653
      %v655 = vand.u32 %v570, 4294901760
      %v656 = vsub.f32 %v570, %v655
      %v657 = vand.u32 %v656, 4294901760
      %v658 = vsub.f32 %v656, %v657
      %v659 = vand.u32 %v658, 4294901760
      %660 = vmatpush.msra.mxu0 %v659
      %v661 = vand.u32 %v569, 4294901760
      %v662 = vsub.f32 %v569, %v661
      %v663 = vand.u32 %v662, 4294901760
      %v664 = vsub.f32 %v662, %v663
      %v665 = vand.u32 %v664, 4294901760
      %666 = vmatpush.msra.mxu0 %v665
      %v667 = vand.u32 %v568, 4294901760
      %v668 = vsub.f32 %v568, %v667
      %v669 = vand.u32 %v668, 4294901760
      %v670 = vsub.f32 %v668, %v669
      %v671 = vand.u32 %v670, 4294901760
      %672 = vmatpush.msra.mxu0 %v671
      %v673 = vand.u32 %v567, 4294901760
      %v674 = vsub.f32 %v567, %v673
      %v675 = vand.u32 %v674, 4294901760
      %v676 = vsub.f32 %v674, %v675
      %v677 = vand.u32 %v676, 4294901760
      %678 = vmatpush.msra.mxu0 %v677
      %v679 = vand.u32 %v566, 4294901760
      %v680 = vsub.f32 %v566, %v679
      %v681 = vand.u32 %v680, 4294901760
      %v682 = vsub.f32 %v680, %v681
      %v683 = vand.u32 %v682, 4294901760
      %684 = vmatpush.msra.mxu0 %v683
      %v685 = vand.u32 %v565, 4294901760
      %v686 = vsub.f32 %v565, %v685
      %v687 = vand.u32 %v686, 4294901760
      %v688 = vsub.f32 %v686, %v687
      %v689 = vand.u32 %v688, 4294901760
      %690 = vmatpush.msra.mxu0 %v689
      %v691 = vand.u32 %v564, 4294901760
      %v692 = vsub.f32 %v564, %v691
      %v693 = vand.u32 %v692, 4294901760
      %v694 = vsub.f32 %v692, %v693
      %v695 = vand.u32 %v694, 4294901760
      %696 = vmatpush.msra.mxu0 %v695
      %v697 = vand.u32 %v563, 4294901760
      %v698 = vsub.f32 %v563, %v697
      %v699 = vand.u32 %v698, 4294901760
      %v700 = vsub.f32 %v698, %v699
      %v701 = vand.u32 %v700, 4294901760
      %702 = vmatpush.msra.mxu0 %v701
      %v703 = vand.u32 %v562, 4294901760
      %v704 = vsub.f32 %v562, %v703
      %v705 = vand.u32 %v704, 4294901760
      %v706 = vsub.f32 %v704, %v705
      %v707 = vand.u32 %v706, 4294901760
      %708 = vmatpush.msra.mxu0 %v707
      %v709 = vand.u32 %v561, 4294901760
      %v710 = vsub.f32 %v561, %v709
      %v711 = vand.u32 %v710, 4294901760
      %v712 = vsub.f32 %v710, %v711
      %v713 = vand.u32 %v712, 4294901760
      %714 = vmatpush.msra.mxu0 %v713
      %v715 = vand.u32 %v560, 4294901760
      %v716 = vsub.f32 %v560, %v715
      %v717 = vand.u32 %v716, 4294901760
      %v718 = vsub.f32 %v716, %v717
      %v719 = vand.u32 %v718, 4294901760
      %720 = vmatpush.msra.mxu0 %v719
      %v721 = vand.u32 %v557, 4294901760
      %722 = vmatmul.f32.gmra.mxu0 %v721
      %v723 = vpop.f32.mrf.mxu0
      %v724 = vadd.f32 %v615, %v723
      %v725 = vand.u32 %v558, 4294901760
      %726 = vmatmul.f32.gmra.mxu0 %v725
      %v727 = vpop.f32.mrf.mxu0
      %v728 = vadd.f32 %v623, %v727
      %729 = vdwg.mxu0
      %v730 = vand.u32 %v575, 4294901760
      %v731 = vsub.f32 %v575, %v730
      %732 = vmatpush.msra.mxu0 %v731
      %v733 = vand.u32 %v574, 4294901760
      %v734 = vsub.f32 %v574, %v733
      %735 = vmatpush.msra.mxu0 %v734
      %v736 = vand.u32 %v573, 4294901760
      %v737 = vsub.f32 %v573, %v736
      %738 = vmatpush.msra.mxu0 %v737
      %v739 = vand.u32 %v572, 4294901760
      %v740 = vsub.f32 %v572, %v739
      %741 = vmatpush.msra.mxu0 %v740
      %v742 = vand.u32 %v571, 4294901760
      %v743 = vsub.f32 %v571, %v742
      %744 = vmatpush.msra.mxu0 %v743
      %v745 = vand.u32 %v570, 4294901760
      %v746 = vsub.f32 %v570, %v745
      %747 = vmatpush.msra.mxu0 %v746
      %v748 = vand.u32 %v569, 4294901760
      %v749 = vsub.f32 %v569, %v748
      %750 = vmatpush.msra.mxu0 %v749
      %v751 = vand.u32 %v568, 4294901760
      %v752 = vsub.f32 %v568, %v751
      %753 = vmatpush.msra.mxu0 %v752
      %v754 = vand.u32 %v567, 4294901760
      %v755 = vsub.f32 %v567, %v754
      %756 = vmatpush.msra.mxu0 %v755
      %v757 = vand.u32 %v566, 4294901760
      %v758 = vsub.f32 %v566, %v757
      %759 = vmatpush.msra.mxu0 %v758
      %v760 = vand.u32 %v565, 4294901760
      %v761 = vsub.f32 %v565, %v760
      %762 = vmatpush.msra.mxu0 %v761
      %v763 = vand.u32 %v564, 4294901760
      %v764 = vsub.f32 %v564, %v763
      %765 = vmatpush.msra.mxu0 %v764
      %v766 = vand.u32 %v563, 4294901760
      %v767 = vsub.f32 %v563, %v766
      %768 = vmatpush.msra.mxu0 %v767
      %v769 = vand.u32 %v562, 4294901760
      %v770 = vsub.f32 %v562, %v769
      %771 = vmatpush.msra.mxu0 %v770
      %v772 = vand.u32 %v561, 4294901760
      %v773 = vsub.f32 %v561, %v772
      %774 = vmatpush.msra.mxu0 %v773
      %v775 = vand.u32 %v560, 4294901760
      %v776 = vsub.f32 %v560, %v775
      %777 = vmatpush.msra.mxu0 %v776
      %v778 = vand.u32 %v557, 4294901760
      %v779 = vsub.f32 %v557, %v778
      %780 = vmatmul.f32.gmra.mxu0 %v779
      %v781 = vpop.f32.mrf.mxu0
      %v782 = vadd.f32 %v724, %v781
      %v783 = vand.u32 %v558, 4294901760
      %v784 = vsub.f32 %v558, %v783
      %785 = vmatmul.f32.gmra.mxu0 %v784
      %v786 = vpop.f32.mrf.mxu0
      %v787 = vadd.f32 %v728, %v786
      %788 = vdwg.mxu0
      %v789 = vand.u32 %v575, 4294901760
      %790 = vmatpush.msra.mxu0 %v789
      %v791 = vand.u32 %v574, 4294901760
      %792 = vmatpush.msra.mxu0 %v791
      %v793 = vand.u32 %v573, 4294901760
      %794 = vmatpush.msra.mxu0 %v793
      %v795 = vand.u32 %v572, 4294901760
      %796 = vmatpush.msra.mxu0 %v795
      %v797 = vand.u32 %v571, 4294901760
      %798 = vmatpush.msra.mxu0 %v797
      %v799 = vand.u32 %v570, 4294901760
      %800 = vmatpush.msra.mxu0 %v799
      %v801 = vand.u32 %v569, 4294901760
      %802 = vmatpush.msra.mxu0 %v801
      %v803 = vand.u32 %v568, 4294901760
      %804 = vmatpush.msra.mxu0 %v803
      %v805 = vand.u32 %v567, 4294901760
      %806 = vmatpush.msra.mxu0 %v805
      %v807 = vand.u32 %v566, 4294901760
      %808 = vmatpush.msra.mxu0 %v807
      %v809 = vand.u32 %v565, 4294901760
      %810 = vmatpush.msra.mxu0 %v809
      %v811 = vand.u32 %v564, 4294901760
      %812 = vmatpush.msra.mxu0 %v811
      %v813 = vand.u32 %v563, 4294901760
      %814 = vmatpush.msra.mxu0 %v813
      %v815 = vand.u32 %v562, 4294901760
      %816 = vmatpush.msra.mxu0 %v815
      %v817 = vand.u32 %v561, 4294901760
      %818 = vmatpush.msra.mxu0 %v817
      %v819 = vand.u32 %v560, 4294901760
      %820 = vmatpush.msra.mxu0 %v819
      %v821 = vand.u32 %v557, 4294901760
      %v822 = vsub.f32 %v557, %v821
      %v823 = vand.u32 %v822, 4294901760
      %824 = vmatmul.f32.gmra.mxu0 %v823
      %v825 = vpop.f32.mrf.mxu0
      %v826 = vadd.f32 %v782, %v825
      %v827 = vand.u32 %v558, 4294901760
      %v828 = vsub.f32 %v558, %v827
      %v829 = vand.u32 %v828, 4294901760
      %830 = vmatmul.f32.gmra.mxu0 %v829
      %v831 = vpop.f32.mrf.mxu0
      %v832 = vadd.f32 %v787, %v831
      %833 = vdwg.mxu0
      %v834 = vand.u32 %v575, 4294901760
      %v835 = vsub.f32 %v575, %v834
      %v836 = vand.u32 %v835, 4294901760
      %837 = vmatpush.msra.mxu0 %v836
      %v838 = vand.u32 %v574, 4294901760
      %v839 = vsub.f32 %v574, %v838
      %v840 = vand.u32 %v839, 4294901760
      %841 = vmatpush.msra.mxu0 %v840
      %v842 = vand.u32 %v573, 4294901760
      %v843 = vsub.f32 %v573, %v842
      %v844 = vand.u32 %v843, 4294901760
      %845 = vmatpush.msra.mxu0 %v844
      %v846 = vand.u32 %v572, 4294901760
      %v847 = vsub.f32 %v572, %v846
      %v848 = vand.u32 %v847, 4294901760
      %849 = vmatpush.msra.mxu0 %v848
      %v850 = vand.u32 %v571, 4294901760
      %v851 = vsub.f32 %v571, %v850
      %v852 = vand.u32 %v851, 4294901760
      %853 = vmatpush.msra.mxu0 %v852
      %v854 = vand.u32 %v570, 4294901760
      %v855 = vsub.f32 %v570, %v854
      %v856 = vand.u32 %v855, 4294901760
      %857 = vmatpush.msra.mxu0 %v856
      %v858 = vand.u32 %v569, 4294901760
      %v859 = vsub.f32 %v569, %v858
      %v860 = vand.u32 %v859, 4294901760
      %861 = vmatpush.msra.mxu0 %v860
      %v862 = vand.u32 %v568, 4294901760
      %v863 = vsub.f32 %v568, %v862
      %v864 = vand.u32 %v863, 4294901760
      %865 = vmatpush.msra.mxu0 %v864
      %v866 = vand.u32 %v567, 4294901760
      %v867 = vsub.f32 %v567, %v866
      %v868 = vand.u32 %v867, 4294901760
      %869 = vmatpush.msra.mxu0 %v868
      %v870 = vand.u32 %v566, 4294901760
      %v871 = vsub.f32 %v566, %v870
      %v872 = vand.u32 %v871, 4294901760
      %873 = vmatpush.msra.mxu0 %v872
      %v874 = vand.u32 %v565, 4294901760
      %v875 = vsub.f32 %v565, %v874
      %v876 = vand.u32 %v875, 4294901760
      %877 = vmatpush.msra.mxu0 %v876
      %v878 = vand.u32 %v564, 4294901760
      %v879 = vsub.f32 %v564, %v878
      %v880 = vand.u32 %v879, 4294901760
      %881 = vmatpush.msra.mxu0 %v880
      %v882 = vand.u32 %v563, 4294901760
      %v883 = vsub.f32 %v563, %v882
      %v884 = vand.u32 %v883, 4294901760
      %885 = vmatpush.msra.mxu0 %v884
      %v886 = vand.u32 %v562, 4294901760
      %v887 = vsub.f32 %v562, %v886
      %v888 = vand.u32 %v887, 4294901760
      %889 = vmatpush.msra.mxu0 %v888
      %v890 = vand.u32 %v561, 4294901760
      %v891 = vsub.f32 %v561, %v890
      %v892 = vand.u32 %v891, 4294901760
      %893 = vmatpush.msra.mxu0 %v892
      %v894 = vand.u32 %v560, 4294901760
      %v895 = vsub.f32 %v560, %v894
      %v896 = vand.u32 %v895, 4294901760
      %897 = vmatpush.msra.mxu0 %v896
      %v898 = vand.u32 %v557, 4294901760
      %899 = vmatmul.f32.gmra.mxu0 %v898
      %v900 = vpop.f32.mrf.mxu0
      %v901 = vadd.f32 %v826, %v900
      %v902 = vand.u32 %v558, 4294901760
      %903 = vmatmul.f32.gmra.mxu0 %v902
      %v904 = vpop.f32.mrf.mxu0
      %v905 = vadd.f32 %v832, %v904
      %906 = vdwg.mxu0
      %v907 = vand.u32 %v575, 4294901760
      %908 = vmatpush.msra.mxu0 %v907
      %v909 = vand.u32 %v574, 4294901760
      %910 = vmatpush.msra.mxu0 %v909
      %v911 = vand.u32 %v573, 4294901760
      %912 = vmatpush.msra.mxu0 %v911
      %v913 = vand.u32 %v572, 4294901760
      %914 = vmatpush.msra.mxu0 %v913
      %v915 = vand.u32 %v571, 4294901760
      %916 = vmatpush.msra.mxu0 %v915
      %v917 = vand.u32 %v570, 4294901760
      %918 = vmatpush.msra.mxu0 %v917
      %v919 = vand.u32 %v569, 4294901760
      %920 = vmatpush.msra.mxu0 %v919
      %v921 = vand.u32 %v568, 4294901760
      %922 = vmatpush.msra.mxu0 %v921
      %v923 = vand.u32 %v567, 4294901760
      %924 = vmatpush.msra.mxu0 %v923
      %v925 = vand.u32 %v566, 4294901760
      %926 = vmatpush.msra.mxu0 %v925
      %v927 = vand.u32 %v565, 4294901760
      %928 = vmatpush.msra.mxu0 %v927
      %v929 = vand.u32 %v564, 4294901760
      %930 = vmatpush.msra.mxu0 %v929
      %v931 = vand.u32 %v563, 4294901760
      %932 = vmatpush.msra.mxu0 %v931
      %v933 = vand.u32 %v562, 4294901760
      %934 = vmatpush.msra.mxu0 %v933
      %v935 = vand.u32 %v561, 4294901760
      %936 = vmatpush.msra.mxu0 %v935
      %v937 = vand.u32 %v560, 4294901760
      %938 = vmatpush.msra.mxu0 %v937
      %v939 = vand.u32 %v557, 4294901760
      %940 = vmatmul.f32.gmra.mxu0 %v939
      %v941 = vpop.f32.mrf.mxu0
      %v942 = vadd.f32 %v901, %v941
      %v943 = vand.u32 %v558, 4294901760
      %944 = vmatmul.f32.gmra.mxu0 %v943
      %v945 = vpop.f32.mrf.mxu0
      %v946 = vadd.f32 %v905, %v945
      %947 = vdwg.mxu0
      %948 = vst [vmem:[#allocation2] sm:$0xff] %v942
      %949 = vst [vmem:[#allocation2 + $0x8] sm:$0xff] %v946
      %v950 = vld [vmem:[#allocation2] sm:$0x3f]
      %v951 = vld [vmem:[%s516] sm:$0x3f]
      %v952 = vld [vmem:[%s521] sm:$0xff]
      %v953 = vld [vmem:[%s521 + $0x8] sm:$0xff]
      %v954 = vld [vmem:[%s521 + $0x10] sm:$0xff]
      %v955 = vld [vmem:[%s521 + $0x18] sm:$0xff]
      %v956 = vld [vmem:[%s521 + $0x20] sm:$0xff]
      %v957 = vld [vmem:[%s521 + $0x28] sm:$0xff]
      %v958 = vld [vmem:[%s521 + $0x30] sm:$0xff]
      %v959 = vld [vmem:[%s521 + $0x38] sm:$0xff]
      %v960 = vld [vmem:[%s521 + $0x40] sm:$0xff]
      %v961 = vld [vmem:[%s521 + $0x48] sm:$0xff]
      %v962 = vld [vmem:[%s521 + $0x50] sm:$0xff]
      %v963 = vld [vmem:[%s521 + $0x58] sm:$0xff]
      %v964 = vld [vmem:[%s521 + $0x60] sm:$0xff]
      %v965 = vld [vmem:[%s521 + $0x68] sm:$0xff]
      %v966 = vld [vmem:[%s521 + $0x70] sm:$0xff]
      %v967 = vld [vmem:[%s521 + $0x78] sm:$0xff]
      %v968 = vand.u32 %v967, 4294901760
      %969 = vmatpush.msra.mxu0 %v968
      %v970 = vand.u32 %v966, 4294901760
      %971 = vmatpush.msra.mxu0 %v970
      %v972 = vand.u32 %v965, 4294901760
      %973 = vmatpush.msra.mxu0 %v972
      %v974 = vand.u32 %v964, 4294901760
      %975 = vmatpush.msra.mxu0 %v974
      %v976 = vand.u32 %v963, 4294901760
      %977 = vmatpush.msra.mxu0 %v976
      %v978 = vand.u32 %v962, 4294901760
      %979 = vmatpush.msra.mxu0 %v978
      %v980 = vand.u32 %v961, 4294901760
      %981 = vmatpush.msra.mxu0 %v980
      %v982 = vand.u32 %v960, 4294901760
      %983 = vmatpush.msra.mxu0 %v982
      %v984 = vand.u32 %v959, 4294901760
      %985 = vmatpush.msra.mxu0 %v984
      %v986 = vand.u32 %v958, 4294901760
      %987 = vmatpush.msra.mxu0 %v986
      %v988 = vand.u32 %v957, 4294901760
      %989 = vmatpush.msra.mxu0 %v988
      %v990 = vand.u32 %v956, 4294901760
      %991 = vmatpush.msra.mxu0 %v990
      %v992 = vand.u32 %v955, 4294901760
      %993 = vmatpush.msra.mxu0 %v992
      %v994 = vand.u32 %v954, 4294901760
      %995 = vmatpush.msra.mxu0 %v994
      %v996 = vand.u32 %v953, 4294901760
      %997 = vmatpush.msra.mxu0 %v996
      %v998 = vand.u32 %v952, 4294901760
      %999 = vmatpush.msra.mxu0 %v998
      %v1000 = vand.u32 %v951, 4294901760
      %v1001 = vsub.f32 %v951, %v1000
      %v1002 = vand.u32 %v1001, 4294901760
      %v1003 = vsub.f32 %v1001, %v1002
      %v1004 = vand.u32 %v1003, 4294901760
      %1005 = vmatmul.f32.gmra.mxu0 %v1004
      %v1006 = vpop.f32.mrf.mxu0
      %v1007 = vadd.f32 0.0, %v1006
      %1008 = vdwg.mxu0
      %v1009 = vand.u32 %v967, 4294901760
      %v1010 = vsub.f32 %v967, %v1009
      %v1011 = vand.u32 %v1010, 4294901760
      %v1012 = vsub.f32 %v1010, %v1011
      %v1013 = vand.u32 %v1012, 4294901760
      %1014 = vmatpush.msra.mxu0 %v1013
      %v1015 = vand.u32 %v966, 4294901760
      %v1016 = vsub.f32 %v966, %v1015
      %v1017 = vand.u32 %v1016, 4294901760
      %v1018 = vsub.f32 %v1016, %v1017
      %v1019 = vand.u32 %v1018, 4294901760
      %1020 = vmatpush.msra.mxu0 %v1019
      %v1021 = vand.u32 %v965, 4294901760
      %v1022 = vsub.f32 %v965, %v1021
      %v1023 = vand.u32 %v1022, 4294901760
      %v1024 = vsub.f32 %v1022, %v1023
      %v1025 = vand.u32 %v1024, 4294901760
      %1026 = vmatpush.msra.mxu0 %v1025
      %v1027 = vand.u32 %v964, 4294901760
      %v1028 = vsub.f32 %v964, %v1027
      %v1029 = vand.u32 %v1028, 4294901760
      %v1030 = vsub.f32 %v1028, %v1029
      %v1031 = vand.u32 %v1030, 4294901760
      %1032 = vmatpush.msra.mxu0 %v1031
      %v1033 = vand.u32 %v963, 4294901760
      %v1034 = vsub.f32 %v963, %v1033
      %v1035 = vand.u32 %v1034, 4294901760
      %v1036 = vsub.f32 %v1034, %v1035
      %v1037 = vand.u32 %v1036, 4294901760
      %1038 = vmatpush.msra.mxu0 %v1037
      %v1039 = vand.u32 %v962, 4294901760
      %v1040 = vsub.f32 %v962, %v1039
      %v1041 = vand.u32 %v1040, 4294901760
      %v1042 = vsub.f32 %v1040, %v1041
      %v1043 = vand.u32 %v1042, 4294901760
      %1044 = vmatpush.msra.mxu0 %v1043
      %v1045 = vand.u32 %v961, 4294901760
      %v1046 = vsub.f32 %v961, %v1045
      %v1047 = vand.u32 %v1046, 4294901760
      %v1048 = vsub.f32 %v1046, %v1047
      %v1049 = vand.u32 %v1048, 4294901760
      %1050 = vmatpush.msra.mxu0 %v1049
      %v1051 = vand.u32 %v960, 4294901760
      %v1052 = vsub.f32 %v960, %v1051
      %v1053 = vand.u32 %v1052, 4294901760
      %v1054 = vsub.f32 %v1052, %v1053
      %v1055 = vand.u32 %v1054, 4294901760
      %1056 = vmatpush.msra.mxu0 %v1055
      %v1057 = vand.u32 %v959, 4294901760
      %v1058 = vsub.f32 %v959, %v1057
      %v1059 = vand.u32 %v1058, 4294901760
      %v1060 = vsub.f32 %v1058, %v1059
      %v1061 = vand.u32 %v1060, 4294901760
      %1062 = vmatpush.msra.mxu0 %v1061
      %v1063 = vand.u32 %v958, 4294901760
      %v1064 = vsub.f32 %v958, %v1063
      %v1065 = vand.u32 %v1064, 4294901760
      %v1066 = vsub.f32 %v1064, %v1065
      %v1067 = vand.u32 %v1066, 4294901760
      %1068 = vmatpush.msra.mxu0 %v1067
      %v1069 = vand.u32 %v957, 4294901760
      %v1070 = vsub.f32 %v957, %v1069
      %v1071 = vand.u32 %v1070, 4294901760
      %v1072 = vsub.f32 %v1070, %v1071
      %v1073 = vand.u32 %v1072, 4294901760
      %1074 = vmatpush.msra.mxu0 %v1073
      %v1075 = vand.u32 %v956, 4294901760
      %v1076 = vsub.f32 %v956, %v1075
      %v1077 = vand.u32 %v1076, 4294901760
      %v1078 = vsub.f32 %v1076, %v1077
      %v1079 = vand.u32 %v1078, 4294901760
      %1080 = vmatpush.msra.mxu0 %v1079
      %v1081 = vand.u32 %v955, 4294901760
      %v1082 = vsub.f32 %v955, %v1081
      %v1083 = vand.u32 %v1082, 4294901760
      %v1084 = vsub.f32 %v1082, %v1083
      %v1085 = vand.u32 %v1084, 4294901760
      %1086 = vmatpush.msra.mxu0 %v1085
      %v1087 = vand.u32 %v954, 4294901760
      %v1088 = vsub.f32 %v954, %v1087
      %v1089 = vand.u32 %v1088, 4294901760
      %v1090 = vsub.f32 %v1088, %v1089
      %v1091 = vand.u32 %v1090, 4294901760
      %1092 = vmatpush.msra.mxu0 %v1091
      %v1093 = vand.u32 %v953, 4294901760
      %v1094 = vsub.f32 %v953, %v1093
      %v1095 = vand.u32 %v1094, 4294901760
      %v1096 = vsub.f32 %v1094, %v1095
      %v1097 = vand.u32 %v1096, 4294901760
      %1098 = vmatpush.msra.mxu0 %v1097
      %v1099 = vand.u32 %v952, 4294901760
      %v1100 = vsub.f32 %v952, %v1099
      %v1101 = vand.u32 %v1100, 4294901760
      %v1102 = vsub.f32 %v1100, %v1101
      %v1103 = vand.u32 %v1102, 4294901760
      %1104 = vmatpush.msra.mxu0 %v1103
      %v1105 = vand.u32 %v951, 4294901760
      %1106 = vmatmul.f32.gmra.mxu0 %v1105
      %v1107 = vpop.f32.mrf.mxu0
      %v1108 = vadd.f32 %v1007, %v1107
      %1109 = vdwg.mxu0
      %v1110 = vand.u32 %v967, 4294901760
      %v1111 = vsub.f32 %v967, %v1110
      %1112 = vmatpush.msra.mxu0 %v1111
      %v1113 = vand.u32 %v966, 4294901760
      %v1114 = vsub.f32 %v966, %v1113
      %1115 = vmatpush.msra.mxu0 %v1114
      %v1116 = vand.u32 %v965, 4294901760
      %v1117 = vsub.f32 %v965, %v1116
      %1118 = vmatpush.msra.mxu0 %v1117
      %v1119 = vand.u32 %v964, 4294901760
      %v1120 = vsub.f32 %v964, %v1119
      %1121 = vmatpush.msra.mxu0 %v1120
      %v1122 = vand.u32 %v963, 4294901760
      %v1123 = vsub.f32 %v963, %v1122
      %1124 = vmatpush.msra.mxu0 %v1123
      %v1125 = vand.u32 %v962, 4294901760
      %v1126 = vsub.f32 %v962, %v1125
      %1127 = vmatpush.msra.mxu0 %v1126
      %v1128 = vand.u32 %v961, 4294901760
      %v1129 = vsub.f32 %v961, %v1128
      %1130 = vmatpush.msra.mxu0 %v1129
      %v1131 = vand.u32 %v960, 4294901760
      %v1132 = vsub.f32 %v960, %v1131
      %1133 = vmatpush.msra.mxu0 %v1132
      %v1134 = vand.u32 %v959, 4294901760
      %v1135 = vsub.f32 %v959, %v1134
      %1136 = vmatpush.msra.mxu0 %v1135
      %v1137 = vand.u32 %v958, 4294901760
      %v1138 = vsub.f32 %v958, %v1137
      %1139 = vmatpush.msra.mxu0 %v1138
      %v1140 = vand.u32 %v957, 4294901760
      %v1141 = vsub.f32 %v957, %v1140
      %1142 = vmatpush.msra.mxu0 %v1141
      %v1143 = vand.u32 %v956, 4294901760
      %v1144 = vsub.f32 %v956, %v1143
      %1145 = vmatpush.msra.mxu0 %v1144
      %v1146 = vand.u32 %v955, 4294901760
      %v1147 = vsub.f32 %v955, %v1146
      %1148 = vmatpush.msra.mxu0 %v1147
      %v1149 = vand.u32 %v954, 4294901760
      %v1150 = vsub.f32 %v954, %v1149
      %1151 = vmatpush.msra.mxu0 %v1150
      %v1152 = vand.u32 %v953, 4294901760
      %v1153 = vsub.f32 %v953, %v1152
      %1154 = vmatpush.msra.mxu0 %v1153
      %v1155 = vand.u32 %v952, 4294901760
      %v1156 = vsub.f32 %v952, %v1155
      %1157 = vmatpush.msra.mxu0 %v1156
      %v1158 = vand.u32 %v951, 4294901760
      %v1159 = vsub.f32 %v951, %v1158
      %1160 = vmatmul.f32.gmra.mxu0 %v1159
      %v1161 = vpop.f32.mrf.mxu0
      %v1162 = vadd.f32 %v1108, %v1161
      %1163 = vdwg.mxu0
      %v1164 = vand.u32 %v967, 4294901760
      %1165 = vmatpush.msra.mxu0 %v1164
      %v1166 = vand.u32 %v966, 4294901760
      %1167 = vmatpush.msra.mxu0 %v1166
      %v1168 = vand.u32 %v965, 4294901760
      %1169 = vmatpush.msra.mxu0 %v1168
      %v1170 = vand.u32 %v964, 4294901760
      %1171 = vmatpush.msra.mxu0 %v1170
      %v1172 = vand.u32 %v963, 4294901760
      %1173 = vmatpush.msra.mxu0 %v1172
      %v1174 = vand.u32 %v962, 4294901760
      %1175 = vmatpush.msra.mxu0 %v1174
      %v1176 = vand.u32 %v961, 4294901760
      %1177 = vmatpush.msra.mxu0 %v1176
      %v1178 = vand.u32 %v960, 4294901760
      %1179 = vmatpush.msra.mxu0 %v1178
      %v1180 = vand.u32 %v959, 4294901760
      %1181 = vmatpush.msra.mxu0 %v1180
      %v1182 = vand.u32 %v958, 4294901760
      %1183 = vmatpush.msra.mxu0 %v1182
      %v1184 = vand.u32 %v957, 4294901760
      %1185 = vmatpush.msra.mxu0 %v1184
      %v1186 = vand.u32 %v956, 4294901760
      %1187 = vmatpush.msra.mxu0 %v1186
      %v1188 = vand.u32 %v955, 4294901760
      %1189 = vmatpush.msra.mxu0 %v1188
      %v1190 = vand.u32 %v954, 4294901760
      %1191 = vmatpush.msra.mxu0 %v1190
      %v1192 = vand.u32 %v953, 4294901760
      %1193 = vmatpush.msra.mxu0 %v1192
      %v1194 = vand.u32 %v952, 4294901760
      %1195 = vmatpush.msra.mxu0 %v1194
      %v1196 = vand.u32 %v951, 4294901760
      %v1197 = vsub.f32 %v951, %v1196
      %v1198 = vand.u32 %v1197, 4294901760
      %1199 = vmatmul.f32.gmra.mxu0 %v1198
      %v1200 = vpop.f32.mrf.mxu0
      %v1201 = vadd.f32 %v1162, %v1200
      %1202 = vdwg.mxu0
      %v1203 = vand.u32 %v967, 4294901760
      %v1204 = vsub.f32 %v967, %v1203
      %v1205 = vand.u32 %v1204, 4294901760
      %1206 = vmatpush.msra.mxu0 %v1205
      %v1207 = vand.u32 %v966, 4294901760
      %v1208 = vsub.f32 %v966, %v1207
      %v1209 = vand.u32 %v1208, 4294901760
      %1210 = vmatpush.msra.mxu0 %v1209
      %v1211 = vand.u32 %v965, 4294901760
      %v1212 = vsub.f32 %v965, %v1211
      %v1213 = vand.u32 %v1212, 4294901760
      %1214 = vmatpush.msra.mxu0 %v1213
      %v1215 = vand.u32 %v964, 4294901760
      %v1216 = vsub.f32 %v964, %v1215
      %v1217 = vand.u32 %v1216, 4294901760
      %1218 = vmatpush.msra.mxu0 %v1217
      %v1219 = vand.u32 %v963, 4294901760
      %v1220 = vsub.f32 %v963, %v1219
      %v1221 = vand.u32 %v1220, 4294901760
      %1222 = vmatpush.msra.mxu0 %v1221
      %v1223 = vand.u32 %v962, 4294901760
      %v1224 = vsub.f32 %v962, %v1223
      %v1225 = vand.u32 %v1224, 4294901760
      %1226 = vmatpush.msra.mxu0 %v1225
      %v1227 = vand.u32 %v961, 4294901760
      %v1228 = vsub.f32 %v961, %v1227
      %v1229 = vand.u32 %v1228, 4294901760
      %1230 = vmatpush.msra.mxu0 %v1229
      %v1231 = vand.u32 %v960, 4294901760
      %v1232 = vsub.f32 %v960, %v1231
      %v1233 = vand.u32 %v1232, 4294901760
      %1234 = vmatpush.msra.mxu0 %v1233
      %v1235 = vand.u32 %v959, 4294901760
      %v1236 = vsub.f32 %v959, %v1235
      %v1237 = vand.u32 %v1236, 4294901760
      %1238 = vmatpush.msra.mxu0 %v1237
      %v1239 = vand.u32 %v958, 4294901760
      %v1240 = vsub.f32 %v958, %v1239
      %v1241 = vand.u32 %v1240, 4294901760
      %1242 = vmatpush.msra.mxu0 %v1241
      %v1243 = vand.u32 %v957, 4294901760
      %v1244 = vsub.f32 %v957, %v1243
      %v1245 = vand.u32 %v1244, 4294901760
      %1246 = vmatpush.msra.mxu0 %v1245
      %v1247 = vand.u32 %v956, 4294901760
      %v1248 = vsub.f32 %v956, %v1247
      %v1249 = vand.u32 %v1248, 4294901760
      %1250 = vmatpush.msra.mxu0 %v1249
      %v1251 = vand.u32 %v955, 4294901760
      %v1252 = vsub.f32 %v955, %v1251
      %v1253 = vand.u32 %v1252, 4294901760
      %1254 = vmatpush.msra.mxu0 %v1253
      %v1255 = vand.u32 %v954, 4294901760
      %v1256 = vsub.f32 %v954, %v1255
      %v1257 = vand.u32 %v1256, 4294901760
      %1258 = vmatpush.msra.mxu0 %v1257
      %v1259 = vand.u32 %v953, 4294901760
      %v1260 = vsub.f32 %v953, %v1259
      %v1261 = vand.u32 %v1260, 4294901760
      %1262 = vmatpush.msra.mxu0 %v1261
      %v1263 = vand.u32 %v952, 4294901760
      %v1264 = vsub.f32 %v952, %v1263
      %v1265 = vand.u32 %v1264, 4294901760
      %1266 = vmatpush.msra.mxu0 %v1265
      %v1267 = vand.u32 %v951, 4294901760
      %1268 = vmatmul.f32.gmra.mxu0 %v1267
      %v1269 = vpop.f32.mrf.mxu0
      %v1270 = vadd.f32 %v1201, %v1269
      %1271 = vdwg.mxu0
      %v1272 = vand.u32 %v967, 4294901760
      %1273 = vmatpush.msra.mxu0 %v1272
      %v1274 = vand.u32 %v966, 4294901760
      %1275 = vmatpush.msra.mxu0 %v1274
      %v1276 = vand.u32 %v965, 4294901760
      %1277 = vmatpush.msra.mxu0 %v1276
      %v1278 = vand.u32 %v964, 4294901760
      %1279 = vmatpush.msra.mxu0 %v1278
      %v1280 = vand.u32 %v963, 4294901760
      %1281 = vmatpush.msra.mxu0 %v1280
      %v1282 = vand.u32 %v962, 4294901760
      %1283 = vmatpush.msra.mxu0 %v1282
      %v1284 = vand.u32 %v961, 4294901760
      %1285 = vmatpush.msra.mxu0 %v1284
      %v1286 = vand.u32 %v960, 4294901760
      %1287 = vmatpush.msra.mxu0 %v1286
      %v1288 = vand.u32 %v959, 4294901760
      %1289 = vmatpush.msra.mxu0 %v1288
      %v1290 = vand.u32 %v958, 4294901760
      %1291 = vmatpush.msra.mxu0 %v1290
      %v1292 = vand.u32 %v957, 4294901760
      %1293 = vmatpush.msra.mxu0 %v1292
      %v1294 = vand.u32 %v956, 4294901760
      %1295 = vmatpush.msra.mxu0 %v1294
      %v1296 = vand.u32 %v955, 4294901760
      %1297 = vmatpush.msra.mxu0 %v1296
      %v1298 = vand.u32 %v954, 4294901760
      %1299 = vmatpush.msra.mxu0 %v1298
      %v1300 = vand.u32 %v953, 4294901760
      %1301 = vmatpush.msra.mxu0 %v1300
      %v1302 = vand.u32 %v952, 4294901760
      %1303 = vmatpush.msra.mxu0 %v1302
      %v1304 = vand.u32 %v951, 4294901760
      %1305 = vmatmul.f32.gmra.mxu0 %v1304
      %v1306 = vpop.f32.mrf.mxu0
      %v1307 = vadd.f32 %v1270, %v1306
      %1308 = vdwg.mxu0
      %v1309 = vadd.f32 %v950, %v1307
      %1310 = vst [vmem:[#allocation2] sm:$0x3f] %v1309
      %v1311 = vld [vmem:[#allocation2 + $0x6] sm:$0xff]
      %v1312 = vld [vmem:[#allocation2 + $0xe] sm:$0x3]
      %v1313 = vld [vmem:[%s508] sm:$0xff]
      %v1314 = vld [vmem:[%s508 + $0x8] sm:$0x3]
      %v1315 = vld [vmem:[%s521] sm:$0xff]
      %v1316 = vld [vmem:[%s521 + $0x8] sm:$0xff]
      %v1317 = vld [vmem:[%s521 + $0x10] sm:$0xff]
      %v1318 = vld [vmem:[%s521 + $0x18] sm:$0xff]
      %v1319 = vld [vmem:[%s521 + $0x20] sm:$0xff]
      %v1320 = vld [vmem:[%s521 + $0x28] sm:$0xff]
      %v1321 = vld [vmem:[%s521 + $0x30] sm:$0xff]
      %v1322 = vld [vmem:[%s521 + $0x38] sm:$0xff]
      %v1323 = vld [vmem:[%s521 + $0x40] sm:$0xff]
      %v1324 = vld [vmem:[%s521 + $0x48] sm:$0xff]
      %v1325 = vld [vmem:[%s521 + $0x50] sm:$0xff]
      %v1326 = vld [vmem:[%s521 + $0x58] sm:$0xff]
      %v1327 = vld [vmem:[%s521 + $0x60] sm:$0xff]
      %v1328 = vld [vmem:[%s521 + $0x68] sm:$0xff]
      %v1329 = vld [vmem:[%s521 + $0x70] sm:$0xff]
      %v1330 = vld [vmem:[%s521 + $0x78] sm:$0xff]
      %v1331 = vand.u32 %v1330, 4294901760
      %1332 = vmatpush.msra.mxu0 %v1331
      %v1333 = vand.u32 %v1329, 4294901760
      %1334 = vmatpush.msra.mxu0 %v1333
      %v1335 = vand.u32 %v1328, 4294901760
      %1336 = vmatpush.msra.mxu0 %v1335
      %v1337 = vand.u32 %v1327, 4294901760
      %1338 = vmatpush.msra.mxu0 %v1337
      %v1339 = vand.u32 %v1326, 4294901760
      %1340 = vmatpush.msra.mxu0 %v1339
      %v1341 = vand.u32 %v1325, 4294901760
      %1342 = vmatpush.msra.mxu0 %v1341
      %v1343 = vand.u32 %v1324, 4294901760
      %1344 = vmatpush.msra.mxu0 %v1343
      %v1345 = vand.u32 %v1323, 4294901760
      %1346 = vmatpush.msra.mxu0 %v1345
      %v1347 = vand.u32 %v1322, 4294901760
      %1348 = vmatpush.msra.mxu0 %v1347
      %v1349 = vand.u32 %v1321, 4294901760
      %1350 = vmatpush.msra.mxu0 %v1349
      %v1351 = vand.u32 %v1320, 4294901760
      %1352 = vmatpush.msra.mxu0 %v1351
      %v1353 = vand.u32 %v1319, 4294901760
      %1354 = vmatpush.msra.mxu0 %v1353
      %v1355 = vand.u32 %v1318, 4294901760
      %1356 = vmatpush.msra.mxu0 %v1355
      %v1357 = vand.u32 %v1317, 4294901760
      %1358 = vmatpush.msra.mxu0 %v1357
      %v1359 = vand.u32 %v1316, 4294901760
      %1360 = vmatpush.msra.mxu0 %v1359
      %v1361 = vand.u32 %v1315, 4294901760
      %1362 = vmatpush.msra.mxu0 %v1361
      %v1363 = vand.u32 %v1313, 4294901760
      %v1364 = vsub.f32 %v1313, %v1363
      %v1365 = vand.u32 %v1364, 4294901760
      %v1366 = vsub.f32 %v1364, %v1365
      %v1367 = vand.u32 %v1366, 4294901760
      %1368 = vmatmul.f32.gmra.mxu0 %v1367
      %v1369 = vpop.f32.mrf.mxu0
      %v1370 = vadd.f32 0.0, %v1369
      %v1371 = vand.u32 %v1314, 4294901760
      %v1372 = vsub.f32 %v1314, %v1371
      %v1373 = vand.u32 %v1372, 4294901760
      %v1374 = vsub.f32 %v1372, %v1373
      %v1375 = vand.u32 %v1374, 4294901760
      %1376 = vmatmul.f32.gmra.mxu0 %v1375
      %v1377 = vpop.f32.mrf.mxu0
      %v1378 = vadd.f32 0.0, %v1377
      %1379 = vdwg.mxu0
      %v1380 = vand.u32 %v1330, 4294901760
      %v1381 = vsub.f32 %v1330, %v1380
      %v1382 = vand.u32 %v1381, 4294901760
      %v1383 = vsub.f32 %v1381, %v1382
      %v1384 = vand.u32 %v1383, 4294901760
      %1385 = vmatpush.msra.mxu0 %v1384
      %v1386 = vand.u32 %v1329, 4294901760
      %v1387 = vsub.f32 %v1329, %v1386
      %v1388 = vand.u32 %v1387, 4294901760
      %v1389 = vsub.f32 %v1387, %v1388
      %v1390 = vand.u32 %v1389, 4294901760
      %1391 = vmatpush.msra.mxu0 %v1390
      %v1392 = vand.u32 %v1328, 4294901760
      %v1393 = vsub.f32 %v1328, %v1392
      %v1394 = vand.u32 %v1393, 4294901760
      %v1395 = vsub.f32 %v1393, %v1394
      %v1396 = vand.u32 %v1395, 4294901760
      %1397 = vmatpush.msra.mxu0 %v1396
      %v1398 = vand.u32 %v1327, 4294901760
      %v1399 = vsub.f32 %v1327, %v1398
      %v1400 = vand.u32 %v1399, 4294901760
      %v1401 = vsub.f32 %v1399, %v1400
      %v1402 = vand.u32 %v1401, 4294901760
      %1403 = vmatpush.msra.mxu0 %v1402
      %v1404 = vand.u32 %v1326, 4294901760
      %v1405 = vsub.f32 %v1326, %v1404
      %v1406 = vand.u32 %v1405, 4294901760
      %v1407 = vsub.f32 %v1405, %v1406
      %v1408 = vand.u32 %v1407, 4294901760
      %1409 = vmatpush.msra.mxu0 %v1408
      %v1410 = vand.u32 %v1325, 4294901760
      %v1411 = vsub.f32 %v1325, %v1410
      %v1412 = vand.u32 %v1411, 4294901760
      %v1413 = vsub.f32 %v1411, %v1412
      %v1414 = vand.u32 %v1413, 4294901760
      %1415 = vmatpush.msra.mxu0 %v1414
      %v1416 = vand.u32 %v1324, 4294901760
      %v1417 = vsub.f32 %v1324, %v1416
      %v1418 = vand.u32 %v1417, 4294901760
      %v1419 = vsub.f32 %v1417, %v1418
      %v1420 = vand.u32 %v1419, 4294901760
      %1421 = vmatpush.msra.mxu0 %v1420
      %v1422 = vand.u32 %v1323, 4294901760
      %v1423 = vsub.f32 %v1323, %v1422
      %v1424 = vand.u32 %v1423, 4294901760
      %v1425 = vsub.f32 %v1423, %v1424
      %v1426 = vand.u32 %v1425, 4294901760
      %1427 = vmatpush.msra.mxu0 %v1426
      %v1428 = vand.u32 %v1322, 4294901760
      %v1429 = vsub.f32 %v1322, %v1428
      %v1430 = vand.u32 %v1429, 4294901760
      %v1431 = vsub.f32 %v1429, %v1430
      %v1432 = vand.u32 %v1431, 4294901760
      %1433 = vmatpush.msra.mxu0 %v1432
      %v1434 = vand.u32 %v1321, 4294901760
      %v1435 = vsub.f32 %v1321, %v1434
      %v1436 = vand.u32 %v1435, 4294901760
      %v1437 = vsub.f32 %v1435, %v1436
      %v1438 = vand.u32 %v1437, 4294901760
      %1439 = vmatpush.msra.mxu0 %v1438
      %v1440 = vand.u32 %v1320, 4294901760
      %v1441 = vsub.f32 %v1320, %v1440
      %v1442 = vand.u32 %v1441, 4294901760
      %v1443 = vsub.f32 %v1441, %v1442
      %v1444 = vand.u32 %v1443, 4294901760
      %1445 = vmatpush.msra.mxu0 %v1444
      %v1446 = vand.u32 %v1319, 4294901760
      %v1447 = vsub.f32 %v1319, %v1446
      %v1448 = vand.u32 %v1447, 4294901760
      %v1449 = vsub.f32 %v1447, %v1448
      %v1450 = vand.u32 %v1449, 4294901760
      %1451 = vmatpush.msra.mxu0 %v1450
      %v1452 = vand.u32 %v1318, 4294901760
      %v1453 = vsub.f32 %v1318, %v1452
      %v1454 = vand.u32 %v1453, 4294901760
      %v1455 = vsub.f32 %v1453, %v1454
      %v1456 = vand.u32 %v1455, 4294901760
      %1457 = vmatpush.msra.mxu0 %v1456
      %v1458 = vand.u32 %v1317, 4294901760
      %v1459 = vsub.f32 %v1317, %v1458
      %v1460 = vand.u32 %v1459, 4294901760
      %v1461 = vsub.f32 %v1459, %v1460
      %v1462 = vand.u32 %v1461, 4294901760
      %1463 = vmatpush.msra.mxu0 %v1462
      %v1464 = vand.u32 %v1316, 4294901760
      %v1465 = vsub.f32 %v1316, %v1464
      %v1466 = vand.u32 %v1465, 4294901760
      %v1467 = vsub.f32 %v1465, %v1466
      %v1468 = vand.u32 %v1467, 4294901760
      %1469 = vmatpush.msra.mxu0 %v1468
      %v1470 = vand.u32 %v1315, 4294901760
      %v1471 = vsub.f32 %v1315, %v1470
      %v1472 = vand.u32 %v1471, 4294901760
      %v1473 = vsub.f32 %v1471, %v1472
      %v1474 = vand.u32 %v1473, 4294901760
      %1475 = vmatpush.msra.mxu0 %v1474
      %v1476 = vand.u32 %v1313, 4294901760
      %1477 = vmatmul.f32.gmra.mxu0 %v1476
      %v1478 = vpop.f32.mrf.mxu0
      %v1479 = vadd.f32 %v1370, %v1478
      %v1480 = vand.u32 %v1314, 4294901760
      %1481 = vmatmul.f32.gmra.mxu0 %v1480
      %v1482 = vpop.f32.mrf.mxu0
      %v1483 = vadd.f32 %v1378, %v1482
      %1484 = vdwg.mxu0
      %v1485 = vand.u32 %v1330, 4294901760
      %v1486 = vsub.f32 %v1330, %v1485
      %1487 = vmatpush.msra.mxu0 %v1486
      %v1488 = vand.u32 %v1329, 4294901760
      %v1489 = vsub.f32 %v1329, %v1488
      %1490 = vmatpush.msra.mxu0 %v1489
      %v1491 = vand.u32 %v1328, 4294901760
      %v1492 = vsub.f32 %v1328, %v1491
      %1493 = vmatpush.msra.mxu0 %v1492
      %v1494 = vand.u32 %v1327, 4294901760
      %v1495 = vsub.f32 %v1327, %v1494
      %1496 = vmatpush.msra.mxu0 %v1495
      %v1497 = vand.u32 %v1326, 4294901760
      %v1498 = vsub.f32 %v1326, %v1497
      %1499 = vmatpush.msra.mxu0 %v1498
      %v1500 = vand.u32 %v1325, 4294901760
      %v1501 = vsub.f32 %v1325, %v1500
      %1502 = vmatpush.msra.mxu0 %v1501
      %v1503 = vand.u32 %v1324, 4294901760
      %v1504 = vsub.f32 %v1324, %v1503
      %1505 = vmatpush.msra.mxu0 %v1504
      %v1506 = vand.u32 %v1323, 4294901760
      %v1507 = vsub.f32 %v1323, %v1506
      %1508 = vmatpush.msra.mxu0 %v1507
      %v1509 = vand.u32 %v1322, 4294901760
      %v1510 = vsub.f32 %v1322, %v1509
      %1511 = vmatpush.msra.mxu0 %v1510
      %v1512 = vand.u32 %v1321, 4294901760
      %v1513 = vsub.f32 %v1321, %v1512
      %1514 = vmatpush.msra.mxu0 %v1513
      %v1515 = vand.u32 %v1320, 4294901760
      %v1516 = vsub.f32 %v1320, %v1515
      %1517 = vmatpush.msra.mxu0 %v1516
      %v1518 = vand.u32 %v1319, 4294901760
      %v1519 = vsub.f32 %v1319, %v1518
      %1520 = vmatpush.msra.mxu0 %v1519
      %v1521 = vand.u32 %v1318, 4294901760
      %v1522 = vsub.f32 %v1318, %v1521
      %1523 = vmatpush.msra.mxu0 %v1522
      %v1524 = vand.u32 %v1317, 4294901760
      %v1525 = vsub.f32 %v1317, %v1524
      %1526 = vmatpush.msra.mxu0 %v1525
      %v1527 = vand.u32 %v1316, 4294901760
      %v1528 = vsub.f32 %v1316, %v1527
      %1529 = vmatpush.msra.mxu0 %v1528
      %v1530 = vand.u32 %v1315, 4294901760
      %v1531 = vsub.f32 %v1315, %v1530
      %1532 = vmatpush.msra.mxu0 %v1531
      %v1533 = vand.u32 %v1313, 4294901760
      %v1534 = vsub.f32 %v1313, %v1533
      %1535 = vmatmul.f32.gmra.mxu0 %v1534
      %v1536 = vpop.f32.mrf.mxu0
      %v1537 = vadd.f32 %v1479, %v1536
      %v1538 = vand.u32 %v1314, 4294901760
      %v1539 = vsub.f32 %v1314, %v1538
      %1540 = vmatmul.f32.gmra.mxu0 %v1539
      %v1541 = vpop.f32.mrf.mxu0
      %v1542 = vadd.f32 %v1483, %v1541
      %1543 = vdwg.mxu0
      %v1544 = vand.u32 %v1330, 4294901760
      %1545 = vmatpush.msra.mxu0 %v1544
      %v1546 = vand.u32 %v1329, 4294901760
      %1547 = vmatpush.msra.mxu0 %v1546
      %v1548 = vand.u32 %v1328, 4294901760
      %1549 = vmatpush.msra.mxu0 %v1548
      %v1550 = vand.u32 %v1327, 4294901760
      %1551 = vmatpush.msra.mxu0 %v1550
      %v1552 = vand.u32 %v1326, 4294901760
      %1553 = vmatpush.msra.mxu0 %v1552
      %v1554 = vand.u32 %v1325, 4294901760
      %1555 = vmatpush.msra.mxu0 %v1554
      %v1556 = vand.u32 %v1324, 4294901760
      %1557 = vmatpush.msra.mxu0 %v1556
      %v1558 = vand.u32 %v1323, 4294901760
      %1559 = vmatpush.msra.mxu0 %v1558
      %v1560 = vand.u32 %v1322, 4294901760
      %1561 = vmatpush.msra.mxu0 %v1560
      %v1562 = vand.u32 %v1321, 4294901760
      %1563 = vmatpush.msra.mxu0 %v1562
      %v1564 = vand.u32 %v1320, 4294901760
      %1565 = vmatpush.msra.mxu0 %v1564
      %v1566 = vand.u32 %v1319, 4294901760
      %1567 = vmatpush.msra.mxu0 %v1566
      %v1568 = vand.u32 %v1318, 4294901760
      %1569 = vmatpush.msra.mxu0 %v1568
      %v1570 = vand.u32 %v1317, 4294901760
      %1571 = vmatpush.msra.mxu0 %v1570
      %v1572 = vand.u32 %v1316, 4294901760
      %1573 = vmatpush.msra.mxu0 %v1572
      %v1574 = vand.u32 %v1315, 4294901760
      %1575 = vmatpush.msra.mxu0 %v1574
      %v1576 = vand.u32 %v1313, 4294901760
      %v1577 = vsub.f32 %v1313, %v1576
      %v1578 = vand.u32 %v1577, 4294901760
      %1579 = vmatmul.f32.gmra.mxu0 %v1578
      %v1580 = vpop.f32.mrf.mxu0
      %v1581 = vadd.f32 %v1537, %v1580
      %v1582 = vand.u32 %v1314, 4294901760
      %v1583 = vsub.f32 %v1314, %v1582
      %v1584 = vand.u32 %v1583, 4294901760
      %1585 = vmatmul.f32.gmra.mxu0 %v1584
      %v1586 = vpop.f32.mrf.mxu0
      %v1587 = vadd.f32 %v1542, %v1586
      %1588 = vdwg.mxu0
      %v1589 = vand.u32 %v1330, 4294901760
      %v1590 = vsub.f32 %v1330, %v1589
      %v1591 = vand.u32 %v1590, 4294901760
      %1592 = vmatpush.msra.mxu0 %v1591
      %v1593 = vand.u32 %v1329, 4294901760
      %v1594 = vsub.f32 %v1329, %v1593
      %v1595 = vand.u32 %v1594, 4294901760
      %1596 = vmatpush.msra.mxu0 %v1595
      %v1597 = vand.u32 %v1328, 4294901760
      %v1598 = vsub.f32 %v1328, %v1597
      %v1599 = vand.u32 %v1598, 4294901760
      %1600 = vmatpush.msra.mxu0 %v1599
      %v1601 = vand.u32 %v1327, 4294901760
      %v1602 = vsub.f32 %v1327, %v1601
      %v1603 = vand.u32 %v1602, 4294901760
      %1604 = vmatpush.msra.mxu0 %v1603
      %v1605 = vand.u32 %v1326, 4294901760
      %v1606 = vsub.f32 %v1326, %v1605
      %v1607 = vand.u32 %v1606, 4294901760
      %1608 = vmatpush.msra.mxu0 %v1607
      %v1609 = vand.u32 %v1325, 4294901760
      %v1610 = vsub.f32 %v1325, %v1609
      %v1611 = vand.u32 %v1610, 4294901760
      %1612 = vmatpush.msra.mxu0 %v1611
      %v1613 = vand.u32 %v1324, 4294901760
      %v1614 = vsub.f32 %v1324, %v1613
      %v1615 = vand.u32 %v1614, 4294901760
      %1616 = vmatpush.msra.mxu0 %v1615
      %v1617 = vand.u32 %v1323, 4294901760
      %v1618 = vsub.f32 %v1323, %v1617
      %v1619 = vand.u32 %v1618, 4294901760
      %1620 = vmatpush.msra.mxu0 %v1619
      %v1621 = vand.u32 %v1322, 4294901760
      %v1622 = vsub.f32 %v1322, %v1621
      %v1623 = vand.u32 %v1622, 4294901760
      %1624 = vmatpush.msra.mxu0 %v1623
      %v1625 = vand.u32 %v1321, 4294901760
      %v1626 = vsub.f32 %v1321, %v1625
      %v1627 = vand.u32 %v1626, 4294901760
      %1628 = vmatpush.msra.mxu0 %v1627
      %v1629 = vand.u32 %v1320, 4294901760
      %v1630 = vsub.f32 %v1320, %v1629
      %v1631 = vand.u32 %v1630, 4294901760
      %1632 = vmatpush.msra.mxu0 %v1631
      %v1633 = vand.u32 %v1319, 4294901760
      %v1634 = vsub.f32 %v1319, %v1633
      %v1635 = vand.u32 %v1634, 4294901760
      %1636 = vmatpush.msra.mxu0 %v1635
      %v1637 = vand.u32 %v1318, 4294901760
      %v1638 = vsub.f32 %v1318, %v1637
      %v1639 = vand.u32 %v1638, 4294901760
      %1640 = vmatpush.msra.mxu0 %v1639
      %v1641 = vand.u32 %v1317, 4294901760
      %v1642 = vsub.f32 %v1317, %v1641
      %v1643 = vand.u32 %v1642, 4294901760
      %1644 = vmatpush.msra.mxu0 %v1643
      %v1645 = vand.u32 %v1316, 4294901760
      %v1646 = vsub.f32 %v1316, %v1645
      %v1647 = vand.u32 %v1646, 4294901760
      %1648 = vmatpush.msra.mxu0 %v1647
      %v1649 = vand.u32 %v1315, 4294901760
      %v1650 = vsub.f32 %v1315, %v1649
      %v1651 = vand.u32 %v1650, 4294901760
      %1652 = vmatpush.msra.mxu0 %v1651
      %v1653 = vand.u32 %v1313, 4294901760
      %1654 = vmatmul.f32.gmra.mxu0 %v1653
      %v1655 = vpop.f32.mrf.mxu0
      %v1656 = vadd.f32 %v1581, %v1655
      %v1657 = vand.u32 %v1314, 4294901760
      %1658 = vmatmul.f32.gmra.mxu0 %v1657
      %v1659 = vpop.f32.mrf.mxu0
      %v1660 = vadd.f32 %v1587, %v1659
      %1661 = vdwg.mxu0
      %v1662 = vand.u32 %v1330, 4294901760
      %1663 = vmatpush.msra.mxu0 %v1662
      %v1664 = vand.u32 %v1329, 4294901760
      %1665 = vmatpush.msra.mxu0 %v1664
      %v1666 = vand.u32 %v1328, 4294901760
      %1667 = vmatpush.msra.mxu0 %v1666
      %v1668 = vand.u32 %v1327, 4294901760
      %1669 = vmatpush.msra.mxu0 %v1668
      %v1670 = vand.u32 %v1326, 4294901760
      %1671 = vmatpush.msra.mxu0 %v1670
      %v1672 = vand.u32 %v1325, 4294901760
      %1673 = vmatpush.msra.mxu0 %v1672
      %v1674 = vand.u32 %v1324, 4294901760
      %1675 = vmatpush.msra.mxu0 %v1674
      %v1676 = vand.u32 %v1323, 4294901760
      %1677 = vmatpush.msra.mxu0 %v1676
      %v1678 = vand.u32 %v1322, 4294901760
      %1679 = vmatpush.msra.mxu0 %v1678
      %v1680 = vand.u32 %v1321, 4294901760
      %1681 = vmatpush.msra.mxu0 %v1680
      %v1682 = vand.u32 %v1320, 4294901760
      %1683 = vmatpush.msra.mxu0 %v1682
      %v1684 = vand.u32 %v1319, 4294901760
      %1685 = vmatpush.msra.mxu0 %v1684
      %v1686 = vand.u32 %v1318, 4294901760
      %1687 = vmatpush.msra.mxu0 %v1686
      %v1688 = vand.u32 %v1317, 4294901760
      %1689 = vmatpush.msra.mxu0 %v1688
      %v1690 = vand.u32 %v1316, 4294901760
      %1691 = vmatpush.msra.mxu0 %v1690
      %v1692 = vand.u32 %v1315, 4294901760
      %1693 = vmatpush.msra.mxu0 %v1692
      %v1694 = vand.u32 %v1313, 4294901760
      %1695 = vmatmul.f32.gmra.mxu0 %v1694
      %v1696 = vpop.f32.mrf.mxu0
      %v1697 = vadd.f32 %v1656, %v1696
      %v1698 = vand.u32 %v1314, 4294901760
      %1699 = vmatmul.f32.gmra.mxu0 %v1698
      %v1700 = vpop.f32.mrf.mxu0
      %v1701 = vadd.f32 %v1660, %v1700
      %1702 = vdwg.mxu0
      %v1703 = vadd.f32 %v1311, %v1697
      %v1704 = vadd.f32 %v1312, %v1701
      %1705 = vst [vmem:[#allocation2 + $0x6] sm:$0xff] %v1703
      %1706 = vst [vmem:[#allocation2 + $0xe] sm:$0x3] %v1704
      %v1707 = vld [vmem:[#allocation2] sm:$0xf]
      %v1708 = vld [vmem:[%s516 + $0x2] sm:$0xf]
      %s1709 = scalar_lea.vmem %s521, 128
      %v1710 = vld [vmem:[%s1709] sm:$0xff]
      %v1711 = vld [vmem:[%s1709 + $0x8] sm:$0xff]
      %v1712 = vld [vmem:[%s1709 + $0x10] sm:$0xff]
      %v1713 = vld [vmem:[%s1709 + $0x18] sm:$0xff]
      %v1714 = vld [vmem:[%s1709 + $0x20] sm:$0xff]
      %v1715 = vld [vmem:[%s1709 + $0x28] sm:$0xff]
      %v1716 = vld [vmem:[%s1709 + $0x30] sm:$0xff]
      %v1717 = vld [vmem:[%s1709 + $0x38] sm:$0xff]
      %v1718 = vld [vmem:[%s1709 + $0x40] sm:$0xff]
      %v1719 = vld [vmem:[%s1709 + $0x48] sm:$0xff]
      %v1720 = vld [vmem:[%s1709 + $0x50] sm:$0xff]
      %v1721 = vld [vmem:[%s1709 + $0x58] sm:$0xff]
      %v1722 = vld [vmem:[%s1709 + $0x60] sm:$0xff]
      %v1723 = vld [vmem:[%s1709 + $0x68] sm:$0xff]
      %v1724 = vld [vmem:[%s1709 + $0x70] sm:$0xff]
      %v1725 = vld [vmem:[%s1709 + $0x78] sm:$0xff]
      %v1726 = vand.u32 %v1725, 4294901760
      %1727 = vmatpush.msra.mxu0 %v1726
      %v1728 = vand.u32 %v1724, 4294901760
      %1729 = vmatpush.msra.mxu0 %v1728
      %v1730 = vand.u32 %v1723, 4294901760
      %1731 = vmatpush.msra.mxu0 %v1730
      %v1732 = vand.u32 %v1722, 4294901760
      %1733 = vmatpush.msra.mxu0 %v1732
      %v1734 = vand.u32 %v1721, 4294901760
      %1735 = vmatpush.msra.mxu0 %v1734
      %v1736 = vand.u32 %v1720, 4294901760
      %1737 = vmatpush.msra.mxu0 %v1736
      %v1738 = vand.u32 %v1719, 4294901760
      %1739 = vmatpush.msra.mxu0 %v1738
      %v1740 = vand.u32 %v1718, 4294901760
      %1741 = vmatpush.msra.mxu0 %v1740
      %v1742 = vand.u32 %v1717, 4294901760
      %1743 = vmatpush.msra.mxu0 %v1742
      %v1744 = vand.u32 %v1716, 4294901760
      %1745 = vmatpush.msra.mxu0 %v1744
      %v1746 = vand.u32 %v1715, 4294901760
      %1747 = vmatpush.msra.mxu0 %v1746
      %v1748 = vand.u32 %v1714, 4294901760
      %1749 = vmatpush.msra.mxu0 %v1748
      %v1750 = vand.u32 %v1713, 4294901760
      %1751 = vmatpush.msra.mxu0 %v1750
      %v1752 = vand.u32 %v1712, 4294901760
      %1753 = vmatpush.msra.mxu0 %v1752
      %v1754 = vand.u32 %v1711, 4294901760
      %1755 = vmatpush.msra.mxu0 %v1754
      %v1756 = vand.u32 %v1710, 4294901760
      %1757 = vmatpush.msra.mxu0 %v1756
      %v1758 = vand.u32 %v1708, 4294901760
      %v1759 = vsub.f32 %v1708, %v1758
      %v1760 = vand.u32 %v1759, 4294901760
      %v1761 = vsub.f32 %v1759, %v1760
      %v1762 = vand.u32 %v1761, 4294901760
      %1763 = vmatmul.f32.gmra.mxu0 %v1762
      %v1764 = vpop.f32.mrf.mxu0
      %v1765 = vadd.f32 0.0, %v1764
      %1766 = vdwg.mxu0
      %v1767 = vand.u32 %v1725, 4294901760
      %v1768 = vsub.f32 %v1725, %v1767
      %v1769 = vand.u32 %v1768, 4294901760
      %v1770 = vsub.f32 %v1768, %v1769
      %v1771 = vand.u32 %v1770, 4294901760
      %1772 = vmatpush.msra.mxu0 %v1771
      %v1773 = vand.u32 %v1724, 4294901760
      %v1774 = vsub.f32 %v1724, %v1773
      %v1775 = vand.u32 %v1774, 4294901760
      %v1776 = vsub.f32 %v1774, %v1775
      %v1777 = vand.u32 %v1776, 4294901760
      %1778 = vmatpush.msra.mxu0 %v1777
      %v1779 = vand.u32 %v1723, 4294901760
      %v1780 = vsub.f32 %v1723, %v1779
      %v1781 = vand.u32 %v1780, 4294901760
      %v1782 = vsub.f32 %v1780, %v1781
      %v1783 = vand.u32 %v1782, 4294901760
      %1784 = vmatpush.msra.mxu0 %v1783
      %v1785 = vand.u32 %v1722, 4294901760
      %v1786 = vsub.f32 %v1722, %v1785
      %v1787 = vand.u32 %v1786, 4294901760
      %v1788 = vsub.f32 %v1786, %v1787
      %v1789 = vand.u32 %v1788, 4294901760
      %1790 = vmatpush.msra.mxu0 %v1789
      %v1791 = vand.u32 %v1721, 4294901760
      %v1792 = vsub.f32 %v1721, %v1791
      %v1793 = vand.u32 %v1792, 4294901760
      %v1794 = vsub.f32 %v1792, %v1793
      %v1795 = vand.u32 %v1794, 4294901760
      %1796 = vmatpush.msra.mxu0 %v1795
      %v1797 = vand.u32 %v1720, 4294901760
      %v1798 = vsub.f32 %v1720, %v1797
      %v1799 = vand.u32 %v1798, 4294901760
      %v1800 = vsub.f32 %v1798, %v1799
      %v1801 = vand.u32 %v1800, 4294901760
      %1802 = vmatpush.msra.mxu0 %v1801
      %v1803 = vand.u32 %v1719, 4294901760
      %v1804 = vsub.f32 %v1719, %v1803
      %v1805 = vand.u32 %v1804, 4294901760
      %v1806 = vsub.f32 %v1804, %v1805
      %v1807 = vand.u32 %v1806, 4294901760
      %1808 = vmatpush.msra.mxu0 %v1807
      %v1809 = vand.u32 %v1718, 4294901760
      %v1810 = vsub.f32 %v1718, %v1809
      %v1811 = vand.u32 %v1810, 4294901760
      %v1812 = vsub.f32 %v1810, %v1811
      %v1813 = vand.u32 %v1812, 4294901760
      %1814 = vmatpush.msra.mxu0 %v1813
      %v1815 = vand.u32 %v1717, 4294901760
      %v1816 = vsub.f32 %v1717, %v1815
      %v1817 = vand.u32 %v1816, 4294901760
      %v1818 = vsub.f32 %v1816, %v1817
      %v1819 = vand.u32 %v1818, 4294901760
      %1820 = vmatpush.msra.mxu0 %v1819
      %v1821 = vand.u32 %v1716, 4294901760
      %v1822 = vsub.f32 %v1716, %v1821
      %v1823 = vand.u32 %v1822, 4294901760
      %v1824 = vsub.f32 %v1822, %v1823
      %v1825 = vand.u32 %v1824, 4294901760
      %1826 = vmatpush.msra.mxu0 %v1825
      %v1827 = vand.u32 %v1715, 4294901760
      %v1828 = vsub.f32 %v1715, %v1827
      %v1829 = vand.u32 %v1828, 4294901760
      %v1830 = vsub.f32 %v1828, %v1829
      %v1831 = vand.u32 %v1830, 4294901760
      %1832 = vmatpush.msra.mxu0 %v1831
      %v1833 = vand.u32 %v1714, 4294901760
      %v1834 = vsub.f32 %v1714, %v1833
      %v1835 = vand.u32 %v1834, 4294901760
      %v1836 = vsub.f32 %v1834, %v1835
      %v1837 = vand.u32 %v1836, 4294901760
      %1838 = vmatpush.msra.mxu0 %v1837
      %v1839 = vand.u32 %v1713, 4294901760
      %v1840 = vsub.f32 %v1713, %v1839
      %v1841 = vand.u32 %v1840, 4294901760
      %v1842 = vsub.f32 %v1840, %v1841
      %v1843 = vand.u32 %v1842, 4294901760
      %1844 = vmatpush.msra.mxu0 %v1843
      %v1845 = vand.u32 %v1712, 4294901760
      %v1846 = vsub.f32 %v1712, %v1845
      %v1847 = vand.u32 %v1846, 4294901760
      %v1848 = vsub.f32 %v1846, %v1847
      %v1849 = vand.u32 %v1848, 4294901760
      %1850 = vmatpush.msra.mxu0 %v1849
      %v1851 = vand.u32 %v1711, 4294901760
      %v1852 = vsub.f32 %v1711, %v1851
      %v1853 = vand.u32 %v1852, 4294901760
      %v1854 = vsub.f32 %v1852, %v1853
      %v1855 = vand.u32 %v1854, 4294901760
      %1856 = vmatpush.msra.mxu0 %v1855
      %v1857 = vand.u32 %v1710, 4294901760
      %v1858 = vsub.f32 %v1710, %v1857
      %v1859 = vand.u32 %v1858, 4294901760
      %v1860 = vsub.f32 %v1858, %v1859
      %v1861 = vand.u32 %v1860, 4294901760
      %1862 = vmatpush.msra.mxu0 %v1861
      %v1863 = vand.u32 %v1708, 4294901760
      %1864 = vmatmul.f32.gmra.mxu0 %v1863
      %v1865 = vpop.f32.mrf.mxu0
      %v1866 = vadd.f32 %v1765, %v1865
      %1867 = vdwg.mxu0
      %v1868 = vand.u32 %v1725, 4294901760
      %v1869 = vsub.f32 %v1725, %v1868
      %1870 = vmatpush.msra.mxu0 %v1869
      %v1871 = vand.u32 %v1724, 4294901760
      %v1872 = vsub.f32 %v1724, %v1871
      %1873 = vmatpush.msra.mxu0 %v1872
      %v1874 = vand.u32 %v1723, 4294901760
      %v1875 = vsub.f32 %v1723, %v1874
      %1876 = vmatpush.msra.mxu0 %v1875
      %v1877 = vand.u32 %v1722, 4294901760
      %v1878 = vsub.f32 %v1722, %v1877
      %1879 = vmatpush.msra.mxu0 %v1878
      %v1880 = vand.u32 %v1721, 4294901760
      %v1881 = vsub.f32 %v1721, %v1880
      %1882 = vmatpush.msra.mxu0 %v1881
      %v1883 = vand.u32 %v1720, 4294901760
      %v1884 = vsub.f32 %v1720, %v1883
      %1885 = vmatpush.msra.mxu0 %v1884
      %v1886 = vand.u32 %v1719, 4294901760
      %v1887 = vsub.f32 %v1719, %v1886
      %1888 = vmatpush.msra.mxu0 %v1887
      %v1889 = vand.u32 %v1718, 4294901760
      %v1890 = vsub.f32 %v1718, %v1889
      %1891 = vmatpush.msra.mxu0 %v1890
      %v1892 = vand.u32 %v1717, 4294901760
      %v1893 = vsub.f32 %v1717, %v1892
      %1894 = vmatpush.msra.mxu0 %v1893
      %v1895 = vand.u32 %v1716, 4294901760
      %v1896 = vsub.f32 %v1716, %v1895
      %1897 = vmatpush.msra.mxu0 %v1896
      %v1898 = vand.u32 %v1715, 4294901760
      %v1899 = vsub.f32 %v1715, %v1898
      %1900 = vmatpush.msra.mxu0 %v1899
      %v1901 = vand.u32 %v1714, 4294901760
      %v1902 = vsub.f32 %v1714, %v1901
      %1903 = vmatpush.msra.mxu0 %v1902
      %v1904 = vand.u32 %v1713, 4294901760
      %v1905 = vsub.f32 %v1713, %v1904
      %1906 = vmatpush.msra.mxu0 %v1905
      %v1907 = vand.u32 %v1712, 4294901760
      %v1908 = vsub.f32 %v1712, %v1907
      %1909 = vmatpush.msra.mxu0 %v1908
      %v1910 = vand.u32 %v1711, 4294901760
      %v1911 = vsub.f32 %v1711, %v1910
      %1912 = vmatpush.msra.mxu0 %v1911
      %v1913 = vand.u32 %v1710, 4294901760
      %v1914 = vsub.f32 %v1710, %v1913
      %1915 = vmatpush.msra.mxu0 %v1914
      %v1916 = vand.u32 %v1708, 4294901760
      %v1917 = vsub.f32 %v1708, %v1916
      %1918 = vmatmul.f32.gmra.mxu0 %v1917
      %v1919 = vpop.f32.mrf.mxu0
      %v1920 = vadd.f32 %v1866, %v1919
      %1921 = vdwg.mxu0
      %v1922 = vand.u32 %v1725, 4294901760
      %1923 = vmatpush.msra.mxu0 %v1922
      %v1924 = vand.u32 %v1724, 4294901760
      %1925 = vmatpush.msra.mxu0 %v1924
      %v1926 = vand.u32 %v1723, 4294901760
      %1927 = vmatpush.msra.mxu0 %v1926
      %v1928 = vand.u32 %v1722, 4294901760
      %1929 = vmatpush.msra.mxu0 %v1928
      %v1930 = vand.u32 %v1721, 4294901760
      %1931 = vmatpush.msra.mxu0 %v1930
      %v1932 = vand.u32 %v1720, 4294901760
      %1933 = vmatpush.msra.mxu0 %v1932
      %v1934 = vand.u32 %v1719, 4294901760
      %1935 = vmatpush.msra.mxu0 %v1934
      %v1936 = vand.u32 %v1718, 4294901760
      %1937 = vmatpush.msra.mxu0 %v1936
      %v1938 = vand.u32 %v1717, 4294901760
      %1939 = vmatpush.msra.mxu0 %v1938
      %v1940 = vand.u32 %v1716, 4294901760
      %1941 = vmatpush.msra.mxu0 %v1940
      %v1942 = vand.u32 %v1715, 4294901760
      %1943 = vmatpush.msra.mxu0 %v1942
      %v1944 = vand.u32 %v1714, 4294901760
      %1945 = vmatpush.msra.mxu0 %v1944
      %v1946 = vand.u32 %v1713, 4294901760
      %1947 = vmatpush.msra.mxu0 %v1946
      %v1948 = vand.u32 %v1712, 4294901760
      %1949 = vmatpush.msra.mxu0 %v1948
      %v1950 = vand.u32 %v1711, 4294901760
      %1951 = vmatpush.msra.mxu0 %v1950
      %v1952 = vand.u32 %v1710, 4294901760
      %1953 = vmatpush.msra.mxu0 %v1952
      %v1954 = vand.u32 %v1708, 4294901760
      %v1955 = vsub.f32 %v1708, %v1954
      %v1956 = vand.u32 %v1955, 4294901760
      %1957 = vmatmul.f32.gmra.mxu0 %v1956
      %v1958 = vpop.f32.mrf.mxu0
      %v1959 = vadd.f32 %v1920, %v1958
      %1960 = vdwg.mxu0
      %v1961 = vand.u32 %v1725, 4294901760
      %v1962 = vsub.f32 %v1725, %v1961
      %v1963 = vand.u32 %v1962, 4294901760
      %1964 = vmatpush.msra.mxu0 %v1963
      %v1965 = vand.u32 %v1724, 4294901760
      %v1966 = vsub.f32 %v1724, %v1965
      %v1967 = vand.u32 %v1966, 4294901760
      %1968 = vmatpush.msra.mxu0 %v1967
      %v1969 = vand.u32 %v1723, 4294901760
      %v1970 = vsub.f32 %v1723, %v1969
      %v1971 = vand.u32 %v1970, 4294901760
      %1972 = vmatpush.msra.mxu0 %v1971
      %v1973 = vand.u32 %v1722, 4294901760
      %v1974 = vsub.f32 %v1722, %v1973
      %v1975 = vand.u32 %v1974, 4294901760
      %1976 = vmatpush.msra.mxu0 %v1975
      %v1977 = vand.u32 %v1721, 4294901760
      %v1978 = vsub.f32 %v1721, %v1977
      %v1979 = vand.u32 %v1978, 4294901760
      %1980 = vmatpush.msra.mxu0 %v1979
      %v1981 = vand.u32 %v1720, 4294901760
      %v1982 = vsub.f32 %v1720, %v1981
      %v1983 = vand.u32 %v1982, 4294901760
      %1984 = vmatpush.msra.mxu0 %v1983
      %v1985 = vand.u32 %v1719, 4294901760
      %v1986 = vsub.f32 %v1719, %v1985
      %v1987 = vand.u32 %v1986, 4294901760
      %1988 = vmatpush.msra.mxu0 %v1987
      %v1989 = vand.u32 %v1718, 4294901760
      %v1990 = vsub.f32 %v1718, %v1989
      %v1991 = vand.u32 %v1990, 4294901760
      %1992 = vmatpush.msra.mxu0 %v1991
      %v1993 = vand.u32 %v1717, 4294901760
      %v1994 = vsub.f32 %v1717, %v1993
      %v1995 = vand.u32 %v1994, 4294901760
      %1996 = vmatpush.msra.mxu0 %v1995
      %v1997 = vand.u32 %v1716, 4294901760
      %v1998 = vsub.f32 %v1716, %v1997
      %v1999 = vand.u32 %v1998, 4294901760
      %2000 = vmatpush.msra.mxu0 %v1999
      %v2001 = vand.u32 %v1715, 4294901760
      %v2002 = vsub.f32 %v1715, %v2001
      %v2003 = vand.u32 %v2002, 4294901760
      %2004 = vmatpush.msra.mxu0 %v2003
      %v2005 = vand.u32 %v1714, 4294901760
      %v2006 = vsub.f32 %v1714, %v2005
      %v2007 = vand.u32 %v2006, 4294901760
      %2008 = vmatpush.msra.mxu0 %v2007
      %v2009 = vand.u32 %v1713, 4294901760
      %v2010 = vsub.f32 %v1713, %v2009
      %v2011 = vand.u32 %v2010, 4294901760
      %2012 = vmatpush.msra.mxu0 %v2011
      %v2013 = vand.u32 %v1712, 4294901760
      %v2014 = vsub.f32 %v1712, %v2013
      %v2015 = vand.u32 %v2014, 4294901760
      %2016 = vmatpush.msra.mxu0 %v2015
      %v2017 = vand.u32 %v1711, 4294901760
      %v2018 = vsub.f32 %v1711, %v2017
      %v2019 = vand.u32 %v2018, 4294901760
      %2020 = vmatpush.msra.mxu0 %v2019
      %v2021 = vand.u32 %v1710, 4294901760
      %v2022 = vsub.f32 %v1710, %v2021
      %v2023 = vand.u32 %v2022, 4294901760
      %2024 = vmatpush.msra.mxu0 %v2023
      %v2025 = vand.u32 %v1708, 4294901760
      %2026 = vmatmul.f32.gmra.mxu0 %v2025
      %v2027 = vpop.f32.mrf.mxu0
      %v2028 = vadd.f32 %v1959, %v2027
      %2029 = vdwg.mxu0
      %v2030 = vand.u32 %v1725, 4294901760
      %2031 = vmatpush.msra.mxu0 %v2030
      %v2032 = vand.u32 %v1724, 4294901760
      %2033 = vmatpush.msra.mxu0 %v2032
      %v2034 = vand.u32 %v1723, 4294901760
      %2035 = vmatpush.msra.mxu0 %v2034
      %v2036 = vand.u32 %v1722, 4294901760
      %2037 = vmatpush.msra.mxu0 %v2036
      %v2038 = vand.u32 %v1721, 4294901760
      %2039 = vmatpush.msra.mxu0 %v2038
      %v2040 = vand.u32 %v1720, 4294901760
      %2041 = vmatpush.msra.mxu0 %v2040
      %v2042 = vand.u32 %v1719, 4294901760
      %2043 = vmatpush.msra.mxu0 %v2042
      %v2044 = vand.u32 %v1718, 4294901760
      %2045 = vmatpush.msra.mxu0 %v2044
      %v2046 = vand.u32 %v1717, 4294901760
      %2047 = vmatpush.msra.mxu0 %v2046
      %v2048 = vand.u32 %v1716, 4294901760
      %2049 = vmatpush.msra.mxu0 %v2048
      %v2050 = vand.u32 %v1715, 4294901760
      %2051 = vmatpush.msra.mxu0 %v2050
      %v2052 = vand.u32 %v1714, 4294901760
      %2053 = vmatpush.msra.mxu0 %v2052
      %v2054 = vand.u32 %v1713, 4294901760
      %2055 = vmatpush.msra.mxu0 %v2054
      %v2056 = vand.u32 %v1712, 4294901760
      %2057 = vmatpush.msra.mxu0 %v2056
      %v2058 = vand.u32 %v1711, 4294901760
      %2059 = vmatpush.msra.mxu0 %v2058
      %v2060 = vand.u32 %v1710, 4294901760
      %2061 = vmatpush.msra.mxu0 %v2060
      %v2062 = vand.u32 %v1708, 4294901760
      %2063 = vmatmul.f32.gmra.mxu0 %v2062
      %v2064 = vpop.f32.mrf.mxu0
      %v2065 = vadd.f32 %v2028, %v2064
      %2066 = vdwg.mxu0
      %v2067 = vadd.f32 %v1707, %v2065
      %2068 = vst [vmem:[#allocation2] sm:$0xf] %v2067
      %v2069 = vld [vmem:[#allocation2 + $0x4] sm:$0xff]
      %v2070 = vld [vmem:[#allocation2 + $0xc] sm:$0xf]
      %v2071 = vld [vmem:[%s508] sm:$0xff]
      %v2072 = vld [vmem:[%s508 + $0x8] sm:$0xf]
      %v2073 = vld [vmem:[%s1709] sm:$0xff]
      %v2074 = vld [vmem:[%s1709 + $0x8] sm:$0xff]
      %v2075 = vld [vmem:[%s1709 + $0x10] sm:$0xff]
      %v2076 = vld [vmem:[%s1709 + $0x18] sm:$0xff]
      %v2077 = vld [vmem:[%s1709 + $0x20] sm:$0xff]
      %v2078 = vld [vmem:[%s1709 + $0x28] sm:$0xff]
      %v2079 = vld [vmem:[%s1709 + $0x30] sm:$0xff]
      %v2080 = vld [vmem:[%s1709 + $0x38] sm:$0xff]
      %v2081 = vld [vmem:[%s1709 + $0x40] sm:$0xff]
      %v2082 = vld [vmem:[%s1709 + $0x48] sm:$0xff]
      %v2083 = vld [vmem:[%s1709 + $0x50] sm:$0xff]
      %v2084 = vld [vmem:[%s1709 + $0x58] sm:$0xff]
      %v2085 = vld [vmem:[%s1709 + $0x60] sm:$0xff]
      %v2086 = vld [vmem:[%s1709 + $0x68] sm:$0xff]
      %v2087 = vld [vmem:[%s1709 + $0x70] sm:$0xff]
      %v2088 = vld [vmem:[%s1709 + $0x78] sm:$0xff]
      %v2089 = vand.u32 %v2088, 4294901760
      %2090 = vmatpush.msra.mxu0 %v2089
      %v2091 = vand.u32 %v2087, 4294901760
      %2092 = vmatpush.msra.mxu0 %v2091
      %v2093 = vand.u32 %v2086, 4294901760
      %2094 = vmatpush.msra.mxu0 %v2093
      %v2095 = vand.u32 %v2085, 4294901760
      %2096 = vmatpush.msra.mxu0 %v2095
      %v2097 = vand.u32 %v2084, 4294901760
      %2098 = vmatpush.msra.mxu0 %v2097
      %v2099 = vand.u32 %v2083, 4294901760
      %2100 = vmatpush.msra.mxu0 %v2099
      %v2101 = vand.u32 %v2082, 4294901760
      %2102 = vmatpush.msra.mxu0 %v2101
      %v2103 = vand.u32 %v2081, 4294901760
      %2104 = vmatpush.msra.mxu0 %v2103
      %v2105 = vand.u32 %v2080, 4294901760
      %2106 = vmatpush.msra.mxu0 %v2105
      %v2107 = vand.u32 %v2079, 4294901760
      %2108 = vmatpush.msra.mxu0 %v2107
      %v2109 = vand.u32 %v2078, 4294901760
      %2110 = vmatpush.msra.mxu0 %v2109
      %v2111 = vand.u32 %v2077, 4294901760
      %2112 = vmatpush.msra.mxu0 %v2111
      %v2113 = vand.u32 %v2076, 4294901760
      %2114 = vmatpush.msra.mxu0 %v2113
      %v2115 = vand.u32 %v2075, 4294901760
      %2116 = vmatpush.msra.mxu0 %v2115
      %v2117 = vand.u32 %v2074, 4294901760
      %2118 = vmatpush.msra.mxu0 %v2117
      %v2119 = vand.u32 %v2073, 4294901760
      %2120 = vmatpush.msra.mxu0 %v2119
      %v2121 = vand.u32 %v2071, 4294901760
      %v2122 = vsub.f32 %v2071, %v2121
      %v2123 = vand.u32 %v2122, 4294901760
      %v2124 = vsub.f32 %v2122, %v2123
      %v2125 = vand.u32 %v2124, 4294901760
      %2126 = vmatmul.f32.gmra.mxu0 %v2125
      %v2127 = vpop.f32.mrf.mxu0
      %v2128 = vadd.f32 0.0, %v2127
      %v2129 = vand.u32 %v2072, 4294901760
      %v2130 = vsub.f32 %v2072, %v2129
      %v2131 = vand.u32 %v2130, 4294901760
      %v2132 = vsub.f32 %v2130, %v2131
      %v2133 = vand.u32 %v2132, 4294901760
      %2134 = vmatmul.f32.gmra.mxu0 %v2133
      %v2135 = vpop.f32.mrf.mxu0
      %v2136 = vadd.f32 0.0, %v2135
      %2137 = vdwg.mxu0
      %v2138 = vand.u32 %v2088, 4294901760
      %v2139 = vsub.f32 %v2088, %v2138
      %v2140 = vand.u32 %v2139, 4294901760
      %v2141 = vsub.f32 %v2139, %v2140
      %v2142 = vand.u32 %v2141, 4294901760
      %2143 = vmatpush.msra.mxu0 %v2142
      %v2144 = vand.u32 %v2087, 4294901760
      %v2145 = vsub.f32 %v2087, %v2144
      %v2146 = vand.u32 %v2145, 4294901760
      %v2147 = vsub.f32 %v2145, %v2146
      %v2148 = vand.u32 %v2147, 4294901760
      %2149 = vmatpush.msra.mxu0 %v2148
      %v2150 = vand.u32 %v2086, 4294901760
      %v2151 = vsub.f32 %v2086, %v2150
      %v2152 = vand.u32 %v2151, 4294901760
      %v2153 = vsub.f32 %v2151, %v2152
      %v2154 = vand.u32 %v2153, 4294901760
      %2155 = vmatpush.msra.mxu0 %v2154
      %v2156 = vand.u32 %v2085, 4294901760
      %v2157 = vsub.f32 %v2085, %v2156
      %v2158 = vand.u32 %v2157, 4294901760
      %v2159 = vsub.f32 %v2157, %v2158
      %v2160 = vand.u32 %v2159, 4294901760
      %2161 = vmatpush.msra.mxu0 %v2160
      %v2162 = vand.u32 %v2084, 4294901760
      %v2163 = vsub.f32 %v2084, %v2162
      %v2164 = vand.u32 %v2163, 4294901760
      %v2165 = vsub.f32 %v2163, %v2164
      %v2166 = vand.u32 %v2165, 4294901760
      %2167 = vmatpush.msra.mxu0 %v2166
      %v2168 = vand.u32 %v2083, 4294901760
      %v2169 = vsub.f32 %v2083, %v2168
      %v2170 = vand.u32 %v2169, 4294901760
      %v2171 = vsub.f32 %v2169, %v2170
      %v2172 = vand.u32 %v2171, 4294901760
      %2173 = vmatpush.msra.mxu0 %v2172
      %v2174 = vand.u32 %v2082, 4294901760
      %v2175 = vsub.f32 %v2082, %v2174
      %v2176 = vand.u32 %v2175, 4294901760
      %v2177 = vsub.f32 %v2175, %v2176
      %v2178 = vand.u32 %v2177, 4294901760
      %2179 = vmatpush.msra.mxu0 %v2178
      %v2180 = vand.u32 %v2081, 4294901760
      %v2181 = vsub.f32 %v2081, %v2180
      %v2182 = vand.u32 %v2181, 4294901760
      %v2183 = vsub.f32 %v2181, %v2182
      %v2184 = vand.u32 %v2183, 4294901760
      %2185 = vmatpush.msra.mxu0 %v2184
      %v2186 = vand.u32 %v2080, 4294901760
      %v2187 = vsub.f32 %v2080, %v2186
      %v2188 = vand.u32 %v2187, 4294901760
      %v2189 = vsub.f32 %v2187, %v2188
      %v2190 = vand.u32 %v2189, 4294901760
      %2191 = vmatpush.msra.mxu0 %v2190
      %v2192 = vand.u32 %v2079, 4294901760
      %v2193 = vsub.f32 %v2079, %v2192
      %v2194 = vand.u32 %v2193, 4294901760
      %v2195 = vsub.f32 %v2193, %v2194
      %v2196 = vand.u32 %v2195, 4294901760
      %2197 = vmatpush.msra.mxu0 %v2196
      %v2198 = vand.u32 %v2078, 4294901760
      %v2199 = vsub.f32 %v2078, %v2198
      %v2200 = vand.u32 %v2199, 4294901760
      %v2201 = vsub.f32 %v2199, %v2200
      %v2202 = vand.u32 %v2201, 4294901760
      %2203 = vmatpush.msra.mxu0 %v2202
      %v2204 = vand.u32 %v2077, 4294901760
      %v2205 = vsub.f32 %v2077, %v2204
      %v2206 = vand.u32 %v2205, 4294901760
      %v2207 = vsub.f32 %v2205, %v2206
      %v2208 = vand.u32 %v2207, 4294901760
      %2209 = vmatpush.msra.mxu0 %v2208
      %v2210 = vand.u32 %v2076, 4294901760
      %v2211 = vsub.f32 %v2076, %v2210
      %v2212 = vand.u32 %v2211, 4294901760
      %v2213 = vsub.f32 %v2211, %v2212
      %v2214 = vand.u32 %v2213, 4294901760
      %2215 = vmatpush.msra.mxu0 %v2214
      %v2216 = vand.u32 %v2075, 4294901760
      %v2217 = vsub.f32 %v2075, %v2216
      %v2218 = vand.u32 %v2217, 4294901760
      %v2219 = vsub.f32 %v2217, %v2218
      %v2220 = vand.u32 %v2219, 4294901760
      %2221 = vmatpush.msra.mxu0 %v2220
      %v2222 = vand.u32 %v2074, 4294901760
      %v2223 = vsub.f32 %v2074, %v2222
      %v2224 = vand.u32 %v2223, 4294901760
      %v2225 = vsub.f32 %v2223, %v2224
      %v2226 = vand.u32 %v2225, 4294901760
      %2227 = vmatpush.msra.mxu0 %v2226
      %v2228 = vand.u32 %v2073, 4294901760
      %v2229 = vsub.f32 %v2073, %v2228
      %v2230 = vand.u32 %v2229, 4294901760
      %v2231 = vsub.f32 %v2229, %v2230
      %v2232 = vand.u32 %v2231, 4294901760
      %2233 = vmatpush.msra.mxu0 %v2232
      %v2234 = vand.u32 %v2071, 4294901760
      %2235 = vmatmul.f32.gmra.mxu0 %v2234
      %v2236 = vpop.f32.mrf.mxu0
      %v2237 = vadd.f32 %v2128, %v2236
      %v2238 = vand.u32 %v2072, 4294901760
      %2239 = vmatmul.f32.gmra.mxu0 %v2238
      %v2240 = vpop.f32.mrf.mxu0
      %v2241 = vadd.f32 %v2136, %v2240
      %2242 = vdwg.mxu0
      %v2243 = vand.u32 %v2088, 4294901760
      %v2244 = vsub.f32 %v2088, %v2243
      %2245 = vmatpush.msra.mxu0 %v2244
      %v2246 = vand.u32 %v2087, 4294901760
      %v2247 = vsub.f32 %v2087, %v2246
      %2248 = vmatpush.msra.mxu0 %v2247
      %v2249 = vand.u32 %v2086, 4294901760
      %v2250 = vsub.f32 %v2086, %v2249
      %2251 = vmatpush.msra.mxu0 %v2250
      %v2252 = vand.u32 %v2085, 4294901760
      %v2253 = vsub.f32 %v2085, %v2252
      %2254 = vmatpush.msra.mxu0 %v2253
      %v2255 = vand.u32 %v2084, 4294901760
      %v2256 = vsub.f32 %v2084, %v2255
      %2257 = vmatpush.msra.mxu0 %v2256
      %v2258 = vand.u32 %v2083, 4294901760
      %v2259 = vsub.f32 %v2083, %v2258
      %2260 = vmatpush.msra.mxu0 %v2259
      %v2261 = vand.u32 %v2082, 4294901760
      %v2262 = vsub.f32 %v2082, %v2261
      %2263 = vmatpush.msra.mxu0 %v2262
      %v2264 = vand.u32 %v2081, 4294901760
      %v2265 = vsub.f32 %v2081, %v2264
      %2266 = vmatpush.msra.mxu0 %v2265
      %v2267 = vand.u32 %v2080, 4294901760
      %v2268 = vsub.f32 %v2080, %v2267
      %2269 = vmatpush.msra.mxu0 %v2268
      %v2270 = vand.u32 %v2079, 4294901760
      %v2271 = vsub.f32 %v2079, %v2270
      %2272 = vmatpush.msra.mxu0 %v2271
      %v2273 = vand.u32 %v2078, 4294901760
      %v2274 = vsub.f32 %v2078, %v2273
      %2275 = vmatpush.msra.mxu0 %v2274
      %v2276 = vand.u32 %v2077, 4294901760
      %v2277 = vsub.f32 %v2077, %v2276
      %2278 = vmatpush.msra.mxu0 %v2277
      %v2279 = vand.u32 %v2076, 4294901760
      %v2280 = vsub.f32 %v2076, %v2279
      %2281 = vmatpush.msra.mxu0 %v2280
      %v2282 = vand.u32 %v2075, 4294901760
      %v2283 = vsub.f32 %v2075, %v2282
      %2284 = vmatpush.msra.mxu0 %v2283
      %v2285 = vand.u32 %v2074, 4294901760
      %v2286 = vsub.f32 %v2074, %v2285
      %2287 = vmatpush.msra.mxu0 %v2286
      %v2288 = vand.u32 %v2073, 4294901760
      %v2289 = vsub.f32 %v2073, %v2288
      %2290 = vmatpush.msra.mxu0 %v2289
      %v2291 = vand.u32 %v2071, 4294901760
      %v2292 = vsub.f32 %v2071, %v2291
      %2293 = vmatmul.f32.gmra.mxu0 %v2292
      %v2294 = vpop.f32.mrf.mxu0
      %v2295 = vadd.f32 %v2237, %v2294
      %v2296 = vand.u32 %v2072, 4294901760
      %v2297 = vsub.f32 %v2072, %v2296
      %2298 = vmatmul.f32.gmra.mxu0 %v2297
      %v2299 = vpop.f32.mrf.mxu0
      %v2300 = vadd.f32 %v2241, %v2299
      %2301 = vdwg.mxu0
      %v2302 = vand.u32 %v2088, 4294901760
      %2303 = vmatpush.msra.mxu0 %v2302
      %v2304 = vand.u32 %v2087, 4294901760
      %2305 = vmatpush.msra.mxu0 %v2304
      %v2306 = vand.u32 %v2086, 4294901760
      %2307 = vmatpush.msra.mxu0 %v2306
      %v2308 = vand.u32 %v2085, 4294901760
      %2309 = vmatpush.msra.mxu0 %v2308
      %v2310 = vand.u32 %v2084, 4294901760
      %2311 = vmatpush.msra.mxu0 %v2310
      %v2312 = vand.u32 %v2083, 4294901760
      %2313 = vmatpush.msra.mxu0 %v2312
      %v2314 = vand.u32 %v2082, 4294901760
      %2315 = vmatpush.msra.mxu0 %v2314
      %v2316 = vand.u32 %v2081, 4294901760
      %2317 = vmatpush.msra.mxu0 %v2316
      %v2318 = vand.u32 %v2080, 4294901760
      %2319 = vmatpush.msra.mxu0 %v2318
      %v2320 = vand.u32 %v2079, 4294901760
      %2321 = vmatpush.msra.mxu0 %v2320
      %v2322 = vand.u32 %v2078, 4294901760
      %2323 = vmatpush.msra.mxu0 %v2322
      %v2324 = vand.u32 %v2077, 4294901760
      %2325 = vmatpush.msra.mxu0 %v2324
      %v2326 = vand.u32 %v2076, 4294901760
      %2327 = vmatpush.msra.mxu0 %v2326
      %v2328 = vand.u32 %v2075, 4294901760
      %2329 = vmatpush.msra.mxu0 %v2328
      %v2330 = vand.u32 %v2074, 4294901760
      %2331 = vmatpush.msra.mxu0 %v2330
      %v2332 = vand.u32 %v2073, 4294901760
      %2333 = vmatpush.msra.mxu0 %v2332
      %v2334 = vand.u32 %v2071, 4294901760
      %v2335 = vsub.f32 %v2071, %v2334
      %v2336 = vand.u32 %v2335, 4294901760
      %2337 = vmatmul.f32.gmra.mxu0 %v2336
      %v2338 = vpop.f32.mrf.mxu0
      %v2339 = vadd.f32 %v2295, %v2338
      %v2340 = vand.u32 %v2072, 4294901760
      %v2341 = vsub.f32 %v2072, %v2340
      %v2342 = vand.u32 %v2341, 4294901760
      %2343 = vmatmul.f32.gmra.mxu0 %v2342
      %v2344 = vpop.f32.mrf.mxu0
      %v2345 = vadd.f32 %v2300, %v2344
      %2346 = vdwg.mxu0
      %v2347 = vand.u32 %v2088, 4294901760
      %v2348 = vsub.f32 %v2088, %v2347
      %v2349 = vand.u32 %v2348, 4294901760
      %2350 = vmatpush.msra.mxu0 %v2349
      %v2351 = vand.u32 %v2087, 4294901760
      %v2352 = vsub.f32 %v2087, %v2351
      %v2353 = vand.u32 %v2352, 4294901760
      %2354 = vmatpush.msra.mxu0 %v2353
      %v2355 = vand.u32 %v2086, 4294901760
      %v2356 = vsub.f32 %v2086, %v2355
      %v2357 = vand.u32 %v2356, 4294901760
      %2358 = vmatpush.msra.mxu0 %v2357
      %v2359 = vand.u32 %v2085, 4294901760
      %v2360 = vsub.f32 %v2085, %v2359
      %v2361 = vand.u32 %v2360, 4294901760
      %2362 = vmatpush.msra.mxu0 %v2361
      %v2363 = vand.u32 %v2084, 4294901760
      %v2364 = vsub.f32 %v2084, %v2363
      %v2365 = vand.u32 %v2364, 4294901760
      %2366 = vmatpush.msra.mxu0 %v2365
      %v2367 = vand.u32 %v2083, 4294901760
      %v2368 = vsub.f32 %v2083, %v2367
      %v2369 = vand.u32 %v2368, 4294901760
      %2370 = vmatpush.msra.mxu0 %v2369
      %v2371 = vand.u32 %v2082, 4294901760
      %v2372 = vsub.f32 %v2082, %v2371
      %v2373 = vand.u32 %v2372, 4294901760
      %2374 = vmatpush.msra.mxu0 %v2373
      %v2375 = vand.u32 %v2081, 4294901760
      %v2376 = vsub.f32 %v2081, %v2375
      %v2377 = vand.u32 %v2376, 4294901760
      %2378 = vmatpush.msra.mxu0 %v2377
      %v2379 = vand.u32 %v2080, 4294901760
      %v2380 = vsub.f32 %v2080, %v2379
      %v2381 = vand.u32 %v2380, 4294901760
      %2382 = vmatpush.msra.mxu0 %v2381
      %v2383 = vand.u32 %v2079, 4294901760
      %v2384 = vsub.f32 %v2079, %v2383
      %v2385 = vand.u32 %v2384, 4294901760
      %2386 = vmatpush.msra.mxu0 %v2385
      %v2387 = vand.u32 %v2078, 4294901760
      %v2388 = vsub.f32 %v2078, %v2387
      %v2389 = vand.u32 %v2388, 4294901760
      %2390 = vmatpush.msra.mxu0 %v2389
      %v2391 = vand.u32 %v2077, 4294901760
      %v2392 = vsub.f32 %v2077, %v2391
      %v2393 = vand.u32 %v2392, 4294901760
      %2394 = vmatpush.msra.mxu0 %v2393
      %v2395 = vand.u32 %v2076, 4294901760
      %v2396 = vsub.f32 %v2076, %v2395
      %v2397 = vand.u32 %v2396, 4294901760
      %2398 = vmatpush.msra.mxu0 %v2397
      %v2399 = vand.u32 %v2075, 4294901760
      %v2400 = vsub.f32 %v2075, %v2399
      %v2401 = vand.u32 %v2400, 4294901760
      %2402 = vmatpush.msra.mxu0 %v2401
      %v2403 = vand.u32 %v2074, 4294901760
      %v2404 = vsub.f32 %v2074, %v2403
      %v2405 = vand.u32 %v2404, 4294901760
      %2406 = vmatpush.msra.mxu0 %v2405
      %v2407 = vand.u32 %v2073, 4294901760
      %v2408 = vsub.f32 %v2073, %v2407
      %v2409 = vand.u32 %v2408, 4294901760
      %2410 = vmatpush.msra.mxu0 %v2409
      %v2411 = vand.u32 %v2071, 4294901760
      %2412 = vmatmul.f32.gmra.mxu0 %v2411
      %v2413 = vpop.f32.mrf.mxu0
      %v2414 = vadd.f32 %v2339, %v2413
      %v2415 = vand.u32 %v2072, 4294901760
      %2416 = vmatmul.f32.gmra.mxu0 %v2415
      %v2417 = vpop.f32.mrf.mxu0
      %v2418 = vadd.f32 %v2345, %v2417
      %2419 = vdwg.mxu0
      %v2420 = vand.u32 %v2088, 4294901760
      %2421 = vmatpush.msra.mxu0 %v2420
      %v2422 = vand.u32 %v2087, 4294901760
      %2423 = vmatpush.msra.mxu0 %v2422
      %v2424 = vand.u32 %v2086, 4294901760
      %2425 = vmatpush.msra.mxu0 %v2424
      %v2426 = vand.u32 %v2085, 4294901760
      %2427 = vmatpush.msra.mxu0 %v2426
      %v2428 = vand.u32 %v2084, 4294901760
      %2429 = vmatpush.msra.mxu0 %v2428
      %v2430 = vand.u32 %v2083, 4294901760
      %2431 = vmatpush.msra.mxu0 %v2430
      %v2432 = vand.u32 %v2082, 4294901760
      %2433 = vmatpush.msra.mxu0 %v2432
      %v2434 = vand.u32 %v2081, 4294901760
      %2435 = vmatpush.msra.mxu0 %v2434
      %v2436 = vand.u32 %v2080, 4294901760
      %2437 = vmatpush.msra.mxu0 %v2436
      %v2438 = vand.u32 %v2079, 4294901760
      %2439 = vmatpush.msra.mxu0 %v2438
      %v2440 = vand.u32 %v2078, 4294901760
      %2441 = vmatpush.msra.mxu0 %v2440
      %v2442 = vand.u32 %v2077, 4294901760
      %2443 = vmatpush.msra.mxu0 %v2442
      %v2444 = vand.u32 %v2076, 4294901760
      %2445 = vmatpush.msra.mxu0 %v2444
      %v2446 = vand.u32 %v2075, 4294901760
      %2447 = vmatpush.msra.mxu0 %v2446
      %v2448 = vand.u32 %v2074, 4294901760
      %2449 = vmatpush.msra.mxu0 %v2448
      %v2450 = vand.u32 %v2073, 4294901760
      %2451 = vmatpush.msra.mxu0 %v2450
      %v2452 = vand.u32 %v2071, 4294901760
      %2453 = vmatmul.f32.gmra.mxu0 %v2452
      %v2454 = vpop.f32.mrf.mxu0
      %v2455 = vadd.f32 %v2414, %v2454
      %v2456 = vand.u32 %v2072, 4294901760
      %2457 = vmatmul.f32.gmra.mxu0 %v2456
      %v2458 = vpop.f32.mrf.mxu0
      %v2459 = vadd.f32 %v2418, %v2458
      %2460 = vdwg.mxu0
      %v2461 = vadd.f32 %v2069, %v2455
      %v2462 = vadd.f32 %v2070, %v2459
      %2463 = vst [vmem:[#allocation2 + $0x4] sm:$0xff] %v2461
      %2464 = vst [vmem:[#allocation2 + $0xc] sm:$0xf] %v2462
      %v2465 = vld [vmem:[#allocation2] sm:$0x3]
      %v2466 = vld [vmem:[%s516 + $0x4] sm:$0x3]
      %s2467 = scalar_lea.vmem %s521, 256
      %v2468 = vld [vmem:[%s2467] sm:$0xff]
      %v2469 = vld [vmem:[%s2467 + $0x8] sm:$0xff]
      %v2470 = vld [vmem:[%s2467 + $0x10] sm:$0xff]
      %v2471 = vld [vmem:[%s2467 + $0x18] sm:$0xff]
      %v2472 = vld [vmem:[%s2467 + $0x20] sm:$0xff]
      %v2473 = vld [vmem:[%s2467 + $0x28] sm:$0xff]
      %v2474 = vld [vmem:[%s2467 + $0x30] sm:$0xff]
      %v2475 = vld [vmem:[%s2467 + $0x38] sm:$0xff]
      %v2476 = vld [vmem:[%s2467 + $0x40] sm:$0xff]
      %v2477 = vld [vmem:[%s2467 + $0x48] sm:$0xff]
      %v2478 = vld [vmem:[%s2467 + $0x50] sm:$0xff]
      %v2479 = vld [vmem:[%s2467 + $0x58] sm:$0xff]
      %v2480 = vld [vmem:[%s2467 + $0x60] sm:$0xff]
      %v2481 = vld [vmem:[%s2467 + $0x68] sm:$0xff]
      %v2482 = vld [vmem:[%s2467 + $0x70] sm:$0xff]
      %v2483 = vld [vmem:[%s2467 + $0x78] sm:$0xff]
      %v2484 = vand.u32 %v2483, 4294901760
      %2485 = vmatpush.msra.mxu0 %v2484
      %v2486 = vand.u32 %v2482, 4294901760
      %2487 = vmatpush.msra.mxu0 %v2486
      %v2488 = vand.u32 %v2481, 4294901760
      %2489 = vmatpush.msra.mxu0 %v2488
      %v2490 = vand.u32 %v2480, 4294901760
      %2491 = vmatpush.msra.mxu0 %v2490
      %v2492 = vand.u32 %v2479, 4294901760
      %2493 = vmatpush.msra.mxu0 %v2492
      %v2494 = vand.u32 %v2478, 4294901760
      %2495 = vmatpush.msra.mxu0 %v2494
      %v2496 = vand.u32 %v2477, 4294901760
      %2497 = vmatpush.msra.mxu0 %v2496
      %v2498 = vand.u32 %v2476, 4294901760
      %2499 = vmatpush.msra.mxu0 %v2498
      %v2500 = vand.u32 %v2475, 4294901760
      %2501 = vmatpush.msra.mxu0 %v2500
      %v2502 = vand.u32 %v2474, 4294901760
      %2503 = vmatpush.msra.mxu0 %v2502
      %v2504 = vand.u32 %v2473, 4294901760
      %2505 = vmatpush.msra.mxu0 %v2504
      %v2506 = vand.u32 %v2472, 4294901760
      %2507 = vmatpush.msra.mxu0 %v2506
      %v2508 = vand.u32 %v2471, 4294901760
      %2509 = vmatpush.msra.mxu0 %v2508
      %v2510 = vand.u32 %v2470, 4294901760
      %2511 = vmatpush.msra.mxu0 %v2510
      %v2512 = vand.u32 %v2469, 4294901760
      %2513 = vmatpush.msra.mxu0 %v2512
      %v2514 = vand.u32 %v2468, 4294901760
      %2515 = vmatpush.msra.mxu0 %v2514
      %v2516 = vand.u32 %v2466, 4294901760
      %v2517 = vsub.f32 %v2466, %v2516
      %v2518 = vand.u32 %v2517, 4294901760
      %v2519 = vsub.f32 %v2517, %v2518
      %v2520 = vand.u32 %v2519, 4294901760
      %2521 = vmatmul.f32.gmra.mxu0 %v2520
      %v2522 = vpop.f32.mrf.mxu0
      %v2523 = vadd.f32 0.0, %v2522
      %2524 = vdwg.mxu0
      %v2525 = vand.u32 %v2483, 4294901760
      %v2526 = vsub.f32 %v2483, %v2525
      %v2527 = vand.u32 %v2526, 4294901760
      %v2528 = vsub.f32 %v2526, %v2527
      %v2529 = vand.u32 %v2528, 4294901760
      %2530 = vmatpush.msra.mxu0 %v2529
      %v2531 = vand.u32 %v2482, 4294901760
      %v2532 = vsub.f32 %v2482, %v2531
      %v2533 = vand.u32 %v2532, 4294901760
      %v2534 = vsub.f32 %v2532, %v2533
      %v2535 = vand.u32 %v2534, 4294901760
      %2536 = vmatpush.msra.mxu0 %v2535
      %v2537 = vand.u32 %v2481, 4294901760
      %v2538 = vsub.f32 %v2481, %v2537
      %v2539 = vand.u32 %v2538, 4294901760
      %v2540 = vsub.f32 %v2538, %v2539
      %v2541 = vand.u32 %v2540, 4294901760
      %2542 = vmatpush.msra.mxu0 %v2541
      %v2543 = vand.u32 %v2480, 4294901760
      %v2544 = vsub.f32 %v2480, %v2543
      %v2545 = vand.u32 %v2544, 4294901760
      %v2546 = vsub.f32 %v2544, %v2545
      %v2547 = vand.u32 %v2546, 4294901760
      %2548 = vmatpush.msra.mxu0 %v2547
      %v2549 = vand.u32 %v2479, 4294901760
      %v2550 = vsub.f32 %v2479, %v2549
      %v2551 = vand.u32 %v2550, 4294901760
      %v2552 = vsub.f32 %v2550, %v2551
      %v2553 = vand.u32 %v2552, 4294901760
      %2554 = vmatpush.msra.mxu0 %v2553
      %v2555 = vand.u32 %v2478, 4294901760
      %v2556 = vsub.f32 %v2478, %v2555
      %v2557 = vand.u32 %v2556, 4294901760
      %v2558 = vsub.f32 %v2556, %v2557
      %v2559 = vand.u32 %v2558, 4294901760
      %2560 = vmatpush.msra.mxu0 %v2559
      %v2561 = vand.u32 %v2477, 4294901760
      %v2562 = vsub.f32 %v2477, %v2561
      %v2563 = vand.u32 %v2562, 4294901760
      %v2564 = vsub.f32 %v2562, %v2563
      %v2565 = vand.u32 %v2564, 4294901760
      %2566 = vmatpush.msra.mxu0 %v2565
      %v2567 = vand.u32 %v2476, 4294901760
      %v2568 = vsub.f32 %v2476, %v2567
      %v2569 = vand.u32 %v2568, 4294901760
      %v2570 = vsub.f32 %v2568, %v2569
      %v2571 = vand.u32 %v2570, 4294901760
      %2572 = vmatpush.msra.mxu0 %v2571
      %v2573 = vand.u32 %v2475, 4294901760
      %v2574 = vsub.f32 %v2475, %v2573
      %v2575 = vand.u32 %v2574, 4294901760
      %v2576 = vsub.f32 %v2574, %v2575
      %v2577 = vand.u32 %v2576, 4294901760
      %2578 = vmatpush.msra.mxu0 %v2577
      %v2579 = vand.u32 %v2474, 4294901760
      %v2580 = vsub.f32 %v2474, %v2579
      %v2581 = vand.u32 %v2580, 4294901760
      %v2582 = vsub.f32 %v2580, %v2581
      %v2583 = vand.u32 %v2582, 4294901760
      %2584 = vmatpush.msra.mxu0 %v2583
      %v2585 = vand.u32 %v2473, 4294901760
      %v2586 = vsub.f32 %v2473, %v2585
      %v2587 = vand.u32 %v2586, 4294901760
      %v2588 = vsub.f32 %v2586, %v2587
      %v2589 = vand.u32 %v2588, 4294901760
      %2590 = vmatpush.msra.mxu0 %v2589
      %v2591 = vand.u32 %v2472, 4294901760
      %v2592 = vsub.f32 %v2472, %v2591
      %v2593 = vand.u32 %v2592, 4294901760
      %v2594 = vsub.f32 %v2592, %v2593
      %v2595 = vand.u32 %v2594, 4294901760
      %2596 = vmatpush.msra.mxu0 %v2595
      %v2597 = vand.u32 %v2471, 4294901760
      %v2598 = vsub.f32 %v2471, %v2597
      %v2599 = vand.u32 %v2598, 4294901760
      %v2600 = vsub.f32 %v2598, %v2599
      %v2601 = vand.u32 %v2600, 4294901760
      %2602 = vmatpush.msra.mxu0 %v2601
      %v2603 = vand.u32 %v2470, 4294901760
      %v2604 = vsub.f32 %v2470, %v2603
      %v2605 = vand.u32 %v2604, 4294901760
      %v2606 = vsub.f32 %v2604, %v2605
      %v2607 = vand.u32 %v2606, 4294901760
      %2608 = vmatpush.msra.mxu0 %v2607
      %v2609 = vand.u32 %v2469, 4294901760
      %v2610 = vsub.f32 %v2469, %v2609
      %v2611 = vand.u32 %v2610, 4294901760
      %v2612 = vsub.f32 %v2610, %v2611
      %v2613 = vand.u32 %v2612, 4294901760
      %2614 = vmatpush.msra.mxu0 %v2613
      %v2615 = vand.u32 %v2468, 4294901760
      %v2616 = vsub.f32 %v2468, %v2615
      %v2617 = vand.u32 %v2616, 4294901760
      %v2618 = vsub.f32 %v2616, %v2617
      %v2619 = vand.u32 %v2618, 4294901760
      %2620 = vmatpush.msra.mxu0 %v2619
      %v2621 = vand.u32 %v2466, 4294901760
      %2622 = vmatmul.f32.gmra.mxu0 %v2621
      %v2623 = vpop.f32.mrf.mxu0
      %v2624 = vadd.f32 %v2523, %v2623
      %2625 = vdwg.mxu0
      %v2626 = vand.u32 %v2483, 4294901760
      %v2627 = vsub.f32 %v2483, %v2626
      %2628 = vmatpush.msra.mxu0 %v2627
      %v2629 = vand.u32 %v2482, 4294901760
      %v2630 = vsub.f32 %v2482, %v2629
      %2631 = vmatpush.msra.mxu0 %v2630
      %v2632 = vand.u32 %v2481, 4294901760
      %v2633 = vsub.f32 %v2481, %v2632
      %2634 = vmatpush.msra.mxu0 %v2633
      %v2635 = vand.u32 %v2480, 4294901760
      %v2636 = vsub.f32 %v2480, %v2635
      %2637 = vmatpush.msra.mxu0 %v2636
      %v2638 = vand.u32 %v2479, 4294901760
      %v2639 = vsub.f32 %v2479, %v2638
      %2640 = vmatpush.msra.mxu0 %v2639
      %v2641 = vand.u32 %v2478, 4294901760
      %v2642 = vsub.f32 %v2478, %v2641
      %2643 = vmatpush.msra.mxu0 %v2642
      %v2644 = vand.u32 %v2477, 4294901760
      %v2645 = vsub.f32 %v2477, %v2644
      %2646 = vmatpush.msra.mxu0 %v2645
      %v2647 = vand.u32 %v2476, 4294901760
      %v2648 = vsub.f32 %v2476, %v2647
      %2649 = vmatpush.msra.mxu0 %v2648
      %v2650 = vand.u32 %v2475, 4294901760
      %v2651 = vsub.f32 %v2475, %v2650
      %2652 = vmatpush.msra.mxu0 %v2651
      %v2653 = vand.u32 %v2474, 4294901760
      %v2654 = vsub.f32 %v2474, %v2653
      %2655 = vmatpush.msra.mxu0 %v2654
      %v2656 = vand.u32 %v2473, 4294901760
      %v2657 = vsub.f32 %v2473, %v2656
      %2658 = vmatpush.msra.mxu0 %v2657
      %v2659 = vand.u32 %v2472, 4294901760
      %v2660 = vsub.f32 %v2472, %v2659
      %2661 = vmatpush.msra.mxu0 %v2660
      %v2662 = vand.u32 %v2471, 4294901760
      %v2663 = vsub.f32 %v2471, %v2662
      %2664 = vmatpush.msra.mxu0 %v2663
      %v2665 = vand.u32 %v2470, 4294901760
      %v2666 = vsub.f32 %v2470, %v2665
      %2667 = vmatpush.msra.mxu0 %v2666
      %v2668 = vand.u32 %v2469, 4294901760
      %v2669 = vsub.f32 %v2469, %v2668
      %2670 = vmatpush.msra.mxu0 %v2669
      %v2671 = vand.u32 %v2468, 4294901760
      %v2672 = vsub.f32 %v2468, %v2671
      %2673 = vmatpush.msra.mxu0 %v2672
      %v2674 = vand.u32 %v2466, 4294901760
      %v2675 = vsub.f32 %v2466, %v2674
      %2676 = vmatmul.f32.gmra.mxu0 %v2675
      %v2677 = vpop.f32.mrf.mxu0
      %v2678 = vadd.f32 %v2624, %v2677
      %2679 = vdwg.mxu0
      %v2680 = vand.u32 %v2483, 4294901760
      %2681 = vmatpush.msra.mxu0 %v2680
      %v2682 = vand.u32 %v2482, 4294901760
      %2683 = vmatpush.msra.mxu0 %v2682
      %v2684 = vand.u32 %v2481, 4294901760
      %2685 = vmatpush.msra.mxu0 %v2684
      %v2686 = vand.u32 %v2480, 4294901760
      %2687 = vmatpush.msra.mxu0 %v2686
      %v2688 = vand.u32 %v2479, 4294901760
      %2689 = vmatpush.msra.mxu0 %v2688
      %v2690 = vand.u32 %v2478, 4294901760
      %2691 = vmatpush.msra.mxu0 %v2690
      %v2692 = vand.u32 %v2477, 4294901760
      %2693 = vmatpush.msra.mxu0 %v2692
      %v2694 = vand.u32 %v2476, 4294901760
      %2695 = vmatpush.msra.mxu0 %v2694
      %v2696 = vand.u32 %v2475, 4294901760
      %2697 = vmatpush.msra.mxu0 %v2696
      %v2698 = vand.u32 %v2474, 4294901760
      %2699 = vmatpush.msra.mxu0 %v2698
      %v2700 = vand.u32 %v2473, 4294901760
      %2701 = vmatpush.msra.mxu0 %v2700
      %v2702 = vand.u32 %v2472, 4294901760
      %2703 = vmatpush.msra.mxu0 %v2702
      %v2704 = vand.u32 %v2471, 4294901760
      %2705 = vmatpush.msra.mxu0 %v2704
      %v2706 = vand.u32 %v2470, 4294901760
      %2707 = vmatpush.msra.mxu0 %v2706
      %v2708 = vand.u32 %v2469, 4294901760
      %2709 = vmatpush.msra.mxu0 %v2708
      %v2710 = vand.u32 %v2468, 4294901760
      %2711 = vmatpush.msra.mxu0 %v2710
      %v2712 = vand.u32 %v2466, 4294901760
      %v2713 = vsub.f32 %v2466, %v2712
      %v2714 = vand.u32 %v2713, 4294901760
      %2715 = vmatmul.f32.gmra.mxu0 %v2714
      %v2716 = vpop.f32.mrf.mxu0
      %v2717 = vadd.f32 %v2678, %v2716
      %2718 = vdwg.mxu0
      %v2719 = vand.u32 %v2483, 4294901760
      %v2720 = vsub.f32 %v2483, %v2719
      %v2721 = vand.u32 %v2720, 4294901760
      %2722 = vmatpush.msra.mxu0 %v2721
      %v2723 = vand.u32 %v2482, 4294901760
      %v2724 = vsub.f32 %v2482, %v2723
      %v2725 = vand.u32 %v2724, 4294901760
      %2726 = vmatpush.msra.mxu0 %v2725
      %v2727 = vand.u32 %v2481, 4294901760
      %v2728 = vsub.f32 %v2481, %v2727
      %v2729 = vand.u32 %v2728, 4294901760
      %2730 = vmatpush.msra.mxu0 %v2729
      %v2731 = vand.u32 %v2480, 4294901760
      %v2732 = vsub.f32 %v2480, %v2731
      %v2733 = vand.u32 %v2732, 4294901760
      %2734 = vmatpush.msra.mxu0 %v2733
      %v2735 = vand.u32 %v2479, 4294901760
      %v2736 = vsub.f32 %v2479, %v2735
      %v2737 = vand.u32 %v2736, 4294901760
      %2738 = vmatpush.msra.mxu0 %v2737
      %v2739 = vand.u32 %v2478, 4294901760
      %v2740 = vsub.f32 %v2478, %v2739
      %v2741 = vand.u32 %v2740, 4294901760
      %2742 = vmatpush.msra.mxu0 %v2741
      %v2743 = vand.u32 %v2477, 4294901760
      %v2744 = vsub.f32 %v2477, %v2743
      %v2745 = vand.u32 %v2744, 4294901760
      %2746 = vmatpush.msra.mxu0 %v2745
      %v2747 = vand.u32 %v2476, 4294901760
      %v2748 = vsub.f32 %v2476, %v2747
      %v2749 = vand.u32 %v2748, 4294901760
      %2750 = vmatpush.msra.mxu0 %v2749
      %v2751 = vand.u32 %v2475, 4294901760
      %v2752 = vsub.f32 %v2475, %v2751
      %v2753 = vand.u32 %v2752, 4294901760
      %2754 = vmatpush.msra.mxu0 %v2753
      %v2755 = vand.u32 %v2474, 4294901760
      %v2756 = vsub.f32 %v2474, %v2755
      %v2757 = vand.u32 %v2756, 4294901760
      %2758 = vmatpush.msra.mxu0 %v2757
      %v2759 = vand.u32 %v2473, 4294901760
      %v2760 = vsub.f32 %v2473, %v2759
      %v2761 = vand.u32 %v2760, 4294901760
      %2762 = vmatpush.msra.mxu0 %v2761
      %v2763 = vand.u32 %v2472, 4294901760
      %v2764 = vsub.f32 %v2472, %v2763
      %v2765 = vand.u32 %v2764, 4294901760
      %2766 = vmatpush.msra.mxu0 %v2765
      %v2767 = vand.u32 %v2471, 4294901760
      %v2768 = vsub.f32 %v2471, %v2767
      %v2769 = vand.u32 %v2768, 4294901760
      %2770 = vmatpush.msra.mxu0 %v2769
      %v2771 = vand.u32 %v2470, 4294901760
      %v2772 = vsub.f32 %v2470, %v2771
      %v2773 = vand.u32 %v2772, 4294901760
      %2774 = vmatpush.msra.mxu0 %v2773
      %v2775 = vand.u32 %v2469, 4294901760
      %v2776 = vsub.f32 %v2469, %v2775
      %v2777 = vand.u32 %v2776, 4294901760
      %2778 = vmatpush.msra.mxu0 %v2777
      %v2779 = vand.u32 %v2468, 4294901760
      %v2780 = vsub.f32 %v2468, %v2779
      %v2781 = vand.u32 %v2780, 4294901760
      %2782 = vmatpush.msra.mxu0 %v2781
      %v2783 = vand.u32 %v2466, 4294901760
      %2784 = vmatmul.f32.gmra.mxu0 %v2783
      %v2785 = vpop.f32.mrf.mxu0
      %v2786 = vadd.f32 %v2717, %v2785
      %2787 = vdwg.mxu0
      %v2788 = vand.u32 %v2483, 4294901760
      %2789 = vmatpush.msra.mxu0 %v2788
      %v2790 = vand.u32 %v2482, 4294901760
      %2791 = vmatpush.msra.mxu0 %v2790
      %v2792 = vand.u32 %v2481, 4294901760
      %2793 = vmatpush.msra.mxu0 %v2792
      %v2794 = vand.u32 %v2480, 4294901760
      %2795 = vmatpush.msra.mxu0 %v2794
      %v2796 = vand.u32 %v2479, 4294901760
      %2797 = vmatpush.msra.mxu0 %v2796
      %v2798 = vand.u32 %v2478, 4294901760
      %2799 = vmatpush.msra.mxu0 %v2798
      %v2800 = vand.u32 %v2477, 4294901760
      %2801 = vmatpush.msra.mxu0 %v2800
      %v2802 = vand.u32 %v2476, 4294901760
      %2803 = vmatpush.msra.mxu0 %v2802
      %v2804 = vand.u32 %v2475, 4294901760
      %2805 = vmatpush.msra.mxu0 %v2804
      %v2806 = vand.u32 %v2474, 4294901760
      %2807 = vmatpush.msra.mxu0 %v2806
      %v2808 = vand.u32 %v2473, 4294901760
      %2809 = vmatpush.msra.mxu0 %v2808
      %v2810 = vand.u32 %v2472, 4294901760
      %2811 = vmatpush.msra.mxu0 %v2810
      %v2812 = vand.u32 %v2471, 4294901760
      %2813 = vmatpush.msra.mxu0 %v2812
      %v2814 = vand.u32 %v2470, 4294901760
      %2815 = vmatpush.msra.mxu0 %v2814
      %v2816 = vand.u32 %v2469, 4294901760
      %2817 = vmatpush.msra.mxu0 %v2816
      %v2818 = vand.u32 %v2468, 4294901760
      %2819 = vmatpush.msra.mxu0 %v2818
      %v2820 = vand.u32 %v2466, 4294901760
      %2821 = vmatmul.f32.gmra.mxu0 %v2820
      %v2822 = vpop.f32.mrf.mxu0
      %v2823 = vadd.f32 %v2786, %v2822
      %2824 = vdwg.mxu0
      %v2825 = vadd.f32 %v2465, %v2823
      %2826 = vst [vmem:[#allocation2] sm:$0x3] %v2825
      %v2827 = vld [vmem:[#allocation2 + $0x2] sm:$0xff]
      %v2828 = vld [vmem:[#allocation2 + $0xa] sm:$0x3f]
      %v2829 = vld [vmem:[%s508] sm:$0xff]
      %v2830 = vld [vmem:[%s508 + $0x8] sm:$0x3f]
      %v2831 = vld [vmem:[%s2467] sm:$0xff]
      %v2832 = vld [vmem:[%s2467 + $0x8] sm:$0xff]
      %v2833 = vld [vmem:[%s2467 + $0x10] sm:$0xff]
      %v2834 = vld [vmem:[%s2467 + $0x18] sm:$0xff]
      %v2835 = vld [vmem:[%s2467 + $0x20] sm:$0xff]
      %v2836 = vld [vmem:[%s2467 + $0x28] sm:$0xff]
      %v2837 = vld [vmem:[%s2467 + $0x30] sm:$0xff]
      %v2838 = vld [vmem:[%s2467 + $0x38] sm:$0xff]
      %v2839 = vld [vmem:[%s2467 + $0x40] sm:$0xff]
      %v2840 = vld [vmem:[%s2467 + $0x48] sm:$0xff]
      %v2841 = vld [vmem:[%s2467 + $0x50] sm:$0xff]
      %v2842 = vld [vmem:[%s2467 + $0x58] sm:$0xff]
      %v2843 = vld [vmem:[%s2467 + $0x60] sm:$0xff]
      %v2844 = vld [vmem:[%s2467 + $0x68] sm:$0xff]
      %v2845 = vld [vmem:[%s2467 + $0x70] sm:$0xff]
      %v2846 = vld [vmem:[%s2467 + $0x78] sm:$0xff]
      %v2847 = vand.u32 %v2846, 4294901760
      %2848 = vmatpush.msra.mxu0 %v2847
      %v2849 = vand.u32 %v2845, 4294901760
      %2850 = vmatpush.msra.mxu0 %v2849
      %v2851 = vand.u32 %v2844, 4294901760
      %2852 = vmatpush.msra.mxu0 %v2851
      %v2853 = vand.u32 %v2843, 4294901760
      %2854 = vmatpush.msra.mxu0 %v2853
      %v2855 = vand.u32 %v2842, 4294901760
      %2856 = vmatpush.msra.mxu0 %v2855
      %v2857 = vand.u32 %v2841, 4294901760
      %2858 = vmatpush.msra.mxu0 %v2857
      %v2859 = vand.u32 %v2840, 4294901760
      %2860 = vmatpush.msra.mxu0 %v2859
      %v2861 = vand.u32 %v2839, 4294901760
      %2862 = vmatpush.msra.mxu0 %v2861
      %v2863 = vand.u32 %v2838, 4294901760
      %2864 = vmatpush.msra.mxu0 %v2863
      %v2865 = vand.u32 %v2837, 4294901760
      %2866 = vmatpush.msra.mxu0 %v2865
      %v2867 = vand.u32 %v2836, 4294901760
      %2868 = vmatpush.msra.mxu0 %v2867
      %v2869 = vand.u32 %v2835, 4294901760
      %2870 = vmatpush.msra.mxu0 %v2869
      %v2871 = vand.u32 %v2834, 4294901760
      %2872 = vmatpush.msra.mxu0 %v2871
      %v2873 = vand.u32 %v2833, 4294901760
      %2874 = vmatpush.msra.mxu0 %v2873
      %v2875 = vand.u32 %v2832, 4294901760
      %2876 = vmatpush.msra.mxu0 %v2875
      %v2877 = vand.u32 %v2831, 4294901760
      %2878 = vmatpush.msra.mxu0 %v2877
      %v2879 = vand.u32 %v2829, 4294901760
      %v2880 = vsub.f32 %v2829, %v2879
      %v2881 = vand.u32 %v2880, 4294901760
      %v2882 = vsub.f32 %v2880, %v2881
      %v2883 = vand.u32 %v2882, 4294901760
      %2884 = vmatmul.f32.gmra.mxu0 %v2883
      %v2885 = vpop.f32.mrf.mxu0
      %v2886 = vadd.f32 0.0, %v2885
      %v2887 = vand.u32 %v2830, 4294901760
      %v2888 = vsub.f32 %v2830, %v2887
      %v2889 = vand.u32 %v2888, 4294901760
      %v2890 = vsub.f32 %v2888, %v2889
      %v2891 = vand.u32 %v2890, 4294901760
      %2892 = vmatmul.f32.gmra.mxu0 %v2891
      %v2893 = vpop.f32.mrf.mxu0
      %v2894 = vadd.f32 0.0, %v2893
      %2895 = vdwg.mxu0
      %v2896 = vand.u32 %v2846, 4294901760
      %v2897 = vsub.f32 %v2846, %v2896
      %v2898 = vand.u32 %v2897, 4294901760
      %v2899 = vsub.f32 %v2897, %v2898
      %v2900 = vand.u32 %v2899, 4294901760
      %2901 = vmatpush.msra.mxu0 %v2900
      %v2902 = vand.u32 %v2845, 4294901760
      %v2903 = vsub.f32 %v2845, %v2902
      %v2904 = vand.u32 %v2903, 4294901760
      %v2905 = vsub.f32 %v2903, %v2904
      %v2906 = vand.u32 %v2905, 4294901760
      %2907 = vmatpush.msra.mxu0 %v2906
      %v2908 = vand.u32 %v2844, 4294901760
      %v2909 = vsub.f32 %v2844, %v2908
      %v2910 = vand.u32 %v2909, 4294901760
      %v2911 = vsub.f32 %v2909, %v2910
      %v2912 = vand.u32 %v2911, 4294901760
      %2913 = vmatpush.msra.mxu0 %v2912
      %v2914 = vand.u32 %v2843, 4294901760
      %v2915 = vsub.f32 %v2843, %v2914
      %v2916 = vand.u32 %v2915, 4294901760
      %v2917 = vsub.f32 %v2915, %v2916
      %v2918 = vand.u32 %v2917, 4294901760
      %2919 = vmatpush.msra.mxu0 %v2918
      %v2920 = vand.u32 %v2842, 4294901760
      %v2921 = vsub.f32 %v2842, %v2920
      %v2922 = vand.u32 %v2921, 4294901760
      %v2923 = vsub.f32 %v2921, %v2922
      %v2924 = vand.u32 %v2923, 4294901760
      %2925 = vmatpush.msra.mxu0 %v2924
      %v2926 = vand.u32 %v2841, 4294901760
      %v2927 = vsub.f32 %v2841, %v2926
      %v2928 = vand.u32 %v2927, 4294901760
      %v2929 = vsub.f32 %v2927, %v2928
      %v2930 = vand.u32 %v2929, 4294901760
      %2931 = vmatpush.msra.mxu0 %v2930
      %v2932 = vand.u32 %v2840, 4294901760
      %v2933 = vsub.f32 %v2840, %v2932
      %v2934 = vand.u32 %v2933, 4294901760
      %v2935 = vsub.f32 %v2933, %v2934
      %v2936 = vand.u32 %v2935, 4294901760
      %2937 = vmatpush.msra.mxu0 %v2936
      %v2938 = vand.u32 %v2839, 4294901760
      %v2939 = vsub.f32 %v2839, %v2938
      %v2940 = vand.u32 %v2939, 4294901760
      %v2941 = vsub.f32 %v2939, %v2940
      %v2942 = vand.u32 %v2941, 4294901760
      %2943 = vmatpush.msra.mxu0 %v2942
      %v2944 = vand.u32 %v2838, 4294901760
      %v2945 = vsub.f32 %v2838, %v2944
      %v2946 = vand.u32 %v2945, 4294901760
      %v2947 = vsub.f32 %v2945, %v2946
      %v2948 = vand.u32 %v2947, 4294901760
      %2949 = vmatpush.msra.mxu0 %v2948
      %v2950 = vand.u32 %v2837, 4294901760
      %v2951 = vsub.f32 %v2837, %v2950
      %v2952 = vand.u32 %v2951, 4294901760
      %v2953 = vsub.f32 %v2951, %v2952
      %v2954 = vand.u32 %v2953, 4294901760
      %2955 = vmatpush.msra.mxu0 %v2954
      %v2956 = vand.u32 %v2836, 4294901760
      %v2957 = vsub.f32 %v2836, %v2956
      %v2958 = vand.u32 %v2957, 4294901760
      %v2959 = vsub.f32 %v2957, %v2958
      %v2960 = vand.u32 %v2959, 4294901760
      %2961 = vmatpush.msra.mxu0 %v2960
      %v2962 = vand.u32 %v2835, 4294901760
      %v2963 = vsub.f32 %v2835, %v2962
      %v2964 = vand.u32 %v2963, 4294901760
      %v2965 = vsub.f32 %v2963, %v2964
      %v2966 = vand.u32 %v2965, 4294901760
      %2967 = vmatpush.msra.mxu0 %v2966
      %v2968 = vand.u32 %v2834, 4294901760
      %v2969 = vsub.f32 %v2834, %v2968
      %v2970 = vand.u32 %v2969, 4294901760
      %v2971 = vsub.f32 %v2969, %v2970
      %v2972 = vand.u32 %v2971, 4294901760
      %2973 = vmatpush.msra.mxu0 %v2972
      %v2974 = vand.u32 %v2833, 4294901760
      %v2975 = vsub.f32 %v2833, %v2974
      %v2976 = vand.u32 %v2975, 4294901760
      %v2977 = vsub.f32 %v2975, %v2976
      %v2978 = vand.u32 %v2977, 4294901760
      %2979 = vmatpush.msra.mxu0 %v2978
      %v2980 = vand.u32 %v2832, 4294901760
      %v2981 = vsub.f32 %v2832, %v2980
      %v2982 = vand.u32 %v2981, 4294901760
      %v2983 = vsub.f32 %v2981, %v2982
      %v2984 = vand.u32 %v2983, 4294901760
      %2985 = vmatpush.msra.mxu0 %v2984
      %v2986 = vand.u32 %v2831, 4294901760
      %v2987 = vsub.f32 %v2831, %v2986
      %v2988 = vand.u32 %v2987, 4294901760
      %v2989 = vsub.f32 %v2987, %v2988
      %v2990 = vand.u32 %v2989, 4294901760
      %2991 = vmatpush.msra.mxu0 %v2990
      %v2992 = vand.u32 %v2829, 4294901760
      %2993 = vmatmul.f32.gmra.mxu0 %v2992
      %v2994 = vpop.f32.mrf.mxu0
      %v2995 = vadd.f32 %v2886, %v2994
      %v2996 = vand.u32 %v2830, 4294901760
      %2997 = vmatmul.f32.gmra.mxu0 %v2996
      %v2998 = vpop.f32.mrf.mxu0
      %v2999 = vadd.f32 %v2894, %v2998
      %3000 = vdwg.mxu0
      %v3001 = vand.u32 %v2846, 4294901760
      %v3002 = vsub.f32 %v2846, %v3001
      %3003 = vmatpush.msra.mxu0 %v3002
      %v3004 = vand.u32 %v2845, 4294901760
      %v3005 = vsub.f32 %v2845, %v3004
      %3006 = vmatpush.msra.mxu0 %v3005
      %v3007 = vand.u32 %v2844, 4294901760
      %v3008 = vsub.f32 %v2844, %v3007
      %3009 = vmatpush.msra.mxu0 %v3008
      %v3010 = vand.u32 %v2843, 4294901760
      %v3011 = vsub.f32 %v2843, %v3010
      %3012 = vmatpush.msra.mxu0 %v3011
      %v3013 = vand.u32 %v2842, 4294901760
      %v3014 = vsub.f32 %v2842, %v3013
      %3015 = vmatpush.msra.mxu0 %v3014
      %v3016 = vand.u32 %v2841, 4294901760
      %v3017 = vsub.f32 %v2841, %v3016
      %3018 = vmatpush.msra.mxu0 %v3017
      %v3019 = vand.u32 %v2840, 4294901760
      %v3020 = vsub.f32 %v2840, %v3019
      %3021 = vmatpush.msra.mxu0 %v3020
      %v3022 = vand.u32 %v2839, 4294901760
      %v3023 = vsub.f32 %v2839, %v3022
      %3024 = vmatpush.msra.mxu0 %v3023
      %v3025 = vand.u32 %v2838, 4294901760
      %v3026 = vsub.f32 %v2838, %v3025
      %3027 = vmatpush.msra.mxu0 %v3026
      %v3028 = vand.u32 %v2837, 4294901760
      %v3029 = vsub.f32 %v2837, %v3028
      %3030 = vmatpush.msra.mxu0 %v3029
      %v3031 = vand.u32 %v2836, 4294901760
      %v3032 = vsub.f32 %v2836, %v3031
      %3033 = vmatpush.msra.mxu0 %v3032
      %v3034 = vand.u32 %v2835, 4294901760
      %v3035 = vsub.f32 %v2835, %v3034
      %3036 = vmatpush.msra.mxu0 %v3035
      %v3037 = vand.u32 %v2834, 4294901760
      %v3038 = vsub.f32 %v2834, %v3037
      %3039 = vmatpush.msra.mxu0 %v3038
      %v3040 = vand.u32 %v2833, 4294901760
      %v3041 = vsub.f32 %v2833, %v3040
      %3042 = vmatpush.msra.mxu0 %v3041
      %v3043 = vand.u32 %v2832, 4294901760
      %v3044 = vsub.f32 %v2832, %v3043
      %3045 = vmatpush.msra.mxu0 %v3044
      %v3046 = vand.u32 %v2831, 4294901760
      %v3047 = vsub.f32 %v2831, %v3046
      %3048 = vmatpush.msra.mxu0 %v3047
      %v3049 = vand.u32 %v2829, 4294901760
      %v3050 = vsub.f32 %v2829, %v3049
      %3051 = vmatmul.f32.gmra.mxu0 %v3050
      %v3052 = vpop.f32.mrf.mxu0
      %v3053 = vadd.f32 %v2995, %v3052
      %v3054 = vand.u32 %v2830, 4294901760
      %v3055 = vsub.f32 %v2830, %v3054
      %3056 = vmatmul.f32.gmra.mxu0 %v3055
      %v3057 = vpop.f32.mrf.mxu0
      %v3058 = vadd.f32 %v2999, %v3057
      %3059 = vdwg.mxu0
      %v3060 = vand.u32 %v2846, 4294901760
      %3061 = vmatpush.msra.mxu0 %v3060
      %v3062 = vand.u32 %v2845, 4294901760
      %3063 = vmatpush.msra.mxu0 %v3062
      %v3064 = vand.u32 %v2844, 4294901760
      %3065 = vmatpush.msra.mxu0 %v3064
      %v3066 = vand.u32 %v2843, 4294901760
      %3067 = vmatpush.msra.mxu0 %v3066
      %v3068 = vand.u32 %v2842, 4294901760
      %3069 = vmatpush.msra.mxu0 %v3068
      %v3070 = vand.u32 %v2841, 4294901760
      %3071 = vmatpush.msra.mxu0 %v3070
      %v3072 = vand.u32 %v2840, 4294901760
      %3073 = vmatpush.msra.mxu0 %v3072
      %v3074 = vand.u32 %v2839, 4294901760
      %3075 = vmatpush.msra.mxu0 %v3074
      %v3076 = vand.u32 %v2838, 4294901760
      %3077 = vmatpush.msra.mxu0 %v3076
      %v3078 = vand.u32 %v2837, 4294901760
      %3079 = vmatpush.msra.mxu0 %v3078
      %v3080 = vand.u32 %v2836, 4294901760
      %3081 = vmatpush.msra.mxu0 %v3080
      %v3082 = vand.u32 %v2835, 4294901760
      %3083 = vmatpush.msra.mxu0 %v3082
      %v3084 = vand.u32 %v2834, 4294901760
      %3085 = vmatpush.msra.mxu0 %v3084
      %v3086 = vand.u32 %v2833, 4294901760
      %3087 = vmatpush.msra.mxu0 %v3086
      %v3088 = vand.u32 %v2832, 4294901760
      %3089 = vmatpush.msra.mxu0 %v3088
      %v3090 = vand.u32 %v2831, 4294901760
      %3091 = vmatpush.msra.mxu0 %v3090
      %v3092 = vand.u32 %v2829, 4294901760
      %v3093 = vsub.f32 %v2829, %v3092
      %v3094 = vand.u32 %v3093, 4294901760
      %3095 = vmatmul.f32.gmra.mxu0 %v3094
      %v3096 = vpop.f32.mrf.mxu0
      %v3097 = vadd.f32 %v3053, %v3096
      %v3098 = vand.u32 %v2830, 4294901760
      %v3099 = vsub.f32 %v2830, %v3098
      %v3100 = vand.u32 %v3099, 4294901760
      %3101 = vmatmul.f32.gmra.mxu0 %v3100
      %v3102 = vpop.f32.mrf.mxu0
      %v3103 = vadd.f32 %v3058, %v3102
      %3104 = vdwg.mxu0
      %v3105 = vand.u32 %v2846, 4294901760
      %v3106 = vsub.f32 %v2846, %v3105
      %v3107 = vand.u32 %v3106, 4294901760
      %3108 = vmatpush.msra.mxu0 %v3107
      %v3109 = vand.u32 %v2845, 4294901760
      %v3110 = vsub.f32 %v2845, %v3109
      %v3111 = vand.u32 %v3110, 4294901760
      %3112 = vmatpush.msra.mxu0 %v3111
      %v3113 = vand.u32 %v2844, 4294901760
      %v3114 = vsub.f32 %v2844, %v3113
      %v3115 = vand.u32 %v3114, 4294901760
      %3116 = vmatpush.msra.mxu0 %v3115
      %v3117 = vand.u32 %v2843, 4294901760
      %v3118 = vsub.f32 %v2843, %v3117
      %v3119 = vand.u32 %v3118, 4294901760
      %3120 = vmatpush.msra.mxu0 %v3119
      %v3121 = vand.u32 %v2842, 4294901760
      %v3122 = vsub.f32 %v2842, %v3121
      %v3123 = vand.u32 %v3122, 4294901760
      %3124 = vmatpush.msra.mxu0 %v3123
      %v3125 = vand.u32 %v2841, 4294901760
      %v3126 = vsub.f32 %v2841, %v3125
      %v3127 = vand.u32 %v3126, 4294901760
      %3128 = vmatpush.msra.mxu0 %v3127
      %v3129 = vand.u32 %v2840, 4294901760
      %v3130 = vsub.f32 %v2840, %v3129
      %v3131 = vand.u32 %v3130, 4294901760
      %3132 = vmatpush.msra.mxu0 %v3131
      %v3133 = vand.u32 %v2839, 4294901760
      %v3134 = vsub.f32 %v2839, %v3133
      %v3135 = vand.u32 %v3134, 4294901760
      %3136 = vmatpush.msra.mxu0 %v3135
      %v3137 = vand.u32 %v2838, 4294901760
      %v3138 = vsub.f32 %v2838, %v3137
      %v3139 = vand.u32 %v3138, 4294901760
      %3140 = vmatpush.msra.mxu0 %v3139
      %v3141 = vand.u32 %v2837, 4294901760
      %v3142 = vsub.f32 %v2837, %v3141
      %v3143 = vand.u32 %v3142, 4294901760
      %3144 = vmatpush.msra.mxu0 %v3143
      %v3145 = vand.u32 %v2836, 4294901760
      %v3146 = vsub.f32 %v2836, %v3145
      %v3147 = vand.u32 %v3146, 4294901760
      %3148 = vmatpush.msra.mxu0 %v3147
      %v3149 = vand.u32 %v2835, 4294901760
      %v3150 = vsub.f32 %v2835, %v3149
      %v3151 = vand.u32 %v3150, 4294901760
      %3152 = vmatpush.msra.mxu0 %v3151
      %v3153 = vand.u32 %v2834, 4294901760
      %v3154 = vsub.f32 %v2834, %v3153
      %v3155 = vand.u32 %v3154, 4294901760
      %3156 = vmatpush.msra.mxu0 %v3155
      %v3157 = vand.u32 %v2833, 4294901760
      %v3158 = vsub.f32 %v2833, %v3157
      %v3159 = vand.u32 %v3158, 4294901760
      %3160 = vmatpush.msra.mxu0 %v3159
      %v3161 = vand.u32 %v2832, 4294901760
      %v3162 = vsub.f32 %v2832, %v3161
      %v3163 = vand.u32 %v3162, 4294901760
      %3164 = vmatpush.msra.mxu0 %v3163
      %v3165 = vand.u32 %v2831, 4294901760
      %v3166 = vsub.f32 %v2831, %v3165
      %v3167 = vand.u32 %v3166, 4294901760
      %3168 = vmatpush.msra.mxu0 %v3167
      %v3169 = vand.u32 %v2829, 4294901760
      %3170 = vmatmul.f32.gmra.mxu0 %v3169
      %v3171 = vpop.f32.mrf.mxu0
      %v3172 = vadd.f32 %v3097, %v3171
      %v3173 = vand.u32 %v2830, 4294901760
      %3174 = vmatmul.f32.gmra.mxu0 %v3173
      %v3175 = vpop.f32.mrf.mxu0
      %v3176 = vadd.f32 %v3103, %v3175
      %3177 = vdwg.mxu0
      %v3178 = vand.u32 %v2846, 4294901760
      %3179 = vmatpush.msra.mxu0 %v3178
      %v3180 = vand.u32 %v2845, 4294901760
      %3181 = vmatpush.msra.mxu0 %v3180
      %v3182 = vand.u32 %v2844, 4294901760
      %3183 = vmatpush.msra.mxu0 %v3182
      %v3184 = vand.u32 %v2843, 4294901760
      %3185 = vmatpush.msra.mxu0 %v3184
      %v3186 = vand.u32 %v2842, 4294901760
      %3187 = vmatpush.msra.mxu0 %v3186
      %v3188 = vand.u32 %v2841, 4294901760
      %3189 = vmatpush.msra.mxu0 %v3188
      %v3190 = vand.u32 %v2840, 4294901760
      %3191 = vmatpush.msra.mxu0 %v3190
      %v3192 = vand.u32 %v2839, 4294901760
      %3193 = vmatpush.msra.mxu0 %v3192
      %v3194 = vand.u32 %v2838, 4294901760
      %3195 = vmatpush.msra.mxu0 %v3194
      %v3196 = vand.u32 %v2837, 4294901760
      %3197 = vmatpush.msra.mxu0 %v3196
      %v3198 = vand.u32 %v2836, 4294901760
      %3199 = vmatpush.msra.mxu0 %v3198
      %v3200 = vand.u32 %v2835, 4294901760
      %3201 = vmatpush.msra.mxu0 %v3200
      %v3202 = vand.u32 %v2834, 4294901760
      %3203 = vmatpush.msra.mxu0 %v3202
      %v3204 = vand.u32 %v2833, 4294901760
      %3205 = vmatpush.msra.mxu0 %v3204
      %v3206 = vand.u32 %v2832, 4294901760
      %3207 = vmatpush.msra.mxu0 %v3206
      %v3208 = vand.u32 %v2831, 4294901760
      %3209 = vmatpush.msra.mxu0 %v3208
      %v3210 = vand.u32 %v2829, 4294901760
      %3211 = vmatmul.f32.gmra.mxu0 %v3210
      %v3212 = vpop.f32.mrf.mxu0
      %v3213 = vadd.f32 %v3172, %v3212
      %v3214 = vand.u32 %v2830, 4294901760
      %3215 = vmatmul.f32.gmra.mxu0 %v3214
      %v3216 = vpop.f32.mrf.mxu0
      %v3217 = vadd.f32 %v3176, %v3216
      %3218 = vdwg.mxu0
      %v3219 = vadd.f32 %v2827, %v3213
      %v3220 = vadd.f32 %v2828, %v3217
      %3221 = vst [vmem:[#allocation2 + $0x2] sm:$0xff] %v3219
      %3222 = vst [vmem:[#allocation2 + $0xa] sm:$0x3f] %v3220
      %v3223 = vld [vmem:[#allocation2] sm:$0xff]
      %v3224 = vld [vmem:[#allocation2 + $0x8] sm:$0xff]
      %v3225 = vld [vmem:[%s524] sm:$0x1]
      %v3227 = vperm.slane %v3225, 0
      %v3229 = vadd.f32 %v3223, %v3227
      %v3230 = vadd.f32 %v3224, %v3227
      %v3231 = vmax.f32 %v3229, 0.0
      %v3232 = vmax.f32 %v3230, 0.0
      %3233 = vadd.xlane.f32.xlu0 %v3231
      %v3234 = vpop.xlane.xlu0 %3233
      %3235 = vadd.xlane.f32.xlu0 %v3232
      %v3236 = vpop.xlane.xlu0 %3235
      %v3237 = vmul.f32 %v3234, 0.03125
      %v3238 = vmul.f32 %v3236, 0.03125
      %v3239 = vmul.f32 %v3231, %v3231
      %v3240 = vmul.f32 %v3232, %v3232
      %3241 = vadd.xlane.f32.xlu0 %v3239
      %v3242 = vpop.xlane.xlu0 %3241
      %3243 = vadd.xlane.f32.xlu0 %v3240
      %v3244 = vpop.xlane.xlu0 %3243
      %v3245 = vmul.f32 %v3242, 0.03125
      %v3246 = vmul.f32 %v3244, 0.03125
      %v3247 = vmul.f32 %v3237, %v3237
      %v3248 = vmul.f32 %v3238, %v3238
      %v3249 = vsub.f32 %v3245, %v3247
      %v3250 = vsub.f32 %v3246, %v3248
      %v3251 = vmax.f32 %v3249, 0.0
      %v3252 = vmax.f32 %v3250, 0.0
      %v3253 = vsub.f32 %v3231, %v3237
      %v3254 = vsub.f32 %v3232, %v3238
      %v3255 = vadd.f32 %v3251, 1e-05
      %v3256 = vadd.f32 %v3252, 1e-05
      %v3257 = vrsqrt.pop %v3255
      %v3258 = vmul.f32 %v3257, %v3255
      %v3259 = vmul.f32 %v3258, %v3257
      %v3260 = vmul.f32 0.5, %v3259
      %v3261 = vsub.f32 1.5, %v3260
      %v3262 = vmul.f32 %v3257, %v3261
      %vm3263 = vweird.f32 %v3255
      %vm3264 = vweird.f32 %v3257
      %vm3265 = vmor %vm3263, %vm3264
      %v3266 = vsel %vm3265, %v3257, %v3262
      %v3267 = vrsqrt.pop %v3256
      %v3268 = vmul.f32 %v3267, %v3256
      %v3269 = vmul.f32 %v3268, %v3267
      %v3270 = vmul.f32 0.5, %v3269
      %v3271 = vsub.f32 1.5, %v3270
      %v3272 = vmul.f32 %v3267, %v3271
      %vm3273 = vweird.f32 %v3256
      %vm3274 = vweird.f32 %v3267
      %vm3275 = vmor %vm3273, %vm3274
      %v3276 = vsel %vm3275, %v3267, %v3272
      %v3277 = vmul.f32 %v3253, %v3266
      %v3278 = vmul.f32 %v3254, %v3276
      %v3279 = vld [vmem:[%s527] sm:$0x1]
      %v3281 = vperm.slane %v3279, 0
      %v3283 = vmul.f32 %v3277, %v3281
      %v3284 = vmul.f32 %v3278, %v3281
      %v3285 = vld [vmem:[%s530] sm:$0x1]
      %v3287 = vperm.slane %v3285, 0
      %v3289 = vadd.f32 %v3283, %v3287
      %v3290 = vadd.f32 %v3284, %v3287
      %v3291 = vld [vmem:[%s535] sm:$0xff]
      %v3292 = vld [vmem:[%s535 + $0x8] sm:$0xff]
      %v3293 = vld [vmem:[%s535 + $0x10] sm:$0xff]
      %v3294 = vld [vmem:[%s535 + $0x18] sm:$0xff]
      %v3295 = vld [vmem:[%s535 + $0x20] sm:$0xff]
      %v3296 = vld [vmem:[%s535 + $0x28] sm:$0xff]
      %v3297 = vld [vmem:[%s535 + $0x30] sm:$0xff]
      %v3298 = vld [vmem:[%s535 + $0x38] sm:$0xff]
      %v3299 = vld [vmem:[%s535 + $0x40] sm:$0xff]
      %v3300 = vld [vmem:[%s535 + $0x48] sm:$0xff]
      %v3301 = vld [vmem:[%s535 + $0x50] sm:$0xff]
      %v3302 = vld [vmem:[%s535 + $0x58] sm:$0xff]
      %v3303 = vld [vmem:[%s535 + $0x60] sm:$0xff]
      %v3304 = vld [vmem:[%s535 + $0x68] sm:$0xff]
      %v3305 = vld [vmem:[%s535 + $0x70] sm:$0xff]
      %v3306 = vld [vmem:[%s535 + $0x78] sm:$0xff]
      %v3307 = vld [vmem:[%s538] sm:$0x1]
      %v3309 = vperm.slane %v3307, 0
      %v3311 = vand.u32 %v3306, 4294901760
      %3312 = vmatpush.msra.mxu0 %v3311
      %v3313 = vand.u32 %v3305, 4294901760
      %3314 = vmatpush.msra.mxu0 %v3313
      %v3315 = vand.u32 %v3304, 4294901760
      %3316 = vmatpush.msra.mxu0 %v3315
      %v3317 = vand.u32 %v3303, 4294901760
      %3318 = vmatpush.msra.mxu0 %v3317
      %v3319 = vand.u32 %v3302, 4294901760
      %3320 = vmatpush.msra.mxu0 %v3319
      %v3321 = vand.u32 %v3301, 4294901760
      %3322 = vmatpush.msra.mxu0 %v3321
      %v3323 = vand.u32 %v3300, 4294901760
      %3324 = vmatpush.msra.mxu0 %v3323
      %v3325 = vand.u32 %v3299, 4294901760
      %3326 = vmatpush.msra.mxu0 %v3325
      %v3327 = vand.u32 %v3298, 4294901760
      %3328 = vmatpush.msra.mxu0 %v3327
      %v3329 = vand.u32 %v3297, 4294901760
      %3330 = vmatpush.msra.mxu0 %v3329
      %v3331 = vand.u32 %v3296, 4294901760
      %3332 = vmatpush.msra.mxu0 %v3331
      %v3333 = vand.u32 %v3295, 4294901760
      %3334 = vmatpush.msra.mxu0 %v3333
      %v3335 = vand.u32 %v3294, 4294901760
      %3336 = vmatpush.msra.mxu0 %v3335
      %v3337 = vand.u32 %v3293, 4294901760
      %3338 = vmatpush.msra.mxu0 %v3337
      %v3339 = vand.u32 %v3292, 4294901760
      %3340 = vmatpush.msra.mxu0 %v3339
      %v3341 = vand.u32 %v3291, 4294901760
      %3342 = vmatpush.msra.mxu0 %v3341
      %v3343 = vand.u32 %v3289, 4294901760
      %v3344 = vsub.f32 %v3289, %v3343
      %v3345 = vand.u32 %v3344, 4294901760
      %v3346 = vsub.f32 %v3344, %v3345
      %v3347 = vand.u32 %v3346, 4294901760
      %3348 = vmatmul.f32.gmra.mxu0 %v3347
      %v3349 = vpop.f32.mrf.mxu0
      %v3350 = vadd.f32 %v3309, %v3349
      %v3351 = vand.u32 %v3290, 4294901760
      %v3352 = vsub.f32 %v3290, %v3351
      %v3353 = vand.u32 %v3352, 4294901760
      %v3354 = vsub.f32 %v3352, %v3353
      %v3355 = vand.u32 %v3354, 4294901760
      %3356 = vmatmul.f32.gmra.mxu0 %v3355
      %v3357 = vpop.f32.mrf.mxu0
      %v3358 = vadd.f32 %v3309, %v3357
      %3359 = vdwg.mxu0
      %v3360 = vand.u32 %v3306, 4294901760
      %v3361 = vsub.f32 %v3306, %v3360
      %v3362 = vand.u32 %v3361, 4294901760
      %v3363 = vsub.f32 %v3361, %v3362
      %v3364 = vand.u32 %v3363, 4294901760
      %3365 = vmatpush.msra.mxu0 %v3364
      %v3366 = vand.u32 %v3305, 4294901760
      %v3367 = vsub.f32 %v3305, %v3366
      %v3368 = vand.u32 %v3367, 4294901760
      %v3369 = vsub.f32 %v3367, %v3368
      %v3370 = vand.u32 %v3369, 4294901760
      %3371 = vmatpush.msra.mxu0 %v3370
      %v3372 = vand.u32 %v3304, 4294901760
      %v3373 = vsub.f32 %v3304, %v3372
      %v3374 = vand.u32 %v3373, 4294901760
      %v3375 = vsub.f32 %v3373, %v3374
      %v3376 = vand.u32 %v3375, 4294901760
      %3377 = vmatpush.msra.mxu0 %v3376
      %v3378 = vand.u32 %v3303, 4294901760
      %v3379 = vsub.f32 %v3303, %v3378
      %v3380 = vand.u32 %v3379, 4294901760
      %v3381 = vsub.f32 %v3379, %v3380
      %v3382 = vand.u32 %v3381, 4294901760
      %3383 = vmatpush.msra.mxu0 %v3382
      %v3384 = vand.u32 %v3302, 4294901760
      %v3385 = vsub.f32 %v3302, %v3384
      %v3386 = vand.u32 %v3385, 4294901760
      %v3387 = vsub.f32 %v3385, %v3386
      %v3388 = vand.u32 %v3387, 4294901760
      %3389 = vmatpush.msra.mxu0 %v3388
      %v3390 = vand.u32 %v3301, 4294901760
      %v3391 = vsub.f32 %v3301, %v3390
      %v3392 = vand.u32 %v3391, 4294901760
      %v3393 = vsub.f32 %v3391, %v3392
      %v3394 = vand.u32 %v3393, 4294901760
      %3395 = vmatpush.msra.mxu0 %v3394
      %v3396 = vand.u32 %v3300, 4294901760
      %v3397 = vsub.f32 %v3300, %v3396
      %v3398 = vand.u32 %v3397, 4294901760
      %v3399 = vsub.f32 %v3397, %v3398
      %v3400 = vand.u32 %v3399, 4294901760
      %3401 = vmatpush.msra.mxu0 %v3400
      %v3402 = vand.u32 %v3299, 4294901760
      %v3403 = vsub.f32 %v3299, %v3402
      %v3404 = vand.u32 %v3403, 4294901760
      %v3405 = vsub.f32 %v3403, %v3404
      %v3406 = vand.u32 %v3405, 4294901760
      %3407 = vmatpush.msra.mxu0 %v3406
      %v3408 = vand.u32 %v3298, 4294901760
      %v3409 = vsub.f32 %v3298, %v3408
      %v3410 = vand.u32 %v3409, 4294901760
      %v3411 = vsub.f32 %v3409, %v3410
      %v3412 = vand.u32 %v3411, 4294901760
      %3413 = vmatpush.msra.mxu0 %v3412
      %v3414 = vand.u32 %v3297, 4294901760
      %v3415 = vsub.f32 %v3297, %v3414
      %v3416 = vand.u32 %v3415, 4294901760
      %v3417 = vsub.f32 %v3415, %v3416
      %v3418 = vand.u32 %v3417, 4294901760
      %3419 = vmatpush.msra.mxu0 %v3418
      %v3420 = vand.u32 %v3296, 4294901760
      %v3421 = vsub.f32 %v3296, %v3420
      %v3422 = vand.u32 %v3421, 4294901760
      %v3423 = vsub.f32 %v3421, %v3422
      %v3424 = vand.u32 %v3423, 4294901760
      %3425 = vmatpush.msra.mxu0 %v3424
      %v3426 = vand.u32 %v3295, 4294901760
      %v3427 = vsub.f32 %v3295, %v3426
      %v3428 = vand.u32 %v3427, 4294901760
      %v3429 = vsub.f32 %v3427, %v3428
      %v3430 = vand.u32 %v3429, 4294901760
      %3431 = vmatpush.msra.mxu0 %v3430
      %v3432 = vand.u32 %v3294, 4294901760
      %v3433 = vsub.f32 %v3294, %v3432
      %v3434 = vand.u32 %v3433, 4294901760
      %v3435 = vsub.f32 %v3433, %v3434
      %v3436 = vand.u32 %v3435, 4294901760
      %3437 = vmatpush.msra.mxu0 %v3436
      %v3438 = vand.u32 %v3293, 4294901760
      %v3439 = vsub.f32 %v3293, %v3438
      %v3440 = vand.u32 %v3439, 4294901760
      %v3441 = vsub.f32 %v3439, %v3440
      %v3442 = vand.u32 %v3441, 4294901760
      %3443 = vmatpush.msra.mxu0 %v3442
      %v3444 = vand.u32 %v3292, 4294901760
      %v3445 = vsub.f32 %v3292, %v3444
      %v3446 = vand.u32 %v3445, 4294901760
      %v3447 = vsub.f32 %v3445, %v3446
      %v3448 = vand.u32 %v3447, 4294901760
      %3449 = vmatpush.msra.mxu0 %v3448
      %v3450 = vand.u32 %v3291, 4294901760
      %v3451 = vsub.f32 %v3291, %v3450
      %v3452 = vand.u32 %v3451, 4294901760
      %v3453 = vsub.f32 %v3451, %v3452
      %v3454 = vand.u32 %v3453, 4294901760
      %3455 = vmatpush.msra.mxu0 %v3454
      %v3456 = vand.u32 %v3289, 4294901760
      %3457 = vmatmul.f32.gmra.mxu0 %v3456
      %v3458 = vpop.f32.mrf.mxu0
      %v3459 = vadd.f32 %v3350, %v3458
      %v3460 = vand.u32 %v3290, 4294901760
      %3461 = vmatmul.f32.gmra.mxu0 %v3460
      %v3462 = vpop.f32.mrf.mxu0
      %v3463 = vadd.f32 %v3358, %v3462
      %3464 = vdwg.mxu0
      %v3465 = vand.u32 %v3306, 4294901760
      %v3466 = vsub.f32 %v3306, %v3465
      %3467 = vmatpush.msra.mxu0 %v3466
      %v3468 = vand.u32 %v3305, 4294901760
      %v3469 = vsub.f32 %v3305, %v3468
      %3470 = vmatpush.msra.mxu0 %v3469
      %v3471 = vand.u32 %v3304, 4294901760
      %v3472 = vsub.f32 %v3304, %v3471
      %3473 = vmatpush.msra.mxu0 %v3472
      %v3474 = vand.u32 %v3303, 4294901760
      %v3475 = vsub.f32 %v3303, %v3474
      %3476 = vmatpush.msra.mxu0 %v3475
      %v3477 = vand.u32 %v3302, 4294901760
      %v3478 = vsub.f32 %v3302, %v3477
      %3479 = vmatpush.msra.mxu0 %v3478
      %v3480 = vand.u32 %v3301, 4294901760
      %v3481 = vsub.f32 %v3301, %v3480
      %3482 = vmatpush.msra.mxu0 %v3481
      %v3483 = vand.u32 %v3300, 4294901760
      %v3484 = vsub.f32 %v3300, %v3483
      %3485 = vmatpush.msra.mxu0 %v3484
      %v3486 = vand.u32 %v3299, 4294901760
      %v3487 = vsub.f32 %v3299, %v3486
      %3488 = vmatpush.msra.mxu0 %v3487
      %v3489 = vand.u32 %v3298, 4294901760
      %v3490 = vsub.f32 %v3298, %v3489
      %3491 = vmatpush.msra.mxu0 %v3490
      %v3492 = vand.u32 %v3297, 4294901760
      %v3493 = vsub.f32 %v3297, %v3492
      %3494 = vmatpush.msra.mxu0 %v3493
      %v3495 = vand.u32 %v3296, 4294901760
      %v3496 = vsub.f32 %v3296, %v3495
      %3497 = vmatpush.msra.mxu0 %v3496
      %v3498 = vand.u32 %v3295, 4294901760
      %v3499 = vsub.f32 %v3295, %v3498
      %3500 = vmatpush.msra.mxu0 %v3499
      %v3501 = vand.u32 %v3294, 4294901760
      %v3502 = vsub.f32 %v3294, %v3501
      %3503 = vmatpush.msra.mxu0 %v3502
      %v3504 = vand.u32 %v3293, 4294901760
      %v3505 = vsub.f32 %v3293, %v3504
      %3506 = vmatpush.msra.mxu0 %v3505
      %v3507 = vand.u32 %v3292, 4294901760
      %v3508 = vsub.f32 %v3292, %v3507
      %3509 = vmatpush.msra.mxu0 %v3508
      %v3510 = vand.u32 %v3291, 4294901760
      %v3511 = vsub.f32 %v3291, %v3510
      %3512 = vmatpush.msra.mxu0 %v3511
      %v3513 = vand.u32 %v3289, 4294901760
      %v3514 = vsub.f32 %v3289, %v3513
      %3515 = vmatmul.f32.gmra.mxu0 %v3514
      %v3516 = vpop.f32.mrf.mxu0
      %v3517 = vadd.f32 %v3459, %v3516
      %v3518 = vand.u32 %v3290, 4294901760
      %v3519 = vsub.f32 %v3290, %v3518
      %3520 = vmatmul.f32.gmra.mxu0 %v3519
      %v3521 = vpop.f32.mrf.mxu0
      %v3522 = vadd.f32 %v3463, %v3521
      %3523 = vdwg.mxu0
      %v3524 = vand.u32 %v3306, 4294901760
      %3525 = vmatpush.msra.mxu0 %v3524
      %v3526 = vand.u32 %v3305, 4294901760
      %3527 = vmatpush.msra.mxu0 %v3526
      %v3528 = vand.u32 %v3304, 4294901760
      %3529 = vmatpush.msra.mxu0 %v3528
      %v3530 = vand.u32 %v3303, 4294901760
      %3531 = vmatpush.msra.mxu0 %v3530
      %v3532 = vand.u32 %v3302, 4294901760
      %3533 = vmatpush.msra.mxu0 %v3532
      %v3534 = vand.u32 %v3301, 4294901760
      %3535 = vmatpush.msra.mxu0 %v3534
      %v3536 = vand.u32 %v3300, 4294901760
      %3537 = vmatpush.msra.mxu0 %v3536
      %v3538 = vand.u32 %v3299, 4294901760
      %3539 = vmatpush.msra.mxu0 %v3538
      %v3540 = vand.u32 %v3298, 4294901760
      %3541 = vmatpush.msra.mxu0 %v3540
      %v3542 = vand.u32 %v3297, 4294901760
      %3543 = vmatpush.msra.mxu0 %v3542
      %v3544 = vand.u32 %v3296, 4294901760
      %3545 = vmatpush.msra.mxu0 %v3544
      %v3546 = vand.u32 %v3295, 4294901760
      %3547 = vmatpush.msra.mxu0 %v3546
      %v3548 = vand.u32 %v3294, 4294901760
      %3549 = vmatpush.msra.mxu0 %v3548
      %v3550 = vand.u32 %v3293, 4294901760
      %3551 = vmatpush.msra.mxu0 %v3550
      %v3552 = vand.u32 %v3292, 4294901760
      %3553 = vmatpush.msra.mxu0 %v3552
      %v3554 = vand.u32 %v3291, 4294901760
      %3555 = vmatpush.msra.mxu0 %v3554
      %v3556 = vand.u32 %v3289, 4294901760
      %v3557 = vsub.f32 %v3289, %v3556
      %v3558 = vand.u32 %v3557, 4294901760
      %3559 = vmatmul.f32.gmra.mxu0 %v3558
      %v3560 = vpop.f32.mrf.mxu0
      %v3561 = vadd.f32 %v3517, %v3560
      %v3562 = vand.u32 %v3290, 4294901760
      %v3563 = vsub.f32 %v3290, %v3562
      %v3564 = vand.u32 %v3563, 4294901760
      %3565 = vmatmul.f32.gmra.mxu0 %v3564
      %v3566 = vpop.f32.mrf.mxu0
      %v3567 = vadd.f32 %v3522, %v3566
      %3568 = vdwg.mxu0
      %v3569 = vand.u32 %v3306, 4294901760
      %v3570 = vsub.f32 %v3306, %v3569
      %v3571 = vand.u32 %v3570, 4294901760
      %3572 = vmatpush.msra.mxu0 %v3571
      %v3573 = vand.u32 %v3305, 4294901760
      %v3574 = vsub.f32 %v3305, %v3573
      %v3575 = vand.u32 %v3574, 4294901760
      %3576 = vmatpush.msra.mxu0 %v3575
      %v3577 = vand.u32 %v3304, 4294901760
      %v3578 = vsub.f32 %v3304, %v3577
      %v3579 = vand.u32 %v3578, 4294901760
      %3580 = vmatpush.msra.mxu0 %v3579
      %v3581 = vand.u32 %v3303, 4294901760
      %v3582 = vsub.f32 %v3303, %v3581
      %v3583 = vand.u32 %v3582, 4294901760
      %3584 = vmatpush.msra.mxu0 %v3583
      %v3585 = vand.u32 %v3302, 4294901760
      %v3586 = vsub.f32 %v3302, %v3585
      %v3587 = vand.u32 %v3586, 4294901760
      %3588 = vmatpush.msra.mxu0 %v3587
      %v3589 = vand.u32 %v3301, 4294901760
      %v3590 = vsub.f32 %v3301, %v3589
      %v3591 = vand.u32 %v3590, 4294901760
      %3592 = vmatpush.msra.mxu0 %v3591
      %v3593 = vand.u32 %v3300, 4294901760
      %v3594 = vsub.f32 %v3300, %v3593
      %v3595 = vand.u32 %v3594, 4294901760
      %3596 = vmatpush.msra.mxu0 %v3595
      %v3597 = vand.u32 %v3299, 4294901760
      %v3598 = vsub.f32 %v3299, %v3597
      %v3599 = vand.u32 %v3598, 4294901760
      %3600 = vmatpush.msra.mxu0 %v3599
      %v3601 = vand.u32 %v3298, 4294901760
      %v3602 = vsub.f32 %v3298, %v3601
      %v3603 = vand.u32 %v3602, 4294901760
      %3604 = vmatpush.msra.mxu0 %v3603
      %v3605 = vand.u32 %v3297, 4294901760
      %v3606 = vsub.f32 %v3297, %v3605
      %v3607 = vand.u32 %v3606, 4294901760
      %3608 = vmatpush.msra.mxu0 %v3607
      %v3609 = vand.u32 %v3296, 4294901760
      %v3610 = vsub.f32 %v3296, %v3609
      %v3611 = vand.u32 %v3610, 4294901760
      %3612 = vmatpush.msra.mxu0 %v3611
      %v3613 = vand.u32 %v3295, 4294901760
      %v3614 = vsub.f32 %v3295, %v3613
      %v3615 = vand.u32 %v3614, 4294901760
      %3616 = vmatpush.msra.mxu0 %v3615
      %v3617 = vand.u32 %v3294, 4294901760
      %v3618 = vsub.f32 %v3294, %v3617
      %v3619 = vand.u32 %v3618, 4294901760
      %3620 = vmatpush.msra.mxu0 %v3619
      %v3621 = vand.u32 %v3293, 4294901760
      %v3622 = vsub.f32 %v3293, %v3621
      %v3623 = vand.u32 %v3622, 4294901760
      %3624 = vmatpush.msra.mxu0 %v3623
      %v3625 = vand.u32 %v3292, 4294901760
      %v3626 = vsub.f32 %v3292, %v3625
      %v3627 = vand.u32 %v3626, 4294901760
      %3628 = vmatpush.msra.mxu0 %v3627
      %v3629 = vand.u32 %v3291, 4294901760
      %v3630 = vsub.f32 %v3291, %v3629
      %v3631 = vand.u32 %v3630, 4294901760
      %3632 = vmatpush.msra.mxu0 %v3631
      %v3633 = vand.u32 %v3289, 4294901760
      %3634 = vmatmul.f32.gmra.mxu0 %v3633
      %v3635 = vpop.f32.mrf.mxu0
      %v3636 = vadd.f32 %v3561, %v3635
      %v3637 = vand.u32 %v3290, 4294901760
      %3638 = vmatmul.f32.gmra.mxu0 %v3637
      %v3639 = vpop.f32.mrf.mxu0
      %v3640 = vadd.f32 %v3567, %v3639
      %3641 = vdwg.mxu0
      %v3642 = vand.u32 %v3306, 4294901760
      %3643 = vmatpush.msra.mxu0 %v3642
      %v3644 = vand.u32 %v3305, 4294901760
      %3645 = vmatpush.msra.mxu0 %v3644
      %v3646 = vand.u32 %v3304, 4294901760
      %3647 = vmatpush.msra.mxu0 %v3646
      %v3648 = vand.u32 %v3303, 4294901760
      %3649 = vmatpush.msra.mxu0 %v3648
      %v3650 = vand.u32 %v3302, 4294901760
      %3651 = vmatpush.msra.mxu0 %v3650
      %v3652 = vand.u32 %v3301, 4294901760
      %3653 = vmatpush.msra.mxu0 %v3652
      %v3654 = vand.u32 %v3300, 4294901760
      %3655 = vmatpush.msra.mxu0 %v3654
      %v3656 = vand.u32 %v3299, 4294901760
      %3657 = vmatpush.msra.mxu0 %v3656
      %v3658 = vand.u32 %v3298, 4294901760
      %3659 = vmatpush.msra.mxu0 %v3658
      %v3660 = vand.u32 %v3297, 4294901760
      %3661 = vmatpush.msra.mxu0 %v3660
      %v3662 = vand.u32 %v3296, 4294901760
      %3663 = vmatpush.msra.mxu0 %v3662
      %v3664 = vand.u32 %v3295, 4294901760
      %3665 = vmatpush.msra.mxu0 %v3664
      %v3666 = vand.u32 %v3294, 4294901760
      %3667 = vmatpush.msra.mxu0 %v3666
      %v3668 = vand.u32 %v3293, 4294901760
      %3669 = vmatpush.msra.mxu0 %v3668
      %v3670 = vand.u32 %v3292, 4294901760
      %3671 = vmatpush.msra.mxu0 %v3670
      %v3672 = vand.u32 %v3291, 4294901760
      %3673 = vmatpush.msra.mxu0 %v3672
      %v3674 = vand.u32 %v3289, 4294901760
      %3675 = vmatmul.f32.gmra.mxu0 %v3674
      %v3676 = vpop.f32.mrf.mxu0
      %v3677 = vadd.f32 %v3636, %v3676
      %v3678 = vand.u32 %v3290, 4294901760
      %3679 = vmatmul.f32.gmra.mxu0 %v3678
      %v3680 = vpop.f32.mrf.mxu0
      %v3681 = vadd.f32 %v3640, %v3680
      %3682 = vdwg.mxu0
      %v3683 = vmax.f32 %v3677, 0.0
      %v3684 = vmax.f32 %v3681, 0.0
      %v3685 = vld [vmem:[%s543] sm:$0xff]
      %v3686 = vld [vmem:[%s543 + $0x8] sm:$0xff]
      %v3687 = vld [vmem:[%s543 + $0x10] sm:$0xff]
      %v3688 = vld [vmem:[%s543 + $0x18] sm:$0xff]
      %v3689 = vld [vmem:[%s543 + $0x20] sm:$0xff]
      %v3690 = vld [vmem:[%s543 + $0x28] sm:$0xff]
      %v3691 = vld [vmem:[%s543 + $0x30] sm:$0xff]
      %v3692 = vld [vmem:[%s543 + $0x38] sm:$0xff]
      %v3693 = vld [vmem:[%s543 + $0x40] sm:$0xff]
      %v3694 = vld [vmem:[%s543 + $0x48] sm:$0xff]
      %v3695 = vld [vmem:[%s543 + $0x50] sm:$0xff]
      %v3696 = vld [vmem:[%s543 + $0x58] sm:$0xff]
      %v3697 = vld [vmem:[%s543 + $0x60] sm:$0xff]
      %v3698 = vld [vmem:[%s543 + $0x68] sm:$0xff]
      %v3699 = vld [vmem:[%s543 + $0x70] sm:$0xff]
      %v3700 = vld [vmem:[%s543 + $0x78] sm:$0xff]
      %v3701 = vld [vmem:[%s546] sm:$0x1]
      %v3703 = vperm.slane %v3701, 0
      %v3705 = vand.u32 %v3700, 4294901760
      %3706 = vmatpush.msra.mxu0 %v3705
      %v3707 = vand.u32 %v3699, 4294901760
      %3708 = vmatpush.msra.mxu0 %v3707
      %v3709 = vand.u32 %v3698, 4294901760
      %3710 = vmatpush.msra.mxu0 %v3709
      %v3711 = vand.u32 %v3697, 4294901760
      %3712 = vmatpush.msra.mxu0 %v3711
      %v3713 = vand.u32 %v3696, 4294901760
      %3714 = vmatpush.msra.mxu0 %v3713
      %v3715 = vand.u32 %v3695, 4294901760
      %3716 = vmatpush.msra.mxu0 %v3715
      %v3717 = vand.u32 %v3694, 4294901760
      %3718 = vmatpush.msra.mxu0 %v3717
      %v3719 = vand.u32 %v3693, 4294901760
      %3720 = vmatpush.msra.mxu0 %v3719
      %v3721 = vand.u32 %v3692, 4294901760
      %3722 = vmatpush.msra.mxu0 %v3721
      %v3723 = vand.u32 %v3691, 4294901760
      %3724 = vmatpush.msra.mxu0 %v3723
      %v3725 = vand.u32 %v3690, 4294901760
      %3726 = vmatpush.msra.mxu0 %v3725
      %v3727 = vand.u32 %v3689, 4294901760
      %3728 = vmatpush.msra.mxu0 %v3727
      %v3729 = vand.u32 %v3688, 4294901760
      %3730 = vmatpush.msra.mxu0 %v3729
      %v3731 = vand.u32 %v3687, 4294901760
      %3732 = vmatpush.msra.mxu0 %v3731
      %v3733 = vand.u32 %v3686, 4294901760
      %3734 = vmatpush.msra.mxu0 %v3733
      %v3735 = vand.u32 %v3685, 4294901760
      %3736 = vmatpush.msra.mxu0 %v3735
      %v3737 = vand.u32 %v3683, 4294901760
      %v3738 = vsub.f32 %v3683, %v3737
      %v3739 = vand.u32 %v3738, 4294901760
      %v3740 = vsub.f32 %v3738, %v3739
      %v3741 = vand.u32 %v3740, 4294901760
      %3742 = vmatmul.f32.gmra.mxu0 %v3741
      %v3743 = vpop.f32.mrf.mxu0
      %v3744 = vadd.f32 %v3703, %v3743
      %v3745 = vand.u32 %v3684, 4294901760
      %v3746 = vsub.f32 %v3684, %v3745
      %v3747 = vand.u32 %v3746, 4294901760
      %v3748 = vsub.f32 %v3746, %v3747
      %v3749 = vand.u32 %v3748, 4294901760
      %3750 = vmatmul.f32.gmra.mxu0 %v3749
      %v3751 = vpop.f32.mrf.mxu0
      %v3752 = vadd.f32 %v3703, %v3751
      %3753 = vdwg.mxu0
      %v3754 = vand.u32 %v3700, 4294901760
      %v3755 = vsub.f32 %v3700, %v3754
      %v3756 = vand.u32 %v3755, 4294901760
      %v3757 = vsub.f32 %v3755, %v3756
      %v3758 = vand.u32 %v3757, 4294901760
      %3759 = vmatpush.msra.mxu0 %v3758
      %v3760 = vand.u32 %v3699, 4294901760
      %v3761 = vsub.f32 %v3699, %v3760
      %v3762 = vand.u32 %v3761, 4294901760
      %v3763 = vsub.f32 %v3761, %v3762
      %v3764 = vand.u32 %v3763, 4294901760
      %3765 = vmatpush.msra.mxu0 %v3764
      %v3766 = vand.u32 %v3698, 4294901760
      %v3767 = vsub.f32 %v3698, %v3766
      %v3768 = vand.u32 %v3767, 4294901760
      %v3769 = vsub.f32 %v3767, %v3768
      %v3770 = vand.u32 %v3769, 4294901760
      %3771 = vmatpush.msra.mxu0 %v3770
      %v3772 = vand.u32 %v3697, 4294901760
      %v3773 = vsub.f32 %v3697, %v3772
      %v3774 = vand.u32 %v3773, 4294901760
      %v3775 = vsub.f32 %v3773, %v3774
      %v3776 = vand.u32 %v3775, 4294901760
      %3777 = vmatpush.msra.mxu0 %v3776
      %v3778 = vand.u32 %v3696, 4294901760
      %v3779 = vsub.f32 %v3696, %v3778
      %v3780 = vand.u32 %v3779, 4294901760
      %v3781 = vsub.f32 %v3779, %v3780
      %v3782 = vand.u32 %v3781, 4294901760
      %3783 = vmatpush.msra.mxu0 %v3782
      %v3784 = vand.u32 %v3695, 4294901760
      %v3785 = vsub.f32 %v3695, %v3784
      %v3786 = vand.u32 %v3785, 4294901760
      %v3787 = vsub.f32 %v3785, %v3786
      %v3788 = vand.u32 %v3787, 4294901760
      %3789 = vmatpush.msra.mxu0 %v3788
      %v3790 = vand.u32 %v3694, 4294901760
      %v3791 = vsub.f32 %v3694, %v3790
      %v3792 = vand.u32 %v3791, 4294901760
      %v3793 = vsub.f32 %v3791, %v3792
      %v3794 = vand.u32 %v3793, 4294901760
      %3795 = vmatpush.msra.mxu0 %v3794
      %v3796 = vand.u32 %v3693, 4294901760
      %v3797 = vsub.f32 %v3693, %v3796
      %v3798 = vand.u32 %v3797, 4294901760
      %v3799 = vsub.f32 %v3797, %v3798
      %v3800 = vand.u32 %v3799, 4294901760
      %3801 = vmatpush.msra.mxu0 %v3800
      %v3802 = vand.u32 %v3692, 4294901760
      %v3803 = vsub.f32 %v3692, %v3802
      %v3804 = vand.u32 %v3803, 4294901760
      %v3805 = vsub.f32 %v3803, %v3804
      %v3806 = vand.u32 %v3805, 4294901760
      %3807 = vmatpush.msra.mxu0 %v3806
      %v3808 = vand.u32 %v3691, 4294901760
      %v3809 = vsub.f32 %v3691, %v3808
      %v3810 = vand.u32 %v3809, 4294901760
      %v3811 = vsub.f32 %v3809, %v3810
      %v3812 = vand.u32 %v3811, 4294901760
      %3813 = vmatpush.msra.mxu0 %v3812
      %v3814 = vand.u32 %v3690, 4294901760
      %v3815 = vsub.f32 %v3690, %v3814
      %v3816 = vand.u32 %v3815, 4294901760
      %v3817 = vsub.f32 %v3815, %v3816
      %v3818 = vand.u32 %v3817, 4294901760
      %3819 = vmatpush.msra.mxu0 %v3818
      %v3820 = vand.u32 %v3689, 4294901760
      %v3821 = vsub.f32 %v3689, %v3820
      %v3822 = vand.u32 %v3821, 4294901760
      %v3823 = vsub.f32 %v3821, %v3822
      %v3824 = vand.u32 %v3823, 4294901760
      %3825 = vmatpush.msra.mxu0 %v3824
      %v3826 = vand.u32 %v3688, 4294901760
      %v3827 = vsub.f32 %v3688, %v3826
      %v3828 = vand.u32 %v3827, 4294901760
      %v3829 = vsub.f32 %v3827, %v3828
      %v3830 = vand.u32 %v3829, 4294901760
      %3831 = vmatpush.msra.mxu0 %v3830
      %v3832 = vand.u32 %v3687, 4294901760
      %v3833 = vsub.f32 %v3687, %v3832
      %v3834 = vand.u32 %v3833, 4294901760
      %v3835 = vsub.f32 %v3833, %v3834
      %v3836 = vand.u32 %v3835, 4294901760
      %3837 = vmatpush.msra.mxu0 %v3836
      %v3838 = vand.u32 %v3686, 4294901760
      %v3839 = vsub.f32 %v3686, %v3838
      %v3840 = vand.u32 %v3839, 4294901760
      %v3841 = vsub.f32 %v3839, %v3840
      %v3842 = vand.u32 %v3841, 4294901760
      %3843 = vmatpush.msra.mxu0 %v3842
      %v3844 = vand.u32 %v3685, 4294901760
      %v3845 = vsub.f32 %v3685, %v3844
      %v3846 = vand.u32 %v3845, 4294901760
      %v3847 = vsub.f32 %v3845, %v3846
      %v3848 = vand.u32 %v3847, 4294901760
      %3849 = vmatpush.msra.mxu0 %v3848
      %v3850 = vand.u32 %v3683, 4294901760
      %3851 = vmatmul.f32.gmra.mxu0 %v3850
      %v3852 = vpop.f32.mrf.mxu0
      %v3853 = vadd.f32 %v3744, %v3852
      %v3854 = vand.u32 %v3684, 4294901760
      %3855 = vmatmul.f32.gmra.mxu0 %v3854
      %v3856 = vpop.f32.mrf.mxu0
      %v3857 = vadd.f32 %v3752, %v3856
      %3858 = vdwg.mxu0
      %v3859 = vand.u32 %v3700, 4294901760
      %v3860 = vsub.f32 %v3700, %v3859
      %3861 = vmatpush.msra.mxu0 %v3860
      %v3862 = vand.u32 %v3699, 4294901760
      %v3863 = vsub.f32 %v3699, %v3862
      %3864 = vmatpush.msra.mxu0 %v3863
      %v3865 = vand.u32 %v3698, 4294901760
      %v3866 = vsub.f32 %v3698, %v3865
      %3867 = vmatpush.msra.mxu0 %v3866
      %v3868 = vand.u32 %v3697, 4294901760
      %v3869 = vsub.f32 %v3697, %v3868
      %3870 = vmatpush.msra.mxu0 %v3869
      %v3871 = vand.u32 %v3696, 4294901760
      %v3872 = vsub.f32 %v3696, %v3871
      %3873 = vmatpush.msra.mxu0 %v3872
      %v3874 = vand.u32 %v3695, 4294901760
      %v3875 = vsub.f32 %v3695, %v3874
      %3876 = vmatpush.msra.mxu0 %v3875
      %v3877 = vand.u32 %v3694, 4294901760
      %v3878 = vsub.f32 %v3694, %v3877
      %3879 = vmatpush.msra.mxu0 %v3878
      %v3880 = vand.u32 %v3693, 4294901760
      %v3881 = vsub.f32 %v3693, %v3880
      %3882 = vmatpush.msra.mxu0 %v3881
      %v3883 = vand.u32 %v3692, 4294901760
      %v3884 = vsub.f32 %v3692, %v3883
      %3885 = vmatpush.msra.mxu0 %v3884
      %v3886 = vand.u32 %v3691, 4294901760
      %v3887 = vsub.f32 %v3691, %v3886
      %3888 = vmatpush.msra.mxu0 %v3887
      %v3889 = vand.u32 %v3690, 4294901760
      %v3890 = vsub.f32 %v3690, %v3889
      %3891 = vmatpush.msra.mxu0 %v3890
      %v3892 = vand.u32 %v3689, 4294901760
      %v3893 = vsub.f32 %v3689, %v3892
      %3894 = vmatpush.msra.mxu0 %v3893
      %v3895 = vand.u32 %v3688, 4294901760
      %v3896 = vsub.f32 %v3688, %v3895
      %3897 = vmatpush.msra.mxu0 %v3896
      %v3898 = vand.u32 %v3687, 4294901760
      %v3899 = vsub.f32 %v3687, %v3898
      %3900 = vmatpush.msra.mxu0 %v3899
      %v3901 = vand.u32 %v3686, 4294901760
      %v3902 = vsub.f32 %v3686, %v3901
      %3903 = vmatpush.msra.mxu0 %v3902
      %v3904 = vand.u32 %v3685, 4294901760
      %v3905 = vsub.f32 %v3685, %v3904
      %3906 = vmatpush.msra.mxu0 %v3905
      %v3907 = vand.u32 %v3683, 4294901760
      %v3908 = vsub.f32 %v3683, %v3907
      %3909 = vmatmul.f32.gmra.mxu0 %v3908
      %v3910 = vpop.f32.mrf.mxu0
      %v3911 = vadd.f32 %v3853, %v3910
      %v3912 = vand.u32 %v3684, 4294901760
      %v3913 = vsub.f32 %v3684, %v3912
      %3914 = vmatmul.f32.gmra.mxu0 %v3913
      %v3915 = vpop.f32.mrf.mxu0
      %v3916 = vadd.f32 %v3857, %v3915
      %3917 = vdwg.mxu0
      %v3918 = vand.u32 %v3700, 4294901760
      %3919 = vmatpush.msra.mxu0 %v3918
      %v3920 = vand.u32 %v3699, 4294901760
      %3921 = vmatpush.msra.mxu0 %v3920
      %v3922 = vand.u32 %v3698, 4294901760
      %3923 = vmatpush.msra.mxu0 %v3922
      %v3924 = vand.u32 %v3697, 4294901760
      %3925 = vmatpush.msra.mxu0 %v3924
      %v3926 = vand.u32 %v3696, 4294901760
      %3927 = vmatpush.msra.mxu0 %v3926
      %v3928 = vand.u32 %v3695, 4294901760
      %3929 = vmatpush.msra.mxu0 %v3928
      %v3930 = vand.u32 %v3694, 4294901760
      %3931 = vmatpush.msra.mxu0 %v3930
      %v3932 = vand.u32 %v3693, 4294901760
      %3933 = vmatpush.msra.mxu0 %v3932
      %v3934 = vand.u32 %v3692, 4294901760
      %3935 = vmatpush.msra.mxu0 %v3934
      %v3936 = vand.u32 %v3691, 4294901760
      %3937 = vmatpush.msra.mxu0 %v3936
      %v3938 = vand.u32 %v3690, 4294901760
      %3939 = vmatpush.msra.mxu0 %v3938
      %v3940 = vand.u32 %v3689, 4294901760
      %3941 = vmatpush.msra.mxu0 %v3940
      %v3942 = vand.u32 %v3688, 4294901760
      %3943 = vmatpush.msra.mxu0 %v3942
      %v3944 = vand.u32 %v3687, 4294901760
      %3945 = vmatpush.msra.mxu0 %v3944
      %v3946 = vand.u32 %v3686, 4294901760
      %3947 = vmatpush.msra.mxu0 %v3946
      %v3948 = vand.u32 %v3685, 4294901760
      %3949 = vmatpush.msra.mxu0 %v3948
      %v3950 = vand.u32 %v3683, 4294901760
      %v3951 = vsub.f32 %v3683, %v3950
      %v3952 = vand.u32 %v3951, 4294901760
      %3953 = vmatmul.f32.gmra.mxu0 %v3952
      %v3954 = vpop.f32.mrf.mxu0
      %v3955 = vadd.f32 %v3911, %v3954
      %v3956 = vand.u32 %v3684, 4294901760
      %v3957 = vsub.f32 %v3684, %v3956
      %v3958 = vand.u32 %v3957, 4294901760
      %3959 = vmatmul.f32.gmra.mxu0 %v3958
      %v3960 = vpop.f32.mrf.mxu0
      %v3961 = vadd.f32 %v3916, %v3960
      %3962 = vdwg.mxu0
      %v3963 = vand.u32 %v3700, 4294901760
      %v3964 = vsub.f32 %v3700, %v3963
      %v3965 = vand.u32 %v3964, 4294901760
      %3966 = vmatpush.msra.mxu0 %v3965
      %v3967 = vand.u32 %v3699, 4294901760
      %v3968 = vsub.f32 %v3699, %v3967
      %v3969 = vand.u32 %v3968, 4294901760
      %3970 = vmatpush.msra.mxu0 %v3969
      %v3971 = vand.u32 %v3698, 4294901760
      %v3972 = vsub.f32 %v3698, %v3971
      %v3973 = vand.u32 %v3972, 4294901760
      %3974 = vmatpush.msra.mxu0 %v3973
      %v3975 = vand.u32 %v3697, 4294901760
      %v3976 = vsub.f32 %v3697, %v3975
      %v3977 = vand.u32 %v3976, 4294901760
      %3978 = vmatpush.msra.mxu0 %v3977
      %v3979 = vand.u32 %v3696, 4294901760
      %v3980 = vsub.f32 %v3696, %v3979
      %v3981 = vand.u32 %v3980, 4294901760
      %3982 = vmatpush.msra.mxu0 %v3981
      %v3983 = vand.u32 %v3695, 4294901760
      %v3984 = vsub.f32 %v3695, %v3983
      %v3985 = vand.u32 %v3984, 4294901760
      %3986 = vmatpush.msra.mxu0 %v3985
      %v3987 = vand.u32 %v3694, 4294901760
      %v3988 = vsub.f32 %v3694, %v3987
      %v3989 = vand.u32 %v3988, 4294901760
      %3990 = vmatpush.msra.mxu0 %v3989
      %v3991 = vand.u32 %v3693, 4294901760
      %v3992 = vsub.f32 %v3693, %v3991
      %v3993 = vand.u32 %v3992, 4294901760
      %3994 = vmatpush.msra.mxu0 %v3993
      %v3995 = vand.u32 %v3692, 4294901760
      %v3996 = vsub.f32 %v3692, %v3995
      %v3997 = vand.u32 %v3996, 4294901760
      %3998 = vmatpush.msra.mxu0 %v3997
      %v3999 = vand.u32 %v3691, 4294901760
      %v4000 = vsub.f32 %v3691, %v3999
      %v4001 = vand.u32 %v4000, 4294901760
      %4002 = vmatpush.msra.mxu0 %v4001
      %v4003 = vand.u32 %v3690, 4294901760
      %v4004 = vsub.f32 %v3690, %v4003
      %v4005 = vand.u32 %v4004, 4294901760
      %4006 = vmatpush.msra.mxu0 %v4005
      %v4007 = vand.u32 %v3689, 4294901760
      %v4008 = vsub.f32 %v3689, %v4007
      %v4009 = vand.u32 %v4008, 4294901760
      %4010 = vmatpush.msra.mxu0 %v4009
      %v4011 = vand.u32 %v3688, 4294901760
      %v4012 = vsub.f32 %v3688, %v4011
      %v4013 = vand.u32 %v4012, 4294901760
      %4014 = vmatpush.msra.mxu0 %v4013
      %v4015 = vand.u32 %v3687, 4294901760
      %v4016 = vsub.f32 %v3687, %v4015
      %v4017 = vand.u32 %v4016, 4294901760
      %4018 = vmatpush.msra.mxu0 %v4017
      %v4019 = vand.u32 %v3686, 4294901760
      %v4020 = vsub.f32 %v3686, %v4019
      %v4021 = vand.u32 %v4020, 4294901760
      %4022 = vmatpush.msra.mxu0 %v4021
      %v4023 = vand.u32 %v3685, 4294901760
      %v4024 = vsub.f32 %v3685, %v4023
      %v4025 = vand.u32 %v4024, 4294901760
      %4026 = vmatpush.msra.mxu0 %v4025
      %v4027 = vand.u32 %v3683, 4294901760
      %4028 = vmatmul.f32.gmra.mxu0 %v4027
      %v4029 = vpop.f32.mrf.mxu0
      %v4030 = vadd.f32 %v3955, %v4029
      %v4031 = vand.u32 %v3684, 4294901760
      %4032 = vmatmul.f32.gmra.mxu0 %v4031
      %v4033 = vpop.f32.mrf.mxu0
      %v4034 = vadd.f32 %v3961, %v4033
      %4035 = vdwg.mxu0
      %v4036 = vand.u32 %v3700, 4294901760
      %4037 = vmatpush.msra.mxu0 %v4036
      %v4038 = vand.u32 %v3699, 4294901760
      %4039 = vmatpush.msra.mxu0 %v4038
      %v4040 = vand.u32 %v3698, 4294901760
      %4041 = vmatpush.msra.mxu0 %v4040
      %v4042 = vand.u32 %v3697, 4294901760
      %4043 = vmatpush.msra.mxu0 %v4042
      %v4044 = vand.u32 %v3696, 4294901760
      %4045 = vmatpush.msra.mxu0 %v4044
      %v4046 = vand.u32 %v3695, 4294901760
      %4047 = vmatpush.msra.mxu0 %v4046
      %v4048 = vand.u32 %v3694, 4294901760
      %4049 = vmatpush.msra.mxu0 %v4048
      %v4050 = vand.u32 %v3693, 4294901760
      %4051 = vmatpush.msra.mxu0 %v4050
      %v4052 = vand.u32 %v3692, 4294901760
      %4053 = vmatpush.msra.mxu0 %v4052
      %v4054 = vand.u32 %v3691, 4294901760
      %4055 = vmatpush.msra.mxu0 %v4054
      %v4056 = vand.u32 %v3690, 4294901760
      %4057 = vmatpush.msra.mxu0 %v4056
      %v4058 = vand.u32 %v3689, 4294901760
      %4059 = vmatpush.msra.mxu0 %v4058
      %v4060 = vand.u32 %v3688, 4294901760
      %4061 = vmatpush.msra.mxu0 %v4060
      %v4062 = vand.u32 %v3687, 4294901760
      %4063 = vmatpush.msra.mxu0 %v4062
      %v4064 = vand.u32 %v3686, 4294901760
      %4065 = vmatpush.msra.mxu0 %v4064
      %v4066 = vand.u32 %v3685, 4294901760
      %4067 = vmatpush.msra.mxu0 %v4066
      %v4068 = vand.u32 %v3683, 4294901760
      %4069 = vmatmul.f32.gmra.mxu0 %v4068
      %v4070 = vpop.f32.mrf.mxu0
      %v4071 = vadd.f32 %v4030, %v4070
      %v4072 = vand.u32 %v3684, 4294901760
      %4073 = vmatmul.f32.gmra.mxu0 %v4072
      %v4074 = vpop.f32.mrf.mxu0
      %v4075 = vadd.f32 %v4034, %v4074
      %4076 = vdwg.mxu0
      %v4077 = vadd.f32 %v3231, %v4071
      %v4078 = vadd.f32 %v3232, %v4075
      %4079 = vst [vmem:[%s555] sm:$0xff] %v4077
      %4080 = vst [vmem:[%s555 + $0x8] sm:$0xff] %v4078
      %s4081 = smul.u32 2, %s26
      %p4082 = scmp.lt.s32.totalorder %s25, 1
      %s4083 = scalar_select %p4082, %s25, 1
      %p4084 = scmp.lt.s32.totalorder %s4081, 1
      %s4085 = scalar_select %p4084, %s4081, 1
      %s4086 = smul.addr %s4083, 2
      %s4087 = sadd.s32 %s4085, %s4086
      %s4088 = smul.addr %s4087, 8
      %s4089 = scalar_lea.vmem %s10, %s4088
      // Predicated region
      $region61: #{_lambda_.2} parent=59 // pred_check
        %p4090 = pneg %p317
      $region62: #{_lambda_.2} parent=59 // pred_check_branch
        %4092 = sbr.rel (%p4090) target = $region64
      $region63: #{_lambda_.2} parent=59 // pred_region
        %s4093 = smul.u32 2, %s26
      $region64: #{_lambda_.2} parent=59 // pred_fallthru
        _
    $region60: #{_lambda_.2} parent=5 // pred_fallthru
      _
    %p4094 = scmp.le.s32.totalorder 2, %s16
    // Predicated region
    $region65: #{_lambda_.2} parent=5 // pred_check
      %p4095 = pneg %p4094
    $region66: #{_lambda_.2} parent=5 // pred_check_branch
      %4097 = sbr.rel (%p4095) target = $region68
    $region67: #{_lambda_.2} parent=5 // pred_region
      %s4098 = ssub.s32 %s16, 2
      // Predicated region
      $region69: #{_lambda_.2} parent=67 // pred_check
        %p4099 = pneg %p323
      $region70: #{_lambda_.2} parent=67 // pred_check_branch
        %4101 = sbr.rel (%p4099) target = $region72
      $region71: #{_lambda_.2} parent=67 // pred_region
        %s4102 = smul.u32 2, %s28
        %p4103 = scmp.lt.s32.totalorder %s27, 1
        %s4104 = scalar_select %p4103, %s27, 1
        %p4105 = scmp.lt.s32.totalorder %s4102, 1
        %s4106 = scalar_select %p4105, %s4102, 1
        %s4107 = smul.addr %s4104, 2
        %s4108 = sadd.s32 %s4106, %s4107
        %s4109 = smul.addr %s4108, 8
        %s4110 = scalar_lea.vmem %s10, %s4109
      $region72: #{_lambda_.2} parent=67 // pred_fallthru
        _
    $region68: #{_lambda_.2} parent=5 // pred_fallthru
      _
  $region6: #{_lambda_.2} parent=0 // loop_footer
    %s20 = sadd.s32 1, %s16
  $region7: #{_lambda_.2} parent=0 // loop_footer_branch
    %15 = sbr.rel target = $region3
  $region8: #{_lambda_.2} parent=0 // loop_exit
    _

</llo_original>
